<compile_context>
chip_gen: v7x
topology: tpu7x:2x2x1
jax: 0.10.0
libtpu: 0.0.40
codegen_flags: <defaults>
</compile_context>

<pallas_src>
import numpy as np
import jax
import jax.numpy as jnp
from jax.experimental import pallas as pl
from jax.experimental.pallas import tpu as pltpu


# ----------------------------------------------------------------------------
# Host-side (numpy) constant builders
# ----------------------------------------------------------------------------
def _haar_matrix(H, W):
    """(H*W, 3*Ha*Wa): x_flat @ M = [cH_flat | cV_flat | cA_flat] (db1, level 1)."""
    Ha, Wa = H // 2, W // 2
    na = Ha * Wa
    M = np.zeros((H * W, 3 * na), np.float32)
    for oi in range(Ha):
        for oj in range(Wa):
            q = oi * Wa + oj
            p00 = (2 * oi) * W + 2 * oj
            p01 = p00 + 1
            p10 = (2 * oi + 1) * W + 2 * oj
            p11 = p10 + 1
            # cH = 0.5*(x00 + x01 - x10 - x11)
            M[p00, q] = 0.5; M[p01, q] = 0.5; M[p10, q] = -0.5; M[p11, q] = -0.5
            # cV = 0.5*(x00 - x01 + x10 - x11)
            M[p00, na + q] = 0.5; M[p01, na + q] = -0.5
            M[p10, na + q] = 0.5; M[p11, na + q] = -0.5
            # cA = 0.5*(x00 + x01 + x10 + x11)
            M[p00, 2 * na + q] = 0.5; M[p01, 2 * na + q] = 0.5
            M[p10, 2 * na + q] = 0.5; M[p11, 2 * na + q] = 0.5
    return M


def _shift_tensor(h, w):
    """(9, h*w, h*w): S[k, q, p] = 1 iff p is the zero-padded 3x3 tap-k source of q."""
    S = np.zeros((9, h * w, h * w), np.float32)
    for dy in range(3):
        for dx in range(3):
            k = dy * 3 + dx
            for i in range(h):
                for j in range(w):
                    ii, jj = i + dy - 1, j + dx - 1
                    if 0 <= ii < h and 0 <= jj < w:
                        S[k, i * w + j, ii * w + jj] = 1.0
    return S


def _pool_gather(h, w, cin, blk):
    """(h*w*cin, 4*blk): the 4 corner gathers of a 2x2 max-pool.  Corner c lands
    in lanes [c*blk, c*blk + (h/2)*(w/2)*cin); the rest stays zero so that every
    corner-block slice in the kernel starts at a 128-aligned lane offset."""
    ho, wo = h // 2, w // 2
    Gm = np.zeros((h * w * cin, 4 * blk), np.float32)
    for a in range(2):
        for b in range(2):
            c = a * 2 + b
            for oi in range(ho):
                for oj in range(wo):
                    for co in range(cin):
                        src = ((2 * oi + a) * w + (2 * oj + b)) * cin + co
                        dst = c * blk + (oi * wo + oj) * cin + co
                        Gm[src, dst] = 1.0
    return Gm


def _round_up(n, m):
    return ((n + m - 1) // m) * m


# ----------------------------------------------------------------------------
# Forward wrapper + kernel
# ----------------------------------------------------------------------------
def wavelet_transform_forward(x, params):
    B, C, H, W = x.shape
    Ha, Wa = H // 2, W // 2
    H1, W1 = Ha // 2, Wa // 2
    H2, W2 = H1 // 2, W1 // 2
    C1 = params["w1"].shape[0]          # 16
    C2 = params["w2"].shape[0]          # 8
    C3 = params["w3"].shape[0]          # 4

    na = Ha * Wa                        # spatial size after DWT
    n1 = H1 * W1 * C1                   # pool1 output width (real)
    n2 = H2 * W2 * C2                   # pool2 output width (real)
    nlow = C3 * H2 * W2                 # per-image low-freq flatten size
    blk1 = _round_up(n1, 128)           # 128-aligned corner block for pool1
    blk2 = _round_up(n2, 128)           # 128-aligned corner block for pool2

    N = B * C
    n_groups = 2 if N % 2 == 0 else 1   # 2 parallel steps -> both v7x TCs busy
    G = N // n_groups

    # ---- static gather / transform constants (numpy) -------------------------
    mh = _haar_matrix(H, W)                              # (H*W, 3*na)
    S1 = _shift_tensor(Ha, Wa)                           # (9, na, na)
    S2 = _shift_tensor(H1, W1)                           # (9, H1*W1, H1*W1)
    g1 = _pool_gather(Ha, Wa, C1, blk1)                  # (na*C1, 4*blk1)
    g2 = _pool_gather(H1, W1, C2, blk2)                  # (H1*W1*C2, 4*blk2)

    # ---- learned weights folded into single im2col matmul matrices -----------
    w1m = jnp.transpose(params["w1"], (2, 3, 1, 0)).reshape(9, 1, C1)
    w2m = jnp.transpose(params["w2"], (2, 3, 1, 0)).reshape(9, C1, C2)
    m1 = jnp.einsum('kqp,kic->piqc', jnp.asarray(S1), w1m).reshape(na, na * C1)
    m2 = jnp.einsum('kqp,kic->piqc', jnp.asarray(S2), w2m).reshape(n1, H1 * W1 * C2)
    if blk1 > n1:                                        # match padded pool1 width
        m2 = jnp.concatenate(
            [m2, jnp.zeros((blk1 - n1, H1 * W1 * C2), jnp.float32)], axis=0)

    # conv3 (1x1) with the PyTorch channel-major flatten (co*H2*W2 + spatial)
    w3m = params["w3"][:, :, 0, 0].T                     # (C2, C3)
    eye = jnp.eye(H2 * W2, dtype=jnp.float32)
    m3 = jnp.einsum('ic,qr->qicr', w3m, eye).reshape(n2, nlow)
    if blk2 > n2:                                        # match padded pool2 width
        m3 = jnp.concatenate(
            [m3, jnp.zeros((blk2 - n2, nlow), jnp.float32)], axis=0)

    b1r = jnp.tile(params["b1"], na).reshape(1, na * C1)
    b2r = jnp.tile(params["b2"], H1 * W1).reshape(1, H1 * W1 * C2)
    b3r = jnp.repeat(params["b3"], H2 * W2).reshape(1, nlow)

    consts = [jnp.asarray(mh), m1, b1r, jnp.asarray(g1),
              m2, b2r, jnp.asarray(g2), m3, b3r]

    # ---- kernel: one step processes G = B*C/n_groups images at once ----------
    def kernel(x_ref, mh_ref, m1_ref, b1_ref, g1_ref, m2_ref, b2_ref,
               g2_ref, m3_ref, b3_ref, low_ref, high_ref):
        xg = x_ref[0]                                            # (G, H*W)

        # level-1 Haar DWT for all images in one matmul: [cH | cV | cA]
        haar = jnp.dot(xg, mh_ref[...], preferred_element_type=jnp.float32)
        high_ref[0] = haar[:, :2 * na]                           # [cH.flat|cV.flat]
        cA = haar[:, 2 * na:]                                    # (G, na)

        # Conv2d(1, C1, 3, pad=1) + ReLU : im2col folded into one matmul
        f1 = jnp.maximum(
            jnp.dot(cA, m1_ref[...], preferred_element_type=jnp.float32)
            + b1_ref[...], 0.0)                                  # (G, na*C1)

        # MaxPool2d(2): one gather matmul, VPU max over 4 aligned corner blocks
        p1c = jnp.dot(f1, g1_ref[...], preferred_element_type=jnp.float32)
        p1 = jnp.maximum(
            jnp.maximum(p1c[:, 0 * blk1:1 * blk1], p1c[:, 1 * blk1:2 * blk1]),
            jnp.maximum(p1c[:, 2 * blk1:3 * blk1], p1c[:, 3 * blk1:4 * blk1]))

        # Conv2d(C1, C2, 3, pad=1) + ReLU
        f2 = jnp.maximum(
            jnp.dot(p1, m2_ref[...], preferred_element_type=jnp.float32)
            + b2_ref[...], 0.0)                                  # (G, H1*W1*C2)

        # MaxPool2d(2)
        p2c = jnp.dot(f2, g2_ref[...], preferred_element_type=jnp.float32)
        p2 = jnp.maximum(
            jnp.maximum(p2c[:, 0 * blk2:1 * blk2], p2c[:, 1 * blk2:2 * blk2]),
            jnp.maximum(p2c[:, 2 * blk2:3 * blk2], p2c[:, 3 * blk2:4 * blk2]))

        # Conv2d(C2, C3, 1) with the PyTorch flatten order folded into m3
        low_ref[0] = (jnp.dot(p2, m3_ref[...], preferred_element_type=jnp.float32)
                      + b3_ref[...])                             # (G, nlow)

    x_g = x.reshape(n_groups, G, H * W)

    in_specs = [pl.BlockSpec((1, G, H * W), lambda g: (g, 0, 0))] + [
        pl.BlockSpec(c.shape, lambda g: (0, 0)) for c in consts]
    out_shape = (
        jax.ShapeDtypeStruct((n_groups, G, nlow), jnp.float32),
        jax.ShapeDtypeStruct((n_groups, G, 2 * na), jnp.float32),
    )
    out_specs = (
        pl.BlockSpec((1, G, nlow), lambda g: (g, 0, 0)),
        pl.BlockSpec((1, G, 2 * na), lambda g: (g, 0, 0)),
    )

    low_raw, high_raw = pl.pallas_call(
        kernel,
        grid=(n_groups,),
        in_specs=in_specs,
        out_specs=out_specs,
        out_shape=out_shape,
        compiler_params=pltpu.CompilerParams(
            dimension_semantics=("parallel",),
            vmem_limit_bytes=32 * 1024 * 1024),
    )(x_g, *consts)

    # Only contiguous (metadata-only) reshapes remain outside the kernel.
    low = low_raw.reshape(B, 1, C * nlow)
    high = high_raw.reshape(B, 1, C * 2 * na)
    return low, high


# ----------------------------------------------------------------------------
# Deterministic parameter init (shapes from the nn.Module __init__)
# ----------------------------------------------------------------------------
def init_params(key):
    k = jax.random.split(key, 6)
    return dict(
        w1=0.1 * jax.random.normal(k[0], (16, 1, 3, 3), jnp.float32),
        b1=0.1 * jax.random.normal(k[1], (16,), jnp.float32),
        w2=0.1 * jax.random.normal(k[2], (8, 16, 3, 3), jnp.float32),
        b2=0.1 * jax.random.normal(k[3], (8,), jnp.float32),
        w3=0.1 * jax.random.normal(k[4], (4, 8, 1, 1), jnp.float32),
        b3=0.1 * jax.random.normal(k[5], (4,), jnp.float32),
    )


# ----------------------------------------------------------------------------
# Independent numpy reference (same semantics as the PyTorch forward)
# ----------------------------------------------------------------------------
def _conv2d_np(x, w, b):
    cout, cin, kh, kw = w.shape
    pad = (kh - 1) // 2
    H, W = x.shape[1], x.shape[2]
    xp = np.pad(x, ((0, 0), (pad, pad), (pad, pad)))
    out = np.zeros((cout, H, W), np.float32)
    for co in range(cout):
        acc = np.zeros((H, W), np.float32)
        for ci in range(cin):
            for dy in range(kh):
                for dx in range(kw):
                    acc += w[co, ci, dy, dx] * xp[ci, dy:dy + H, dx:dx + W]
        out[co] = acc + b[co]
    return out


def _maxpool_np(x):
    return np.maximum.reduce(
        [x[:, 0::2, 0::2], x[:, 0::2, 1::2], x[:, 1::2, 0::2], x[:, 1::2, 1::2]])


def reference_forward(x, p):
    B, C, H, W = x.shape
    lows, highs = [], []
    for bi in range(B):
        lp, hp = [], []
        for ci in range(C):
            img = x[bi, ci]
            x00, x01 = img[0::2, 0::2], img[0::2, 1::2]
            x10, x11 = img[1::2, 0::2], img[1::2, 1::2]
            cA = 0.5 * (x00 + x01 + x10 + x11)
            cHc = 0.5 * (x00 + x01 - x10 - x11)
            cVc = 0.5 * (x00 - x01 + x10 - x11)
            f = np.maximum(_conv2d_np(cA[None], p["w1"], p["b1"]), 0.0)
            f = _maxpool_np(f)
            f = np.maximum(_conv2d_np(f, p["w2"], p["b2"]), 0.0)
            f = _maxpool_np(f)
            f = _conv2d_np(f, p["w3"], p["b3"])
            lp.append(f.reshape(-1))
            hp.append(np.concatenate([cHc.reshape(-1), cVc.reshape(-1)]))
        lows.append(np.concatenate(lp))
        highs.append(np.concatenate(hp))
    return (np.stack(lows)[:, None, :].astype(np.float32),
            np.stack(highs)[:, None, :].astype(np.float32))


if __name__ == "__main__":
    B, C, H, W = 2, 4, 16, 16
    key = jax.random.PRNGKey(0)
    kx, kp = jax.random.split(key)
    x = jax.random.normal(kx, (B, C, H, W), jnp.float32)
    params = init_params(kp)

    low, high = wavelet_transform_forward(x, params)
    jax.block_until_ready((low, high))

    low_ref, high_ref = reference_forward(
        np.asarray(x), {k: np.asarray(v) for k, v in params.items()})
    assert low.shape == low_ref.shape, (low.shape, low_ref.shape)      # (2, 1, 64)
    assert high.shape == high_ref.shape, (high.shape, high_ref.shape)  # (2, 1, 512)
    np.testing.assert_allclose(np.asarray(low), low_ref, rtol=3e-2, atol=3e-2)
    np.testing.assert_allclose(np.asarray(high), high_ref, rtol=3e-2, atol=3e-2)

    print("KERNEL_OK")
</pallas_src>

<mosaic_0001>
module attributes {stable_mosaic.version = 11 : i64} {
  func.func @kernel(%arg0: i32, %arg1: memref<1x4x256xf32, #tpu.memory_space<vmem>>, %arg2: memref<256x192xf32, #tpu.memory_space<vmem>>, %arg3: memref<64x1024xf32, #tpu.memory_space<vmem>>, %arg4: memref<1x1024xf32, #tpu.memory_space<vmem>>, %arg5: memref<1024x1024xf32, #tpu.memory_space<vmem>>, %arg6: memref<256x128xf32, #tpu.memory_space<vmem>>, %arg7: memref<1x128xf32, #tpu.memory_space<vmem>>, %arg8: memref<128x512xf32, #tpu.memory_space<vmem>>, %arg9: memref<128x16xf32, #tpu.memory_space<vmem>>, %arg10: memref<1x16xf32, #tpu.memory_space<vmem>>, %arg11: memref<1x4x16xf32, #tpu.memory_space<vmem>>, %arg12: memref<1x4x128xf32, #tpu.memory_space<vmem>>) attributes {dimension_semantics = [#tpu.dimension_semantics<parallel>], iteration_bounds = array<i64: 2>, scalar_prefetch = 0 : i64, scratch_operands = 0 : i64, tpu.core_type = #tpu.core_type<tc>, window_params = [{transform_indices = @transform_0, window_bounds = array<i64: 1, 4, 256>}, {pipeline_mode = #tpu.pipeline_mode<synchronous>, transform_indices = @transform_1, window_bounds = array<i64: 256, 192>}, {pipeline_mode = #tpu.pipeline_mode<synchronous>, transform_indices = @transform_2, window_bounds = array<i64: 64, 1024>}, {pipeline_mode = #tpu.pipeline_mode<synchronous>, transform_indices = @transform_3, window_bounds = array<i64: 1, 1024>}, {pipeline_mode = #tpu.pipeline_mode<synchronous>, transform_indices = @transform_4, window_bounds = array<i64: 1024, 1024>}, {pipeline_mode = #tpu.pipeline_mode<synchronous>, transform_indices = @transform_5, window_bounds = array<i64: 256, 128>}, {pipeline_mode = #tpu.pipeline_mode<synchronous>, transform_indices = @transform_6, window_bounds = array<i64: 1, 128>}, {pipeline_mode = #tpu.pipeline_mode<synchronous>, transform_indices = @transform_7, window_bounds = array<i64: 128, 512>}, {pipeline_mode = #tpu.pipeline_mode<synchronous>, transform_indices = @transform_8, window_bounds = array<i64: 128, 16>}, {pipeline_mode = #tpu.pipeline_mode<synchronous>, transform_indices = @transform_9, window_bounds = array<i64: 1, 16>}, {transform_indices = @transform_10, window_bounds = array<i64: 1, 4, 16>}, {transform_indices = @transform_11, window_bounds = array<i64: 1, 4, 128>}]} {
    %c0 = arith.constant 0 : index
    %c0_0 = arith.constant 0 : index
    %c0_1 = arith.constant 0 : index
    %0 = vector.load %arg1[%c0, %c0_0, %c0_1] : memref<1x4x256xf32, #tpu.memory_space<vmem>>, vector<1x4x256xf32>
    %1 = vector.shape_cast %0 : vector<1x4x256xf32> to vector<4x256xf32>
    %c0_2 = arith.constant 0 : index
    %c0_3 = arith.constant 0 : index
    %2 = vector.load %arg2[%c0_2, %c0_3] : memref<256x192xf32, #tpu.memory_space<vmem>>, vector<256x192xf32>
    %cst = arith.constant dense<0.000000e+00> : vector<4x192xf32>
    %3 = tpu.matmul %1, %2, %cst {dimension_numbers = #tpu.dot_dimension_numbers<[1], [0], [0], [1], [0, 0, 1, 1], [], []>} : vector<4x256xf32>, vector<256x192xf32>, vector<4x192xf32> -> vector<4x192xf32>
    %4 = vector.extract_strided_slice %3 {offsets = [0, 0], sizes = [4, 128], strides = [1, 1]} : vector<4x192xf32> to vector<4x128xf32>
    %c0_4 = arith.constant 0 : index
    %c0_5 = arith.constant 0 : index
    %c0_6 = arith.constant 0 : index
    %5 = vector.load %arg12[%c0_4, %c0_5, %c0_6] : memref<1x4x128xf32, #tpu.memory_space<vmem>>, vector<1x4x128xf32>
    %6 = vector.shape_cast %5 : vector<1x4x128xf32> to vector<4x128xf32>
    %7 = vector.shape_cast %4 : vector<4x128xf32> to vector<1x4x128xf32>
    tpu.vector_store %arg12[%c0_4, %c0_5, %c0_6], %7 {strides = array<i32>} : memref<1x4x128xf32, #tpu.memory_space<vmem>>, vector<1x4x128xf32>,
    %8 = vector.extract_strided_slice %3 {offsets = [0, 128], sizes = [4, 64], strides = [1, 1]} : vector<4x192xf32> to vector<4x64xf32>
    %c0_7 = arith.constant 0 : index
    %c0_8 = arith.constant 0 : index
    %9 = vector.load %arg3[%c0_7, %c0_8] : memref<64x1024xf32, #tpu.memory_space<vmem>>, vector<64x1024xf32>
    %cst_9 = arith.constant dense<0.000000e+00> : vector<4x1024xf32>
    %10 = tpu.matmul %8, %9, %cst_9 {dimension_numbers = #tpu.dot_dimension_numbers<[1], [0], [0], [1], [0, 0, 1, 1], [], []>} : vector<4x64xf32>, vector<64x1024xf32>, vector<4x1024xf32> -> vector<4x1024xf32>
    %c0_10 = arith.constant 0 : index
    %c0_11 = arith.constant 0 : index
    %11 = vector.load %arg4[%c0_10, %c0_11] : memref<1x1024xf32, #tpu.memory_space<vmem>>, vector<1x1024xf32>
    %12 = vector.broadcast %11 : vector<1x1024xf32> to vector<4x1024xf32>
    %13 = arith.addf %10, %12 : vector<4x1024xf32>
    %cst_12 = arith.constant 0.000000e+00 : f32
    %14 = vector.broadcast %cst_12 : f32 to vector<4x1024xf32>
    %15 = arith.maximumf %13, %14 : vector<4x1024xf32>
    %c0_13 = arith.constant 0 : index
    %c0_14 = arith.constant 0 : index
    %16 = vector.load %arg5[%c0_13, %c0_14] : memref<1024x1024xf32, #tpu.memory_space<vmem>>, vector<1024x1024xf32>
    %cst_15 = arith.constant dense<0.000000e+00> : vector<4x1024xf32>
    %17 = tpu.matmul %15, %16, %cst_15 {dimension_numbers = #tpu.dot_dimension_numbers<[1], [0], [0], [1], [0, 0, 1, 1], [], []>} : vector<4x1024xf32>, vector<1024x1024xf32>, vector<4x1024xf32> -> vector<4x1024xf32>
    %18 = vector.extract_strided_slice %17 {offsets = [0, 0], sizes = [4, 256], strides = [1, 1]} : vector<4x1024xf32> to vector<4x256xf32>
    %19 = vector.extract_strided_slice %17 {offsets = [0, 256], sizes = [4, 256], strides = [1, 1]} : vector<4x1024xf32> to vector<4x256xf32>
    %20 = arith.maximumf %18, %19 : vector<4x256xf32>
    %21 = vector.extract_strided_slice %17 {offsets = [0, 512], sizes = [4, 256], strides = [1, 1]} : vector<4x1024xf32> to vector<4x256xf32>
    %22 = vector.extract_strided_slice %17 {offsets = [0, 768], sizes = [4, 256], strides = [1, 1]} : vector<4x1024xf32> to vector<4x256xf32>
    %23 = arith.maximumf %21, %22 : vector<4x256xf32>
    %24 = arith.maximumf %20, %23 : vector<4x256xf32>
    %c0_16 = arith.constant 0 : index
    %c0_17 = arith.constant 0 : index
    %25 = vector.load %arg6[%c0_16, %c0_17] : memref<256x128xf32, #tpu.memory_space<vmem>>, vector<256x128xf32>
    %cst_18 = arith.constant dense<0.000000e+00> : vector<4x128xf32>
    %26 = tpu.matmul %24, %25, %cst_18 {dimension_numbers = #tpu.dot_dimension_numbers<[1], [0], [0], [1], [0, 0, 1, 1], [], []>} : vector<4x256xf32>, vector<256x128xf32>, vector<4x128xf32> -> vector<4x128xf32>
    %c0_19 = arith.constant 0 : index
    %c0_20 = arith.constant 0 : index
    %27 = vector.load %arg7[%c0_19, %c0_20] : memref<1x128xf32, #tpu.memory_space<vmem>>, vector<1x128xf32>
    %28 = vector.broadcast %27 : vector<1x128xf32> to vector<4x128xf32>
    %29 = arith.addf %26, %28 : vector<4x128xf32>
    %cst_21 = arith.constant 0.000000e+00 : f32
    %30 = vector.broadcast %cst_21 : f32 to vector<4x128xf32>
    %31 = arith.maximumf %29, %30 : vector<4x128xf32>
    %c0_22 = arith.constant 0 : index
    %c0_23 = arith.constant 0 : index
    %32 = vector.load %arg8[%c0_22, %c0_23] : memref<128x512xf32, #tpu.memory_space<vmem>>, vector<128x512xf32>
    %cst_24 = arith.constant dense<0.000000e+00> : vector<4x512xf32>
    %33 = tpu.matmul %31, %32, %cst_24 {dimension_numbers = #tpu.dot_dimension_numbers<[1], [0], [0], [1], [0, 0, 1, 1], [], []>} : vector<4x128xf32>, vector<128x512xf32>, vector<4x512xf32> -> vector<4x512xf32>
    %34 = vector.extract_strided_slice %33 {offsets = [0, 0], sizes = [4, 128], strides = [1, 1]} : vector<4x512xf32> to vector<4x128xf32>
    %35 = vector.extract_strided_slice %33 {offsets = [0, 128], sizes = [4, 128], strides = [1, 1]} : vector<4x512xf32> to vector<4x128xf32>
    %36 = arith.maximumf %34, %35 : vector<4x128xf32>
    %37 = vector.extract_strided_slice %33 {offsets = [0, 256], sizes = [4, 128], strides = [1, 1]} : vector<4x512xf32> to vector<4x128xf32>
    %38 = vector.extract_strided_slice %33 {offsets = [0, 384], sizes = [4, 128], strides = [1, 1]} : vector<4x512xf32> to vector<4x128xf32>
    %39 = arith.maximumf %37, %38 : vector<4x128xf32>
    %40 = arith.maximumf %36, %39 : vector<4x128xf32>
    %c0_25 = arith.constant 0 : index
    %c0_26 = arith.constant 0 : index
    %41 = vector.load %arg9[%c0_25, %c0_26] : memref<128x16xf32, #tpu.memory_space<vmem>>, vector<128x16xf32>
    %cst_27 = arith.constant dense<0.000000e+00> : vector<4x16xf32>
    %42 = tpu.matmul %40, %41, %cst_27 {dimension_numbers = #tpu.dot_dimension_numbers<[1], [0], [0], [1], [0, 0, 1, 1], [], []>} : vector<4x128xf32>, vector<128x16xf32>, vector<4x16xf32> -> vector<4x16xf32>
    %c0_28 = arith.constant 0 : index
    %c0_29 = arith.constant 0 : index
    %43 = vector.load %arg10[%c0_28, %c0_29] : memref<1x16xf32, #tpu.memory_space<vmem>>, vector<1x16xf32>
    %44 = vector.broadcast %43 : vector<1x16xf32> to vector<4x16xf32>
    %45 = arith.addf %42, %44 : vector<4x16xf32>
    %c0_30 = arith.constant 0 : index
    %c0_31 = arith.constant 0 : index
    %c0_32 = arith.constant 0 : index
    %46 = vector.load %arg11[%c0_30, %c0_31, %c0_32] : memref<1x4x16xf32, #tpu.memory_space<vmem>>, vector<1x4x16xf32>
    %47 = vector.shape_cast %46 : vector<1x4x16xf32> to vector<4x16xf32>
    %48 = vector.shape_cast %45 : vector<4x16xf32> to vector<1x4x16xf32>
    tpu.vector_store %arg11[%c0_30, %c0_31, %c0_32], %48 {strides = array<i32>} : memref<1x4x16xf32, #tpu.memory_space<vmem>>, vector<1x4x16xf32>,
    return
  }
  func.func @transform_0(%arg0: i32) -> (i32, i32, i32) {
    %c0_i32 = arith.constant 0 : i32
    %c0_i32_0 = arith.constant 0 : i32
    %c0_i32_1 = arith.constant 0 : i32
    return %arg0, %c0_i32, %c0_i32_0 : i32, i32, i32
  }
  func.func @transform_1(%arg0: i32) -> (i32, i32) {
    %c0_i32 = arith.constant 0 : i32
    %c0_i32_0 = arith.constant 0 : i32
    %c0_i32_1 = arith.constant 0 : i32
    return %c0_i32, %c0_i32_0 : i32, i32
  }
  func.func @transform_2(%arg0: i32) -> (i32, i32) {
    %c0_i32 = arith.constant 0 : i32
    %c0_i32_0 = arith.constant 0 : i32
    %c0_i32_1 = arith.constant 0 : i32
    return %c0_i32, %c0_i32_0 : i32, i32
  }
  func.func @transform_3(%arg0: i32) -> (i32, i32) {
    %c0_i32 = arith.constant 0 : i32
    %c0_i32_0 = arith.constant 0 : i32
    %c0_i32_1 = arith.constant 0 : i32
    return %c0_i32, %c0_i32_0 : i32, i32
  }
  func.func @transform_4(%arg0: i32) -> (i32, i32) {
    %c0_i32 = arith.constant 0 : i32
    %c0_i32_0 = arith.constant 0 : i32
    %c0_i32_1 = arith.constant 0 : i32
    return %c0_i32, %c0_i32_0 : i32, i32
  }
  func.func @transform_5(%arg0: i32) -> (i32, i32) {
    %c0_i32 = arith.constant 0 : i32
    %c0_i32_0 = arith.constant 0 : i32
    %c0_i32_1 = arith.constant 0 : i32
    return %c0_i32, %c0_i32_0 : i32, i32
  }
  func.func @transform_6(%arg0: i32) -> (i32, i32) {
    %c0_i32 = arith.constant 0 : i32
    %c0_i32_0 = arith.constant 0 : i32
    %c0_i32_1 = arith.constant 0 : i32
    return %c0_i32, %c0_i32_0 : i32, i32
  }
  func.func @transform_7(%arg0: i32) -> (i32, i32) {
    %c0_i32 = arith.constant 0 : i32
    %c0_i32_0 = arith.constant 0 : i32
    %c0_i32_1 = arith.constant 0 : i32
    return %c0_i32, %c0_i32_0 : i32, i32
  }
  func.func @transform_8(%arg0: i32) -> (i32, i32) {
    %c0_i32 = arith.constant 0 : i32
    %c0_i32_0 = arith.constant 0 : i32
    %c0_i32_1 = arith.constant 0 : i32
    return %c0_i32, %c0_i32_0 : i32, i32
  }
  func.func @transform_9(%arg0: i32) -> (i32, i32) {
    %c0_i32 = arith.constant 0 : i32
    %c0_i32_0 = arith.constant 0 : i32
    %c0_i32_1 = arith.constant 0 : i32
    return %c0_i32, %c0_i32_0 : i32, i32
  }
  func.func @transform_10(%arg0: i32) -> (i32, i32, i32) {
    %c0_i32 = arith.constant 0 : i32
    %c0_i32_0 = arith.constant 0 : i32
    %c0_i32_1 = arith.constant 0 : i32
    return %arg0, %c0_i32, %c0_i32_0 : i32, i32, i32
  }
  func.func @transform_11(%arg0: i32) -> (i32, i32, i32) {
    %c0_i32 = arith.constant 0 : i32
    %c0_i32_0 = arith.constant 0 : i32
    %c0_i32_1 = arith.constant 0 : i32
    return %arg0, %c0_i32, %c0_i32_0 : i32, i32, i32
  }
}

</mosaic_0001>

<llo_original>
// kernel: tpu_custom_call.1
$region0: #{tpu_custom_call.1}
  #allocation0 [shape = 'u32[]', space=smem, size = 0x4, offset = 0x4, fixed_abs, tag = 'smem constant byte address 0x4 - core index']
  #allocation1 [shape = 'u32[144,128]{1,0:T(1,128)}', space=vmem, size = 0x12000, scoped, tag = 'internal scratch']
  %s0 = inlined_call_operand.hbm [shape: f32[2,4,256], index: 0, kind: input, shape index: {}]
  %s1 = inlined_call_operand.vmem [shape: f32[256,192], index: 1, kind: input, shape index: {}]
  %s2 = inlined_call_operand.hbm [shape: f32[64,1024], index: 2, kind: input, shape index: {}]
  %s3 = inlined_call_operand.hbm [shape: f32[1,1024], index: 3, kind: input, shape index: {}]
  %s4 = inlined_call_operand.hbm [shape: f32[1024,1024], index: 4, kind: input, shape index: {}]
  %s5 = inlined_call_operand.hbm [shape: f32[256,128], index: 5, kind: input, shape index: {}]
  %s6 = inlined_call_operand.hbm [shape: f32[1,128], index: 6, kind: input, shape index: {}]
  %s7 = inlined_call_operand.hbm [shape: f32[128,512], index: 7, kind: input, shape index: {}]
  %s8 = inlined_call_operand.vmem [shape: f32[128,16], index: 8, kind: input, shape index: {}]
  %s9 = inlined_call_operand.hbm [shape: f32[1,16], index: 9, kind: input, shape index: {}]
  %s10 = inlined_call_operand.hbm [shape: f32[2,4,16], index: 10, kind: output, shape index: {0}]
  %s11 = inlined_call_operand.hbm [shape: f32[2,4,128], index: 11, kind: output, shape index: {1}]
  %12 = xla_tuple %s10, %s11
  %s13 = sld [smem:[#allocation0]]
  $region113: #{tpu_custom_call.1} parent=0
    _
  %s15 = ssub.s32 1, %s13
  %s16 = scalar_select 0, %s15, %s13
  $region1: #{tpu_custom_call.1} parent=0
    #allocation2 [shape = 'u8[8192]{0}', space=vmem, size = 0x2000, scoped, tag = 'input window, operand 0']
    #allocation3 [shape = 's32[2]{0}', space=sflag, size = 0x8, scoped, tag = 'scoped memory for tpu_custom_call.1']
    #allocation4 [shape = 's32[2]{0}', space=sflag, size = 0x8, scoped, tag = 'scoped memory for tpu_custom_call.1']
    #allocation5 [shape = 'u8[262144]{0}', space=vmem, size = 0x40000, scoped, tag = 'input window, operand 2, single buffered']
    #allocation6 [shape = 's32[1]{0}', space=sflag, size = 0x4, scoped, tag = 'scoped memory for tpu_custom_call.1']
    #allocation7 [shape = 'u8[4096]{0}', space=vmem, size = 0x1000, scoped, tag = 'input window, operand 3, single buffered']
    #allocation8 [shape = 'u8[4194304]{0}', space=vmem, size = 0x400000, scoped, tag = 'input window, operand 4, single buffered']
    #allocation9 [shape = 's32[1]{0}', space=sflag, size = 0x4, scoped, tag = 'scoped memory for tpu_custom_call.1']
    #allocation10 [shape = 'u8[131072]{0}', space=vmem, size = 0x20000, scoped, tag = 'input window, operand 5, single buffered']
    #allocation11 [shape = 'u8[512]{0}', space=vmem, size = 0x400, scoped, tag = 'input window, operand 6, single buffered']
    #allocation12 [shape = 's32[1]{0}', space=sflag, size = 0x4, scoped, tag = 'scoped memory for tpu_custom_call.1']
    #allocation13 [shape = 'u8[262144]{0}', space=vmem, size = 0x40000, scoped, tag = 'input window, operand 7, single buffered']
    #allocation14 [shape = 'u8[512]{0}', space=vmem, size = 0x400, scoped, tag = 'input window, operand 9, single buffered']
    #allocation15 [shape = 's32[1]{0}', space=sflag, size = 0x4, scoped, tag = 'scoped memory for tpu_custom_call.1']
    #allocation16 [shape = 'u8[4096]{0}', space=vmem, size = 0x1000, scoped, tag = 'output window, operand 0']
    #allocation17 [shape = 'u8[4096]{0}', space=vmem, size = 0x1000, scoped, tag = 'output window, operand 1']
    #allocation18 [shape = 's32[2]{0}', space=sflag, size = 0x8, scoped, tag = 'scoped memory for tpu_custom_call.1']
    %17 = vsyncpa [#allocation3], 0
    %s18 = scalar_lea.sflag [#allocation3], 1
    %19 = vsyncpa %s18, 0
    %20 = vsyncpa [#allocation6], 0
    %21 = vsyncpa [#allocation9], 0
    %22 = vsyncpa [#allocation12], 0
    %23 = vsyncpa [#allocation15], 0
    %24 = vsyncpa [#allocation4], 0
    %s25 = scalar_lea.sflag [#allocation4], 1
    %26 = vsyncpa %s25, 0
    %27 = vsyncpa [#allocation18], 0
    %s28 = scalar_lea.sflag [#allocation18], 1
    %29 = vsyncpa %s28, 0
    loop: start=0, step=1, limit=4
    $region2: #{tpu_custom_call.1} parent=1 // loop_pre_header
      _
    $region3: #{tpu_custom_call.1} parent=1 // loop_header
      %s31 = sphi 0, %s35
      %p32 = scmp.ge.s32.totalorder %s31, 4
      %s41 = sphi 0, %s43
      %s44 = sphi 0, %s41
      %s45 = sphi 0, %s44
      %s61 = sphi 0, %s45
      %s65 = sphi 0, %s65
      %s67 = sphi 0, %s65
      %s68 = sphi 0, %s67
      %s82 = sphi 0, %s68
      %s86 = sphi 0, %s86
      %s88 = sphi 0, %s86
      %s89 = sphi 0, %s88
      %s103 = sphi 0, %s89
      %s107 = sphi 0, %s107
      %s109 = sphi 0, %s107
      %s110 = sphi 0, %s109
      %s124 = sphi 0, %s110
      %s128 = sphi 0, %s128
      %s130 = sphi 0, %s128
      %s131 = sphi 0, %s130
      %s145 = sphi 0, %s131
      %s149 = sphi 0, %s149
      %s151 = sphi 0, %s149
      %s152 = sphi 0, %s151
      %s166 = sphi 0, %s152
      %s170 = sphi 0, %s170
      %s172 = sphi 0, %s170
      %s173 = sphi 0, %s172
      %s187 = sphi 0, %s173
      %s191 = sphi 0, %s191
      %s193 = sphi 0, %s191
      %s194 = sphi 0, %s193
      %s208 = sphi 0, %s194
      %s212 = sphi 0, %s212
      %s214 = sphi 0, %s212
      %s215 = sphi 0, %s214
      %s229 = sphi 0, %s215
      %s233 = sphi 0, %s233
      %s235 = sphi 0, %s233
      %s236 = sphi 0, %s235
      %s250 = sphi 0, %s236
      %s256 = sphi 0, %s258
      %s259 = sphi 0, %s256
      %s260 = sphi 0, %s259
      %s276 = sphi 0, %s260
      %s282 = sphi 0, %s284
      %s285 = sphi 0, %s282
      %s286 = sphi 0, %s285
      %s302 = sphi 0, %s286
    $region4: #{tpu_custom_call.1} parent=1 // loop_header_branch
      %34 = sbr.rel (%p32) target = $region8
    $region5: #{tpu_custom_call.1} parent=1 // loop_body
      %s36 = ssub.s32 %s31, 1
      %s37 = ssub.s32 %s31, 2
      %s38 = sadd.s32 %s31, 1
      %s39 = ssub.s32 %s31, %s38
      %p40 = scmp.eq.s32.totalorder %s39, 0
      %s42 = sadd.s32 %s41, 1
      %s43 = scalar_select %p40, %s41, %s42
      %p46 = pneg %p40
      %p47 = scmp.eq.s32.totalorder %s31, 1
      %p48 = por %p46, %p47
      %p49 = scmp.ne.s32.totalorder %s41, %s44
      %p50 = scmp.eq.s32.totalorder %s31, 0
      %p51 = por %p49, %p50
      %p52 = scmp.ne.s32.totalorder %s41, %s44
      %p53 = scmp.eq.s32.totalorder %s36, 1
      %p54 = por %p52, %p53
      %p55 = scmp.ne.s32.totalorder %s44, %s45
      %p56 = scmp.eq.s32.totalorder %s36, 0
      %p57 = por %p55, %p56
      %p58 = scmp.ne.s32.totalorder %s44, %s45
      %p59 = scmp.eq.s32.totalorder %s37, 1
      %p60 = por %p58, %p59
      %p62 = scmp.ne.s32.totalorder %s45, %s61
      %p63 = scmp.eq.s32.totalorder %s37, 0
      %p64 = por %p62, %p63
      %s66 = sadd.s32 %s65, 1
      %p69 = scmp.eq.s32.totalorder %s31, 1
      %p70 = scmp.ne.s32.totalorder %s65, %s67
      %p71 = scmp.eq.s32.totalorder %s31, 0
      %p72 = por %p70, %p71
      %p73 = scmp.ne.s32.totalorder %s65, %s67
      %p74 = scmp.eq.s32.totalorder %s36, 1
      %p75 = por %p73, %p74
      %p76 = scmp.ne.s32.totalorder %s67, %s68
      %p77 = scmp.eq.s32.totalorder %s36, 0
      %p78 = por %p76, %p77
      %p79 = scmp.ne.s32.totalorder %s67, %s68
      %p80 = scmp.eq.s32.totalorder %s37, 1
      %p81 = por %p79, %p80
      %p83 = scmp.ne.s32.totalorder %s68, %s82
      %p84 = scmp.eq.s32.totalorder %s37, 0
      %p85 = por %p83, %p84
      %s87 = sadd.s32 %s86, 1
      %p90 = scmp.eq.s32.totalorder %s31, 1
      %p91 = scmp.ne.s32.totalorder %s86, %s88
      %p92 = scmp.eq.s32.totalorder %s31, 0
      %p93 = por %p91, %p92
      %p94 = scmp.ne.s32.totalorder %s86, %s88
      %p95 = scmp.eq.s32.totalorder %s36, 1
      %p96 = por %p94, %p95
      %p97 = scmp.ne.s32.totalorder %s88, %s89
      %p98 = scmp.eq.s32.totalorder %s36, 0
      %p99 = por %p97, %p98
      %p100 = scmp.ne.s32.totalorder %s88, %s89
      %p101 = scmp.eq.s32.totalorder %s37, 1
      %p102 = por %p100, %p101
      %p104 = scmp.ne.s32.totalorder %s89, %s103
      %p105 = scmp.eq.s32.totalorder %s37, 0
      %p106 = por %p104, %p105
      %s108 = sadd.s32 %s107, 1
      %p111 = scmp.eq.s32.totalorder %s31, 1
      %p112 = scmp.ne.s32.totalorder %s107, %s109
      %p113 = scmp.eq.s32.totalorder %s31, 0
      %p114 = por %p112, %p113
      %p115 = scmp.ne.s32.totalorder %s107, %s109
      %p116 = scmp.eq.s32.totalorder %s36, 1
      %p117 = por %p115, %p116
      %p118 = scmp.ne.s32.totalorder %s109, %s110
      %p119 = scmp.eq.s32.totalorder %s36, 0
      %p120 = por %p118, %p119
      %p121 = scmp.ne.s32.totalorder %s109, %s110
      %p122 = scmp.eq.s32.totalorder %s37, 1
      %p123 = por %p121, %p122
      %p125 = scmp.ne.s32.totalorder %s110, %s124
      %p126 = scmp.eq.s32.totalorder %s37, 0
      %p127 = por %p125, %p126
      %s129 = sadd.s32 %s128, 1
      %p132 = scmp.eq.s32.totalorder %s31, 1
      %p133 = scmp.ne.s32.totalorder %s128, %s130
      %p134 = scmp.eq.s32.totalorder %s31, 0
      %p135 = por %p133, %p134
      %p136 = scmp.ne.s32.totalorder %s128, %s130
      %p137 = scmp.eq.s32.totalorder %s36, 1
      %p138 = por %p136, %p137
      %p139 = scmp.ne.s32.totalorder %s130, %s131
      %p140 = scmp.eq.s32.totalorder %s36, 0
      %p141 = por %p139, %p140
      %p142 = scmp.ne.s32.totalorder %s130, %s131
      %p143 = scmp.eq.s32.totalorder %s37, 1
      %p144 = por %p142, %p143
      %p146 = scmp.ne.s32.totalorder %s131, %s145
      %p147 = scmp.eq.s32.totalorder %s37, 0
      %p148 = por %p146, %p147
      %s150 = sadd.s32 %s149, 1
      %p153 = scmp.eq.s32.totalorder %s31, 1
      %p154 = scmp.ne.s32.totalorder %s149, %s151
      %p155 = scmp.eq.s32.totalorder %s31, 0
      %p156 = por %p154, %p155
      %p157 = scmp.ne.s32.totalorder %s149, %s151
      %p158 = scmp.eq.s32.totalorder %s36, 1
      %p159 = por %p157, %p158
      %p160 = scmp.ne.s32.totalorder %s151, %s152
      %p161 = scmp.eq.s32.totalorder %s36, 0
      %p162 = por %p160, %p161
      %p163 = scmp.ne.s32.totalorder %s151, %s152
      %p164 = scmp.eq.s32.totalorder %s37, 1
      %p165 = por %p163, %p164
      %p167 = scmp.ne.s32.totalorder %s152, %s166
      %p168 = scmp.eq.s32.totalorder %s37, 0
      %p169 = por %p167, %p168
      %s171 = sadd.s32 %s170, 1
      %p174 = scmp.eq.s32.totalorder %s31, 1
      %p175 = scmp.ne.s32.totalorder %s170, %s172
      %p176 = scmp.eq.s32.totalorder %s31, 0
      %p177 = por %p175, %p176
      %p178 = scmp.ne.s32.totalorder %s170, %s172
      %p179 = scmp.eq.s32.totalorder %s36, 1
      %p180 = por %p178, %p179
      %p181 = scmp.ne.s32.totalorder %s172, %s173
      %p182 = scmp.eq.s32.totalorder %s36, 0
      %p183 = por %p181, %p182
      %p184 = scmp.ne.s32.totalorder %s172, %s173
      %p185 = scmp.eq.s32.totalorder %s37, 1
      %p186 = por %p184, %p185
      %p188 = scmp.ne.s32.totalorder %s173, %s187
      %p189 = scmp.eq.s32.totalorder %s37, 0
      %p190 = por %p188, %p189
      %s192 = sadd.s32 %s191, 1
      %p195 = scmp.eq.s32.totalorder %s31, 1
      %p196 = scmp.ne.s32.totalorder %s191, %s193
      %p197 = scmp.eq.s32.totalorder %s31, 0
      %p198 = por %p196, %p197
      %p199 = scmp.ne.s32.totalorder %s191, %s193
      %p200 = scmp.eq.s32.totalorder %s36, 1
      %p201 = por %p199, %p200
      %p202 = scmp.ne.s32.totalorder %s193, %s194
      %p203 = scmp.eq.s32.totalorder %s36, 0
      %p204 = por %p202, %p203
      %p205 = scmp.ne.s32.totalorder %s193, %s194
      %p206 = scmp.eq.s32.totalorder %s37, 1
      %p207 = por %p205, %p206
      %p209 = scmp.ne.s32.totalorder %s194, %s208
      %p210 = scmp.eq.s32.totalorder %s37, 0
      %p211 = por %p209, %p210
      %s213 = sadd.s32 %s212, 1
      %p216 = scmp.eq.s32.totalorder %s31, 1
      %p217 = scmp.ne.s32.totalorder %s212, %s214
      %p218 = scmp.eq.s32.totalorder %s31, 0
      %p219 = por %p217, %p218
      %p220 = scmp.ne.s32.totalorder %s212, %s214
      %p221 = scmp.eq.s32.totalorder %s36, 1
      %p222 = por %p220, %p221
      %p223 = scmp.ne.s32.totalorder %s214, %s215
      %p224 = scmp.eq.s32.totalorder %s36, 0
      %p225 = por %p223, %p224
      %p226 = scmp.ne.s32.totalorder %s214, %s215
      %p227 = scmp.eq.s32.totalorder %s37, 1
      %p228 = por %p226, %p227
      %p230 = scmp.ne.s32.totalorder %s215, %s229
      %p231 = scmp.eq.s32.totalorder %s37, 0
      %p232 = por %p230, %p231
      %s234 = sadd.s32 %s233, 1
      %p237 = scmp.eq.s32.totalorder %s31, 1
      %p238 = scmp.ne.s32.totalorder %s233, %s235
      %p239 = scmp.eq.s32.totalorder %s31, 0
      %p240 = por %p238, %p239
      %p241 = scmp.ne.s32.totalorder %s233, %s235
      %p242 = scmp.eq.s32.totalorder %s36, 1
      %p243 = por %p241, %p242
      %p244 = scmp.ne.s32.totalorder %s235, %s236
      %p245 = scmp.eq.s32.totalorder %s36, 0
      %p246 = por %p244, %p245
      %p247 = scmp.ne.s32.totalorder %s235, %s236
      %p248 = scmp.eq.s32.totalorder %s37, 1
      %p249 = por %p247, %p248
      %p251 = scmp.ne.s32.totalorder %s236, %s250
      %p252 = scmp.eq.s32.totalorder %s37, 0
      %p253 = por %p251, %p252
      %s254 = ssub.s32 %s31, %s38
      %p255 = scmp.eq.s32.totalorder %s254, 0
      %s257 = sadd.s32 %s256, 1
      %s258 = scalar_select %p255, %s256, %s257
      %p261 = pneg %p255
      %p262 = scmp.eq.s32.totalorder %s31, 1
      %p263 = por %p261, %p262
      %p264 = scmp.ne.s32.totalorder %s256, %s259
      %p265 = scmp.eq.s32.totalorder %s31, 0
      %p266 = por %p264, %p265
      %p267 = scmp.ne.s32.totalorder %s256, %s259
      %p268 = scmp.eq.s32.totalorder %s36, 1
      %p269 = por %p267, %p268
      %p270 = scmp.ne.s32.totalorder %s259, %s260
      %p271 = scmp.eq.s32.totalorder %s36, 0
      %p272 = por %p270, %p271
      %p273 = scmp.ne.s32.totalorder %s259, %s260
      %p274 = scmp.eq.s32.totalorder %s37, 1
      %p275 = por %p273, %p274
      %p277 = scmp.ne.s32.totalorder %s260, %s276
      %p278 = scmp.eq.s32.totalorder %s37, 0
      %p279 = por %p277, %p278
      %s280 = ssub.s32 %s31, %s38
      %p281 = scmp.eq.s32.totalorder %s280, 0
      %s283 = sadd.s32 %s282, 1
      %s284 = scalar_select %p281, %s282, %s283
      %p287 = pneg %p281
      %p288 = scmp.eq.s32.totalorder %s31, 1
      %p289 = por %p287, %p288
      %p290 = scmp.ne.s32.totalorder %s282, %s285
      %p291 = scmp.eq.s32.totalorder %s31, 0
      %p292 = por %p290, %p291
      %p293 = scmp.ne.s32.totalorder %s282, %s285
      %p294 = scmp.eq.s32.totalorder %s36, 1
      %p295 = por %p293, %p294
      %p296 = scmp.ne.s32.totalorder %s285, %s286
      %p297 = scmp.eq.s32.totalorder %s36, 0
      %p298 = por %p296, %p297
      %p299 = scmp.ne.s32.totalorder %s285, %s286
      %p300 = scmp.eq.s32.totalorder %s37, 1
      %p301 = por %p299, %p300
      %p303 = scmp.ne.s32.totalorder %s286, %s302
      %p304 = scmp.eq.s32.totalorder %s37, 0
      %p305 = por %p303, %p304
      %p306 = scmp.le.s32.totalorder 1, %s31
      %p307 = scmp.lt.s32.totalorder %s31, 3
      %p308 = pnand %p306, %p307
      %p309 = pneg %p308
      // Predicated region
      $region9: #{tpu_custom_call.1} parent=5 // pred_check
        _
      $region10: #{tpu_custom_call.1} parent=5 // pred_check_branch
        %311 = sbr.rel (%p308) target = $region12
      $region11: #{tpu_custom_call.1} parent=5 // pred_region
        %s312 = ssub.s32 %s31, 1
        // Predicated region
        $region13: #{tpu_custom_call.1} parent=11 // pred_check
          %p313 = pneg %p78
        $region14: #{tpu_custom_call.1} parent=11 // pred_check_branch
          %315 = sbr.rel (%p313) target = $region16
        $region15: #{tpu_custom_call.1} parent=11 // pred_region
          _
        $region16: #{tpu_custom_call.1} parent=11 // pred_fallthru
          _
        // Predicated region
        $region17: #{tpu_custom_call.1} parent=11 // pred_check
          %p316 = pneg %p99
        $region18: #{tpu_custom_call.1} parent=11 // pred_check_branch
          %318 = sbr.rel (%p316) target = $region20
        $region19: #{tpu_custom_call.1} parent=11 // pred_region
          %s320 = ssub.s32 8192, 8192
          %321 = vsyncadd [#allocation6], %s320
          %s322 = sshll.u32 [#allocation5], 4
          %s323 = int_to_ptr.vmem [resolvable:$true] %s322
          %328 = dma.hbm_to_vmem [thread:$0]  %s2, 8192, %s323, [#allocation6], 1024, 1024, 64
        $region20: #{tpu_custom_call.1} parent=11 // pred_fallthru
          _
        // Predicated region
        $region21: #{tpu_custom_call.1} parent=11 // pred_check
          %p329 = pneg %p120
        $region22: #{tpu_custom_call.1} parent=11 // pred_check_branch
          %331 = sbr.rel (%p329) target = $region24
        $region23: #{tpu_custom_call.1} parent=11 // pred_region
          %s333 = ssub.s32 128, 128
          %334 = vsyncadd [#allocation6], %s333
          %s336 = sshll.u32 [#allocation7], 4
          %s337 = int_to_ptr.vmem [resolvable:$true] %s336
          %339 = dma.hbm_to_vmem [thread:$0]  %s3, 128, %s337, [#allocation6]
        $region24: #{tpu_custom_call.1} parent=11 // pred_fallthru
          _
        // Predicated region
        $region25: #{tpu_custom_call.1} parent=11 // pred_check
          %p340 = pneg %p141
        $region26: #{tpu_custom_call.1} parent=11 // pred_check_branch
          %342 = sbr.rel (%p340) target = $region28
        $region27: #{tpu_custom_call.1} parent=11 // pred_region
          %s344 = ssub.s32 131072, 131072
          %345 = vsyncadd [#allocation9], %s344
          %s346 = sshll.u32 [#allocation8], 4
          %s347 = int_to_ptr.vmem [resolvable:$true] %s346
          %352 = dma.hbm_to_vmem [thread:$0]  %s4, 131072, %s347, [#allocation9], 1024, 1024, 64
        $region28: #{tpu_custom_call.1} parent=11 // pred_fallthru
          _
        // Predicated region
        $region29: #{tpu_custom_call.1} parent=11 // pred_check
          %p353 = pneg %p162
        $region30: #{tpu_custom_call.1} parent=11 // pred_check_branch
          %355 = sbr.rel (%p353) target = $region32
        $region31: #{tpu_custom_call.1} parent=11 // pred_region
          %s357 = ssub.s32 4096, 4096
          %358 = vsyncadd [#allocation9], %s357
          %s359 = sshll.u32 [#allocation10], 4
          %s360 = int_to_ptr.vmem [resolvable:$true] %s359
          %365 = dma.hbm_to_vmem [thread:$0]  %s5, 4096, %s360, [#allocation9], 128, 128, 8
        $region32: #{tpu_custom_call.1} parent=11 // pred_fallthru
          _
        // Predicated region
        $region33: #{tpu_custom_call.1} parent=11 // pred_check
          %p366 = pneg %p183
        $region34: #{tpu_custom_call.1} parent=11 // pred_check_branch
          %368 = sbr.rel (%p366) target = $region36
        $region35: #{tpu_custom_call.1} parent=11 // pred_region
          %s370 = ssub.s32 16, 16
          %371 = vsyncadd [#allocation12], %s370
          %s373 = sshll.u32 [#allocation11], 4
          %s374 = int_to_ptr.vmem [resolvable:$true] %s373
          %376 = dma.hbm_to_vmem [thread:$0]  %s6, 16, %s374, [#allocation12]
        $region36: #{tpu_custom_call.1} parent=11 // pred_fallthru
          _
        // Predicated region
        $region37: #{tpu_custom_call.1} parent=11 // pred_check
          %p377 = pneg %p204
        $region38: #{tpu_custom_call.1} parent=11 // pred_check_branch
          %379 = sbr.rel (%p377) target = $region40
        $region39: #{tpu_custom_call.1} parent=11 // pred_region
          %s381 = ssub.s32 8192, 8192
          %382 = vsyncadd [#allocation12], %s381
          %s383 = sshll.u32 [#allocation13], 4
          %s384 = int_to_ptr.vmem [resolvable:$true] %s383
          %389 = dma.hbm_to_vmem [thread:$0]  %s7, 8192, %s384, [#allocation12], 512, 512, 32
        $region40: #{tpu_custom_call.1} parent=11 // pred_fallthru
          _
        // Predicated region
        $region41: #{tpu_custom_call.1} parent=11 // pred_check
          %p390 = pneg %p225
        $region42: #{tpu_custom_call.1} parent=11 // pred_check_branch
          %392 = sbr.rel (%p390) target = $region44
        $region43: #{tpu_custom_call.1} parent=11 // pred_region
          _
        $region44: #{tpu_custom_call.1} parent=11 // pred_fallthru
          _
        // Predicated region
        $region45: #{tpu_custom_call.1} parent=11 // pred_check
          %p393 = pneg %p246
        $region46: #{tpu_custom_call.1} parent=11 // pred_check_branch
          %395 = sbr.rel (%p393) target = $region48
        $region47: #{tpu_custom_call.1} parent=11 // pred_region
          %s397 = ssub.s32 16, 16
          %398 = vsyncadd [#allocation15], %s397
          %s400 = sshll.u32 [#allocation14], 4
          %s401 = int_to_ptr.vmem [resolvable:$true] %s400
          %403 = dma.hbm_to_vmem [thread:$0]  %s9, 16, %s401, [#allocation15]
        $region48: #{tpu_custom_call.1} parent=11 // pred_fallthru
          _
      $region12: #{tpu_custom_call.1} parent=5 // pred_fallthru
        _
      %p404 = scmp.lt.s32.totalorder %s31, 2
      // Predicated region
      $region49: #{tpu_custom_call.1} parent=5 // pred_check
        %p405 = pneg %p404
      $region50: #{tpu_custom_call.1} parent=5 // pred_check_branch
        %407 = sbr.rel (%p405) target = $region52
      $region51: #{tpu_custom_call.1} parent=5 // pred_region
        // Predicated region
        $region53: #{tpu_custom_call.1} parent=51 // pred_check
          %p408 = pneg %p51
        $region54: #{tpu_custom_call.1} parent=51 // pred_check_branch
          %410 = sbr.rel (%p408) target = $region56
        $region55: #{tpu_custom_call.1} parent=51 // pred_region
          %s411 = sand.u32 %s41, 1
          %s412 = scalar_lea.sflag [#allocation3], %s411
          %s413 = sand.u32 %s41, 1
          %s414 = smul.addr %s413, 8
          %s415 = scalar_lea.vmem [#allocation2], %s414
          %s417 = ssub.s32 128, 128
          %418 = vsyncadd %s412, %s417
          %s419 = smul.addr %s31, 2
          %s420 = smul.addr %s419, 64
          %s421 = scalar_lea.hbm %s0, %s420
          %s423 = sshll.u32 %s415, 4
          %s424 = int_to_ptr.vmem [resolvable:$true] %s423
          %426 = dma.hbm_to_vmem [thread:$0]  %s421, 128, %s424, %s412
        $region56: #{tpu_custom_call.1} parent=51 // pred_fallthru
          _
      $region52: #{tpu_custom_call.1} parent=5 // pred_fallthru
        _
      %p427 = scmp.le.s32.totalorder 1, %s31
      %p428 = scmp.lt.s32.totalorder %s31, 3
      %p429 = pnand %p427, %p428
      %p430 = pneg %p429
      // Predicated region
      $region57: #{tpu_custom_call.1} parent=5 // pred_check
        _
      $region58: #{tpu_custom_call.1} parent=5 // pred_check_branch
        %432 = sbr.rel (%p429) target = $region60
      $region59: #{tpu_custom_call.1} parent=5 // pred_region
        %s433 = ssub.s32 %s31, 1
        %s434 = sand.u32 %s44, 1
        %s435 = scalar_lea.sflag [#allocation3], %s434
        %s436 = sand.u32 %s44, 1
        %s437 = smul.addr %s436, 8
        %s438 = scalar_lea.vmem [#allocation2], %s437
        // Predicated region
        $region61: #{tpu_custom_call.1} parent=59 // pred_check
          %p439 = pneg %p57
        $region62: #{tpu_custom_call.1} parent=59 // pred_check_branch
          %441 = sbr.rel (%p439) target = $region64
        $region63: #{tpu_custom_call.1} parent=59 // pred_region
          %442 = dma.done %s435, 128
        $region64: #{tpu_custom_call.1} parent=59 // pred_fallthru
          _
        // Predicated region
        $region65: #{tpu_custom_call.1} parent=59 // pred_check
          %p443 = pneg %p99
        $region66: #{tpu_custom_call.1} parent=59 // pred_check_branch
          %445 = sbr.rel (%p443) target = $region68
        $region67: #{tpu_custom_call.1} parent=59 // pred_region
          %446 = dma.done [#allocation6], 8192
        $region68: #{tpu_custom_call.1} parent=59 // pred_fallthru
          _
        // Predicated region
        $region69: #{tpu_custom_call.1} parent=59 // pred_check
          %p447 = pneg %p120
        $region70: #{tpu_custom_call.1} parent=59 // pred_check_branch
          %449 = sbr.rel (%p447) target = $region72
        $region71: #{tpu_custom_call.1} parent=59 // pred_region
          %450 = dma.done [#allocation6], 128
        $region72: #{tpu_custom_call.1} parent=59 // pred_fallthru
          _
        // Predicated region
        $region73: #{tpu_custom_call.1} parent=59 // pred_check
          %p451 = pneg %p141
        $region74: #{tpu_custom_call.1} parent=59 // pred_check_branch
          %453 = sbr.rel (%p451) target = $region76
        $region75: #{tpu_custom_call.1} parent=59 // pred_region
          %454 = dma.done [#allocation9], 131072
        $region76: #{tpu_custom_call.1} parent=59 // pred_fallthru
          _
        // Predicated region
        $region77: #{tpu_custom_call.1} parent=59 // pred_check
          %p455 = pneg %p162
        $region78: #{tpu_custom_call.1} parent=59 // pred_check_branch
          %457 = sbr.rel (%p455) target = $region80
        $region79: #{tpu_custom_call.1} parent=59 // pred_region
          %458 = dma.done [#allocation9], 4096
        $region80: #{tpu_custom_call.1} parent=59 // pred_fallthru
          _
        // Predicated region
        $region81: #{tpu_custom_call.1} parent=59 // pred_check
          %p459 = pneg %p183
        $region82: #{tpu_custom_call.1} parent=59 // pred_check_branch
          %461 = sbr.rel (%p459) target = $region84
        $region83: #{tpu_custom_call.1} parent=59 // pred_region
          %462 = dma.done [#allocation12], 16
        $region84: #{tpu_custom_call.1} parent=59 // pred_fallthru
          _
        // Predicated region
        $region85: #{tpu_custom_call.1} parent=59 // pred_check
          %p463 = pneg %p204
        $region86: #{tpu_custom_call.1} parent=59 // pred_check_branch
          %465 = sbr.rel (%p463) target = $region88
        $region87: #{tpu_custom_call.1} parent=59 // pred_region
          %466 = dma.done [#allocation12], 8192
        $region88: #{tpu_custom_call.1} parent=59 // pred_fallthru
          _
        // Predicated region
        $region89: #{tpu_custom_call.1} parent=59 // pred_check
          %p467 = pneg %p246
        $region90: #{tpu_custom_call.1} parent=59 // pred_check_branch
          %469 = sbr.rel (%p467) target = $region92
        $region91: #{tpu_custom_call.1} parent=59 // pred_region
          %470 = dma.done [#allocation15], 16
        $region92: #{tpu_custom_call.1} parent=59 // pred_fallthru
          _
        %s471 = sand.u32 %s44, 1
        %s472 = scalar_lea.sflag [#allocation3], %s471
        %s473 = sand.u32 %s44, 1
        %s474 = smul.addr %s473, 8
        %s475 = scalar_lea.vmem [#allocation2], %s474
        %p476 = pneg %p57
        %p477 = pneg %p54
        %p478 = pneg %p78
        %p479 = pneg %p75
        %p480 = pneg %p99
        %p481 = pneg %p96
        %p482 = pneg %p120
        %p483 = pneg %p117
        %p484 = pneg %p141
        %p485 = pneg %p138
        %p486 = pneg %p162
        %p487 = pneg %p159
        %p488 = pneg %p183
        %p489 = pneg %p180
        %p490 = pneg %p204
        %p491 = pneg %p201
        %p492 = pneg %p225
        %p493 = pneg %p222
        %p494 = pneg %p246
        %p495 = pneg %p243
        %p496 = pneg %p272
        %p497 = pneg %p269
        %s498 = sand.u32 %s259, 1
        %s499 = scalar_lea.sflag [#allocation4], %s498
        %s500 = sand.u32 %s259, 1
        %s501 = smul.addr %s500, 4
        %s502 = scalar_lea.vmem [#allocation16], %s501
        %p503 = pneg %p298
        %p504 = pneg %p295
        %s505 = sand.u32 %s285, 1
        %s506 = scalar_lea.sflag [#allocation18], %s505
        %s507 = sand.u32 %s285, 1
        %s508 = smul.addr %s507, 4
        %s509 = scalar_lea.vmem [#allocation17], %s508
        %v510 = vld [vmem:[%s438] sm:$0xff]
        %v511 = vld [vmem:[%s1] sm:$0xff]
        %v512 = vld [vmem:[%s1 + $0x8] sm:$0xff]
        %v513 = vld [vmem:[%s1 + $0x10] sm:$0xff]
        %v514 = vld [vmem:[%s1 + $0x18] sm:$0xff]
        %v515 = vld [vmem:[%s1 + $0x20] sm:$0xff]
        %v516 = vld [vmem:[%s1 + $0x28] sm:$0xff]
        %v517 = vld [vmem:[%s1 + $0x30] sm:$0xff]
        %v518 = vld [vmem:[%s1 + $0x38] sm:$0xff]
        %v519 = vld [vmem:[%s1 + $0x40] sm:$0xff]
        %v520 = vld [vmem:[%s1 + $0x48] sm:$0xff]
        %v521 = vld [vmem:[%s1 + $0x50] sm:$0xff]
        %v522 = vld [vmem:[%s1 + $0x58] sm:$0xff]
        %v523 = vld [vmem:[%s1 + $0x60] sm:$0xff]
        %v524 = vld [vmem:[%s1 + $0x68] sm:$0xff]
        %v525 = vld [vmem:[%s1 + $0x70] sm:$0xff]
        %v526 = vld [vmem:[%s1 + $0x78] sm:$0xff]
        %v527 = vld [vmem:[%s1 + $0x80] sm:$0xff]
        %v528 = vld [vmem:[%s1 + $0x88] sm:$0xff]
        %v529 = vld [vmem:[%s1 + $0x90] sm:$0xff]
        %v530 = vld [vmem:[%s1 + $0x98] sm:$0xff]
        %v531 = vld [vmem:[%s1 + $0xa0] sm:$0xff]
        %v532 = vld [vmem:[%s1 + $0xa8] sm:$0xff]
        %v533 = vld [vmem:[%s1 + $0xb0] sm:$0xff]
        %v534 = vld [vmem:[%s1 + $0xb8] sm:$0xff]
        %v535 = vld [vmem:[%s1 + $0xc0] sm:$0xff]
        %v536 = vld [vmem:[%s1 + $0xc8] sm:$0xff]
        %v537 = vld [vmem:[%s1 + $0xd0] sm:$0xff]
        %v538 = vld [vmem:[%s1 + $0xd8] sm:$0xff]
        %v539 = vld [vmem:[%s1 + $0xe0] sm:$0xff]
        %v540 = vld [vmem:[%s1 + $0xe8] sm:$0xff]
        %v541 = vld [vmem:[%s1 + $0xf0] sm:$0xff]
        %v542 = vld [vmem:[%s1 + $0xf8] sm:$0xff]
        %v543 = vld [vmem:[%s1 + $0x100] sm:$0xff]
        %v544 = vld [vmem:[%s1 + $0x108] sm:$0xff]
        %v545 = vld [vmem:[%s1 + $0x110] sm:$0xff]
        %v546 = vld [vmem:[%s1 + $0x118] sm:$0xff]
        %v547 = vld [vmem:[%s1 + $0x120] sm:$0xff]
        %v548 = vld [vmem:[%s1 + $0x128] sm:$0xff]
        %v549 = vld [vmem:[%s1 + $0x130] sm:$0xff]
        %v550 = vld [vmem:[%s1 + $0x138] sm:$0xff]
        %v551 = vld [vmem:[%s1 + $0x140] sm:$0xff]
        %v552 = vld [vmem:[%s1 + $0x148] sm:$0xff]
        %v553 = vld [vmem:[%s1 + $0x150] sm:$0xff]
        %v554 = vld [vmem:[%s1 + $0x158] sm:$0xff]
        %v555 = vld [vmem:[%s1 + $0x160] sm:$0xff]
        %v556 = vld [vmem:[%s1 + $0x168] sm:$0xff]
        %v557 = vld [vmem:[%s1 + $0x170] sm:$0xff]
        %v558 = vld [vmem:[%s1 + $0x178] sm:$0xff]
        %v559 = vld [vmem:[%s1 + $0x180] sm:$0xff]
        %v560 = vld [vmem:[%s1 + $0x188] sm:$0xff]
        %v561 = vld [vmem:[%s1 + $0x190] sm:$0xff]
        %v562 = vld [vmem:[%s1 + $0x198] sm:$0xff]
        %v563 = vld [vmem:[%s1 + $0x1a0] sm:$0xff]
        %v564 = vld [vmem:[%s1 + $0x1a8] sm:$0xff]
        %v565 = vld [vmem:[%s1 + $0x1b0] sm:$0xff]
        %v566 = vld [vmem:[%s1 + $0x1b8] sm:$0xff]
        %v567 = vld [vmem:[%s1 + $0x1c0] sm:$0xff]
        %v568 = vld [vmem:[%s1 + $0x1c8] sm:$0xff]
        %v569 = vld [vmem:[%s1 + $0x1d0] sm:$0xff]
        %v570 = vld [vmem:[%s1 + $0x1d8] sm:$0xff]
        %v571 = vld [vmem:[%s1 + $0x1e0] sm:$0xff]
        %v572 = vld [vmem:[%s1 + $0x1e8] sm:$0xff]
        %v573 = vld [vmem:[%s1 + $0x1f0] sm:$0xff]
        %v574 = vld [vmem:[%s1 + $0x1f8] sm:$0xff]
        %v576 = vcombine.high %v510, %v510
        %578 = vmatprep.subr.mxu0 %v512
        %579 = vmatpush1.msra.mxu0 %v511
        %580 = vmatprep.subr.mxu0 %v514
        %581 = vmatpush1.msra.mxu0 %v513
        %582 = vmatprep.subr.mxu0 %v516
        %583 = vmatpush1.msra.mxu0 %v515
        %584 = vmatprep.subr.mxu0 %v518
        %585 = vmatpush1.msra.mxu0 %v517
        %586 = vmatprep.subr.mxu0 %v520
        %587 = vmatpush1.msra.mxu0 %v519
        %588 = vmatprep.subr.mxu0 %v522
        %589 = vmatpush1.msra.mxu0 %v521
        %590 = vmatprep.subr.mxu0 %v524
        %591 = vmatpush1.msra.mxu0 %v523
        %592 = vmatprep.subr.mxu0 %v526
        %593 = vmatpush1.msra.mxu0 %v525
        %594 = vmatprep.subr.mxu0 %v528
        %595 = vmatpush1.msra.mxu0 %v527
        %596 = vmatprep.subr.mxu0 %v530
        %597 = vmatpush1.msra.mxu0 %v529
        %598 = vmatprep.subr.mxu0 %v532
        %599 = vmatpush1.msra.mxu0 %v531
        %600 = vmatprep.subr.mxu0 %v534
        %601 = vmatpush1.msra.mxu0 %v533
        %602 = vmatprep.subr.mxu0 %v536
        %603 = vmatpush1.msra.mxu0 %v535
        %604 = vmatprep.subr.mxu0 %v538
        %605 = vmatpush1.msra.mxu0 %v537
        %606 = vmatprep.subr.mxu0 %v540
        %607 = vmatpush1.msra.mxu0 %v539
        %608 = vmatprep.subr.mxu0 %v542
        %609 = vmatpush1.msra.mxu0 %v541
        %610 = vmatprep.subr.mxu0 %v544
        %611 = vmatpush1.msra.mxu0 %v543
        %612 = vmatprep.subr.mxu0 %v546
        %613 = vmatpush1.msra.mxu0 %v545
        %614 = vmatprep.subr.mxu0 %v548
        %615 = vmatpush1.msra.mxu0 %v547
        %616 = vmatprep.subr.mxu0 %v550
        %617 = vmatpush1.msra.mxu0 %v549
        %618 = vmatprep.subr.mxu0 %v552
        %619 = vmatpush1.msra.mxu0 %v551
        %620 = vmatprep.subr.mxu0 %v554
        %621 = vmatpush1.msra.mxu0 %v553
        %622 = vmatprep.subr.mxu0 %v556
        %623 = vmatpush1.msra.mxu0 %v555
        %624 = vmatprep.subr.mxu0 %v558
        %625 = vmatpush1.msra.mxu0 %v557
        %626 = vmatprep.subr.mxu0 %v560
        %627 = vmatpush1.msra.mxu0 %v559
        %628 = vmatprep.subr.mxu0 %v562
        %629 = vmatpush1.msra.mxu0 %v561
        %630 = vmatprep.subr.mxu0 %v564
        %631 = vmatpush1.msra.mxu0 %v563
        %632 = vmatprep.subr.mxu0 %v566
        %633 = vmatpush1.msra.mxu0 %v565
        %634 = vmatprep.subr.mxu0 %v568
        %635 = vmatpush1.msra.mxu0 %v567
        %636 = vmatprep.subr.mxu0 %v570
        %637 = vmatpush1.msra.mxu0 %v569
        %638 = vmatprep.subr.mxu0 %v572
        %639 = vmatpush1.msra.mxu0 %v571
        %640 = vmatprep.subr.mxu0 %v574
        %641 = vmatpush1.msra.mxu0 %v573
        %642 = vmatprep.mubr.f32.mxu0 %v576
        %643 = vmatmul.mubr.f32.gmra.mrb[0].mxu0 %v510
        %v644 = vpop.f32.mrb[0].mxu0
        %v645 = vadd.f32 0.0, %v644
        %v646 = vpop.f32.mrb[0].mxu0
        %v647 = vadd.f32 0.0, %v646
        %648 = vdwg.mxu0
        %649 = vst [vmem:[%s509] sm:$0xf] %v645
        %v650 = vld [vmem:[#allocation5] sm:$0xff]
        %v651 = vld [vmem:[#allocation5 + $0x8] sm:$0xff]
        %v652 = vld [vmem:[#allocation5 + $0x10] sm:$0xff]
        %v653 = vld [vmem:[#allocation5 + $0x18] sm:$0xff]
        %v654 = vld [vmem:[#allocation5 + $0x20] sm:$0xff]
        %v655 = vld [vmem:[#allocation5 + $0x28] sm:$0xff]
        %v656 = vld [vmem:[#allocation5 + $0x30] sm:$0xff]
        %v657 = vld [vmem:[#allocation5 + $0x38] sm:$0xff]
        %v658 = vld [vmem:[#allocation5 + $0x40] sm:$0xff]
        %v659 = vld [vmem:[#allocation5 + $0x48] sm:$0xff]
        %v660 = vld [vmem:[#allocation5 + $0x50] sm:$0xff]
        %v661 = vld [vmem:[#allocation5 + $0x58] sm:$0xff]
        %v662 = vld [vmem:[#allocation5 + $0x60] sm:$0xff]
        %v663 = vld [vmem:[#allocation5 + $0x68] sm:$0xff]
        %v664 = vld [vmem:[#allocation5 + $0x70] sm:$0xff]
        %v665 = vld [vmem:[#allocation5 + $0x78] sm:$0xff]
        %v666 = vld [vmem:[#allocation5 + $0x80] sm:$0xff]
        %v667 = vld [vmem:[#allocation5 + $0x88] sm:$0xff]
        %v668 = vld [vmem:[#allocation5 + $0x90] sm:$0xff]
        %v669 = vld [vmem:[#allocation5 + $0x98] sm:$0xff]
        %v670 = vld [vmem:[#allocation5 + $0xa0] sm:$0xff]
        %v671 = vld [vmem:[#allocation5 + $0xa8] sm:$0xff]
        %v672 = vld [vmem:[#allocation5 + $0xb0] sm:$0xff]
        %v673 = vld [vmem:[#allocation5 + $0xb8] sm:$0xff]
        %v674 = vld [vmem:[#allocation5 + $0xc0] sm:$0xff]
        %v675 = vld [vmem:[#allocation5 + $0xc8] sm:$0xff]
        %v676 = vld [vmem:[#allocation5 + $0xd0] sm:$0xff]
        %v677 = vld [vmem:[#allocation5 + $0xd8] sm:$0xff]
        %v678 = vld [vmem:[#allocation5 + $0xe0] sm:$0xff]
        %v679 = vld [vmem:[#allocation5 + $0xe8] sm:$0xff]
        %v680 = vld [vmem:[#allocation5 + $0xf0] sm:$0xff]
        %v681 = vld [vmem:[#allocation5 + $0xf8] sm:$0xff]
        %v682 = vld [vmem:[#allocation5 + $0x100] sm:$0xff]
        %v683 = vld [vmem:[#allocation5 + $0x108] sm:$0xff]
        %v684 = vld [vmem:[#allocation5 + $0x110] sm:$0xff]
        %v685 = vld [vmem:[#allocation5 + $0x118] sm:$0xff]
        %v686 = vld [vmem:[#allocation5 + $0x120] sm:$0xff]
        %v687 = vld [vmem:[#allocation5 + $0x128] sm:$0xff]
        %v688 = vld [vmem:[#allocation5 + $0x130] sm:$0xff]
        %v689 = vld [vmem:[#allocation5 + $0x138] sm:$0xff]
        %v690 = vld [vmem:[#allocation5 + $0x140] sm:$0xff]
        %v691 = vld [vmem:[#allocation5 + $0x148] sm:$0xff]
        %v692 = vld [vmem:[#allocation5 + $0x150] sm:$0xff]
        %v693 = vld [vmem:[#allocation5 + $0x158] sm:$0xff]
        %v694 = vld [vmem:[#allocation5 + $0x160] sm:$0xff]
        %v695 = vld [vmem:[#allocation5 + $0x168] sm:$0xff]
        %v696 = vld [vmem:[#allocation5 + $0x170] sm:$0xff]
        %v697 = vld [vmem:[#allocation5 + $0x178] sm:$0xff]
        %v698 = vld [vmem:[#allocation5 + $0x180] sm:$0xff]
        %v699 = vld [vmem:[#allocation5 + $0x188] sm:$0xff]
        %v700 = vld [vmem:[#allocation5 + $0x190] sm:$0xff]
        %v701 = vld [vmem:[#allocation5 + $0x198] sm:$0xff]
        %v702 = vld [vmem:[#allocation5 + $0x1a0] sm:$0xff]
        %v703 = vld [vmem:[#allocation5 + $0x1a8] sm:$0xff]
        %v704 = vld [vmem:[#allocation5 + $0x1b0] sm:$0xff]
        %v705 = vld [vmem:[#allocation5 + $0x1b8] sm:$0xff]
        %v706 = vld [vmem:[#allocation5 + $0x1c0] sm:$0xff]
        %v707 = vld [vmem:[#allocation5 + $0x1c8] sm:$0xff]
        %v708 = vld [vmem:[#allocation5 + $0x1d0] sm:$0xff]
        %v709 = vld [vmem:[#allocation5 + $0x1d8] sm:$0xff]
        %v710 = vld [vmem:[#allocation5 + $0x1e0] sm:$0xff]
        %v711 = vld [vmem:[#allocation5 + $0x1e8] sm:$0xff]
        %v712 = vld [vmem:[#allocation5 + $0x1f0] sm:$0xff]
        %v713 = vld [vmem:[#allocation5 + $0x1f8] sm:$0xff]
        %v714 = vld [vmem:[#allocation7] sm:$0xff]
        %v716 = vlaneseq
        %v717 = vshrl.u32 %v716, 7
        %v718 = vsub.s32 0, %v717
        %v719 = vrot.slane %v714, %v718
        %v720 = vlaneseq
        %v721 = vshrl.u32 %v720, 7
        %v722 = vsub.s32 1, %v721
        %v723 = vrot.slane %v714, %v722
        %v724 = vlaneseq
        %v725 = vshrl.u32 %v724, 7
        %v726 = vsub.s32 2, %v725
        %v727 = vrot.slane %v714, %v726
        %v728 = vlaneseq
        %v729 = vshrl.u32 %v728, 7
        %v730 = vsub.s32 3, %v729
        %v731 = vrot.slane %v714, %v730
        %v732 = vlaneseq
        %v733 = vshrl.u32 %v732, 7
        %v734 = vsub.s32 4, %v733
        %v735 = vrot.slane %v714, %v734
        %v736 = vlaneseq
        %v737 = vshrl.u32 %v736, 7
        %v738 = vsub.s32 5, %v737
        %v739 = vrot.slane %v714, %v738
        %v740 = vlaneseq
        %v741 = vshrl.u32 %v740, 7
        %v742 = vsub.s32 6, %v741
        %v743 = vrot.slane %v714, %v742
        %v744 = vlaneseq
        %v745 = vshrl.u32 %v744, 7
        %v746 = vsub.s32 7, %v745
        %v747 = vrot.slane %v714, %v746
        %vm756 = vcmask 523264
        %v758 = vsel %vm756, %v647, 0
        %760 = vmatprep.subr.mxu0 %v651
        %761 = vmatpush1.msra.mxu0 %v650
        %762 = vmatprep.subr.mxu0 %v659
        %763 = vmatpush1.msra.mxu0 %v658
        %764 = vmatprep.subr.mxu0 %v667
        %765 = vmatpush1.msra.mxu0 %v666
        %766 = vmatprep.subr.mxu0 %v675
        %767 = vmatpush1.msra.mxu0 %v674
        %768 = vmatprep.subr.mxu0 %v683
        %769 = vmatpush1.msra.mxu0 %v682
        %770 = vmatprep.subr.mxu0 %v691
        %771 = vmatpush1.msra.mxu0 %v690
        %772 = vmatprep.subr.mxu0 %v699
        %773 = vmatpush1.msra.mxu0 %v698
        %774 = vmatprep.subr.mxu0 %v707
        %775 = vmatpush1.msra.mxu0 %v706
        %776 = vmatprep.subr.mxu0 0.0
        %777 = vmatpush1.msra.mxu0 0.0
        %778 = vmatprep.subr.mxu0 0.0
        %779 = vmatpush1.msra.mxu0 0.0
        %780 = vmatprep.subr.mxu0 0.0
        %781 = vmatpush1.msra.mxu0 0.0
        %782 = vmatprep.subr.mxu0 0.0
        %783 = vmatpush1.msra.mxu0 0.0
        %784 = vmatprep.subr.mxu0 0.0
        %785 = vmatpush1.msra.mxu0 0.0
        %786 = vmatprep.subr.mxu0 0.0
        %787 = vmatpush1.msra.mxu0 0.0
        %788 = vmatprep.subr.mxu0 0.0
        %789 = vmatpush1.msra.mxu0 0.0
        %790 = vmatprep.subr.mxu0 0.0
        %791 = vmatpush1.msra.mxu0 0.0
        %792 = vmatprep.subr.mxu0 0.0
        %793 = vmatpush1.msra.mxu0 0.0
        %794 = vmatprep.subr.mxu0 0.0
        %795 = vmatpush1.msra.mxu0 0.0
        %796 = vmatprep.subr.mxu0 0.0
        %797 = vmatpush1.msra.mxu0 0.0
        %798 = vmatprep.subr.mxu0 0.0
        %799 = vmatpush1.msra.mxu0 0.0
        %800 = vmatprep.subr.mxu0 0.0
        %801 = vmatpush1.msra.mxu0 0.0
        %802 = vmatprep.subr.mxu0 0.0
        %803 = vmatpush1.msra.mxu0 0.0
        %804 = vmatprep.subr.mxu0 0.0
        %805 = vmatpush1.msra.mxu0 0.0
        %806 = vmatprep.subr.mxu0 0.0
        %807 = vmatpush1.msra.mxu0 0.0
        %808 = vmatprep.subr.mxu0 0.0
        %809 = vmatpush1.msra.mxu0 0.0
        %810 = vmatprep.subr.mxu0 0.0
        %811 = vmatpush1.msra.mxu0 0.0
        %812 = vmatprep.subr.mxu0 0.0
        %813 = vmatpush1.msra.mxu0 0.0
        %814 = vmatprep.subr.mxu0 0.0
        %815 = vmatpush1.msra.mxu0 0.0
        %816 = vmatprep.subr.mxu0 0.0
        %817 = vmatpush1.msra.mxu0 0.0
        %818 = vmatprep.subr.mxu0 0.0
        %819 = vmatpush1.msra.mxu0 0.0
        %820 = vmatprep.subr.mxu0 0.0
        %821 = vmatpush1.msra.mxu0 0.0
        %822 = vmatprep.subr.mxu0 0.0
        %823 = vmatpush1.msra.mxu0 0.0
        %824 = vmatprep.mubr.f32.mxu0 0.0
        %825 = vmatmul.mubr.f32.gmra.mrb[0].mxu0 %v758
        %v826 = vpop.f32.mrb[0].mxu0
        %v827 = vadd.f32 %v719, %v826
        %v828 = vpop.f32.mrb[0].mxu0
        %v829 = vadd.f32 %v723, %v828
        %830 = vdwg.mxu0
        %831 = vmatprep.subr.mxu0 %v653
        %832 = vmatpush1.msra.mxu0 %v652
        %833 = vmatprep.subr.mxu0 %v661
        %834 = vmatpush1.msra.mxu0 %v660
        %835 = vmatprep.subr.mxu0 %v669
        %836 = vmatpush1.msra.mxu0 %v668
        %837 = vmatprep.subr.mxu0 %v677
        %838 = vmatpush1.msra.mxu0 %v676
        %839 = vmatprep.subr.mxu0 %v685
        %840 = vmatpush1.msra.mxu0 %v684
        %841 = vmatprep.subr.mxu0 %v693
        %842 = vmatpush1.msra.mxu0 %v692
        %843 = vmatprep.subr.mxu0 %v701
        %844 = vmatpush1.msra.mxu0 %v700
        %845 = vmatprep.subr.mxu0 %v709
        %846 = vmatpush1.msra.mxu0 %v708
        %847 = vmatprep.subr.mxu0 0.0
        %848 = vmatpush1.msra.mxu0 0.0
        %849 = vmatprep.subr.mxu0 0.0
        %850 = vmatpush1.msra.mxu0 0.0
        %851 = vmatprep.subr.mxu0 0.0
        %852 = vmatpush1.msra.mxu0 0.0
        %853 = vmatprep.subr.mxu0 0.0
        %854 = vmatpush1.msra.mxu0 0.0
        %855 = vmatprep.subr.mxu0 0.0
        %856 = vmatpush1.msra.mxu0 0.0
        %857 = vmatprep.subr.mxu0 0.0
        %858 = vmatpush1.msra.mxu0 0.0
        %859 = vmatprep.subr.mxu0 0.0
        %860 = vmatpush1.msra.mxu0 0.0
        %861 = vmatprep.subr.mxu0 0.0
        %862 = vmatpush1.msra.mxu0 0.0
        %863 = vmatprep.subr.mxu0 0.0
        %864 = vmatpush1.msra.mxu0 0.0
        %865 = vmatprep.subr.mxu0 0.0
        %866 = vmatpush1.msra.mxu0 0.0
        %867 = vmatprep.subr.mxu0 0.0
        %868 = vmatpush1.msra.mxu0 0.0
        %869 = vmatprep.subr.mxu0 0.0
        %870 = vmatpush1.msra.mxu0 0.0
        %871 = vmatprep.subr.mxu0 0.0
        %872 = vmatpush1.msra.mxu0 0.0
        %873 = vmatprep.subr.mxu0 0.0
        %874 = vmatpush1.msra.mxu0 0.0
        %875 = vmatprep.subr.mxu0 0.0
        %876 = vmatpush1.msra.mxu0 0.0
        %877 = vmatprep.subr.mxu0 0.0
        %878 = vmatpush1.msra.mxu0 0.0
        %879 = vmatprep.subr.mxu0 0.0
        %880 = vmatpush1.msra.mxu0 0.0
        %881 = vmatprep.subr.mxu0 0.0
        %882 = vmatpush1.msra.mxu0 0.0
        %883 = vmatprep.subr.mxu0 0.0
        %884 = vmatpush1.msra.mxu0 0.0
        %885 = vmatprep.subr.mxu0 0.0
        %886 = vmatpush1.msra.mxu0 0.0
        %887 = vmatprep.subr.mxu0 0.0
        %888 = vmatpush1.msra.mxu0 0.0
        %889 = vmatprep.subr.mxu0 0.0
        %890 = vmatpush1.msra.mxu0 0.0
        %891 = vmatprep.subr.mxu0 0.0
        %892 = vmatpush1.msra.mxu0 0.0
        %893 = vmatprep.subr.mxu0 0.0
        %894 = vmatpush1.msra.mxu0 0.0
        %895 = vmatprep.mubr.f32.mxu0 0.0
        %896 = vmatmul.mubr.f32.gmra.mrb[0].mxu0 %v758
        %v897 = vpop.f32.mrb[0].mxu0
        %v898 = vadd.f32 %v727, %v897
        %v899 = vpop.f32.mrb[0].mxu0
        %v900 = vadd.f32 %v731, %v899
        %901 = vdwg.mxu0
        %902 = vmatprep.subr.mxu0 %v655
        %903 = vmatpush1.msra.mxu0 %v654
        %904 = vmatprep.subr.mxu0 %v663
        %905 = vmatpush1.msra.mxu0 %v662
        %906 = vmatprep.subr.mxu0 %v671
        %907 = vmatpush1.msra.mxu0 %v670
        %908 = vmatprep.subr.mxu0 %v679
        %909 = vmatpush1.msra.mxu0 %v678
        %910 = vmatprep.subr.mxu0 %v687
        %911 = vmatpush1.msra.mxu0 %v686
        %912 = vmatprep.subr.mxu0 %v695
        %913 = vmatpush1.msra.mxu0 %v694
        %914 = vmatprep.subr.mxu0 %v703
        %915 = vmatpush1.msra.mxu0 %v702
        %916 = vmatprep.subr.mxu0 %v711
        %917 = vmatpush1.msra.mxu0 %v710
        %918 = vmatprep.subr.mxu0 0.0
        %919 = vmatpush1.msra.mxu0 0.0
        %920 = vmatprep.subr.mxu0 0.0
        %921 = vmatpush1.msra.mxu0 0.0
        %922 = vmatprep.subr.mxu0 0.0
        %923 = vmatpush1.msra.mxu0 0.0
        %924 = vmatprep.subr.mxu0 0.0
        %925 = vmatpush1.msra.mxu0 0.0
        %926 = vmatprep.subr.mxu0 0.0
        %927 = vmatpush1.msra.mxu0 0.0
        %928 = vmatprep.subr.mxu0 0.0
        %929 = vmatpush1.msra.mxu0 0.0
        %930 = vmatprep.subr.mxu0 0.0
        %931 = vmatpush1.msra.mxu0 0.0
        %932 = vmatprep.subr.mxu0 0.0
        %933 = vmatpush1.msra.mxu0 0.0
        %934 = vmatprep.subr.mxu0 0.0
        %935 = vmatpush1.msra.mxu0 0.0
        %936 = vmatprep.subr.mxu0 0.0
        %937 = vmatpush1.msra.mxu0 0.0
        %938 = vmatprep.subr.mxu0 0.0
        %939 = vmatpush1.msra.mxu0 0.0
        %940 = vmatprep.subr.mxu0 0.0
        %941 = vmatpush1.msra.mxu0 0.0
        %942 = vmatprep.subr.mxu0 0.0
        %943 = vmatpush1.msra.mxu0 0.0
        %944 = vmatprep.subr.mxu0 0.0
        %945 = vmatpush1.msra.mxu0 0.0
        %946 = vmatprep.subr.mxu0 0.0
        %947 = vmatpush1.msra.mxu0 0.0
        %948 = vmatprep.subr.mxu0 0.0
        %949 = vmatpush1.msra.mxu0 0.0
        %950 = vmatprep.subr.mxu0 0.0
        %951 = vmatpush1.msra.mxu0 0.0
        %952 = vmatprep.subr.mxu0 0.0
        %953 = vmatpush1.msra.mxu0 0.0
        %954 = vmatprep.subr.mxu0 0.0
        %955 = vmatpush1.msra.mxu0 0.0
        %956 = vmatprep.subr.mxu0 0.0
        %957 = vmatpush1.msra.mxu0 0.0
        %958 = vmatprep.subr.mxu0 0.0
        %959 = vmatpush1.msra.mxu0 0.0
        %960 = vmatprep.subr.mxu0 0.0
        %961 = vmatpush1.msra.mxu0 0.0
        %962 = vmatprep.subr.mxu0 0.0
        %963 = vmatpush1.msra.mxu0 0.0
        %964 = vmatprep.subr.mxu0 0.0
        %965 = vmatpush1.msra.mxu0 0.0
        %966 = vmatprep.mubr.f32.mxu0 0.0
        %967 = vmatmul.mubr.f32.gmra.mrb[0].mxu0 %v758
        %v968 = vpop.f32.mrb[0].mxu0
        %v969 = vadd.f32 %v735, %v968
        %v970 = vpop.f32.mrb[0].mxu0
        %v971 = vadd.f32 %v739, %v970
        %972 = vdwg.mxu0
        %973 = vmatprep.subr.mxu0 %v657
        %974 = vmatpush1.msra.mxu0 %v656
        %975 = vmatprep.subr.mxu0 %v665
        %976 = vmatpush1.msra.mxu0 %v664
        %977 = vmatprep.subr.mxu0 %v673
        %978 = vmatpush1.msra.mxu0 %v672
        %979 = vmatprep.subr.mxu0 %v681
        %980 = vmatpush1.msra.mxu0 %v680
        %981 = vmatprep.subr.mxu0 %v689
        %982 = vmatpush1.msra.mxu0 %v688
        %983 = vmatprep.subr.mxu0 %v697
        %984 = vmatpush1.msra.mxu0 %v696
        %985 = vmatprep.subr.mxu0 %v705
        %986 = vmatpush1.msra.mxu0 %v704
        %987 = vmatprep.subr.mxu0 %v713
        %988 = vmatpush1.msra.mxu0 %v712
        %989 = vmatprep.subr.mxu0 0.0
        %990 = vmatpush1.msra.mxu0 0.0
        %991 = vmatprep.subr.mxu0 0.0
        %992 = vmatpush1.msra.mxu0 0.0
        %993 = vmatprep.subr.mxu0 0.0
        %994 = vmatpush1.msra.mxu0 0.0
        %995 = vmatprep.subr.mxu0 0.0
        %996 = vmatpush1.msra.mxu0 0.0
        %997 = vmatprep.subr.mxu0 0.0
        %998 = vmatpush1.msra.mxu0 0.0
        %999 = vmatprep.subr.mxu0 0.0
        %1000 = vmatpush1.msra.mxu0 0.0
        %1001 = vmatprep.subr.mxu0 0.0
        %1002 = vmatpush1.msra.mxu0 0.0
        %1003 = vmatprep.subr.mxu0 0.0
        %1004 = vmatpush1.msra.mxu0 0.0
        %1005 = vmatprep.subr.mxu0 0.0
        %1006 = vmatpush1.msra.mxu0 0.0
        %1007 = vmatprep.subr.mxu0 0.0
        %1008 = vmatpush1.msra.mxu0 0.0
        %1009 = vmatprep.subr.mxu0 0.0
        %1010 = vmatpush1.msra.mxu0 0.0
        %1011 = vmatprep.subr.mxu0 0.0
        %1012 = vmatpush1.msra.mxu0 0.0
        %1013 = vmatprep.subr.mxu0 0.0
        %1014 = vmatpush1.msra.mxu0 0.0
        %1015 = vmatprep.subr.mxu0 0.0
        %1016 = vmatpush1.msra.mxu0 0.0
        %1017 = vmatprep.subr.mxu0 0.0
        %1018 = vmatpush1.msra.mxu0 0.0
        %1019 = vmatprep.subr.mxu0 0.0
        %1020 = vmatpush1.msra.mxu0 0.0
        %1021 = vmatprep.subr.mxu0 0.0
        %1022 = vmatpush1.msra.mxu0 0.0
        %1023 = vmatprep.subr.mxu0 0.0
        %1024 = vmatpush1.msra.mxu0 0.0
        %1025 = vmatprep.subr.mxu0 0.0
        %1026 = vmatpush1.msra.mxu0 0.0
        %1027 = vmatprep.subr.mxu0 0.0
        %1028 = vmatpush1.msra.mxu0 0.0
        %1029 = vmatprep.subr.mxu0 0.0
        %1030 = vmatpush1.msra.mxu0 0.0
        %1031 = vmatprep.subr.mxu0 0.0
        %1032 = vmatpush1.msra.mxu0 0.0
        %1033 = vmatprep.subr.mxu0 0.0
        %1034 = vmatpush1.msra.mxu0 0.0
        %1035 = vmatprep.subr.mxu0 0.0
        %1036 = vmatpush1.msra.mxu0 0.0
        %1037 = vmatprep.mubr.f32.mxu0 0.0
        %1038 = vmatmul.mubr.f32.gmra.mrb[0].mxu0 %v758
        %v1039 = vpop.f32.mrb[0].mxu0
        %v1040 = vadd.f32 %v743, %v1039
        %v1041 = vpop.f32.mrb[0].mxu0
        %v1042 = vadd.f32 %v747, %v1041
        %1043 = vdwg.mxu0
        %v1044 = vmax.f32 %v827, 0.0
        %v1045 = vmax.f32 %v829, 0.0
        %v1046 = vmax.f32 %v898, 0.0
        %v1047 = vmax.f32 %v900, 0.0
        %v1048 = vmax.f32 %v969, 0.0
        %v1049 = vmax.f32 %v971, 0.0
        %v1050 = vmax.f32 %v1040, 0.0
        %v1051 = vmax.f32 %v1042, 0.0
        %v1052 = vld [vmem:[#allocation8] sm:$0xff]
        %v1053 = vld [vmem:[#allocation8 + $0x8] sm:$0xff]
        %v1054 = vld [vmem:[#allocation8 + $0x10] sm:$0xff]
        %v1055 = vld [vmem:[#allocation8 + $0x18] sm:$0xff]
        %v1056 = vld [vmem:[#allocation8 + $0x20] sm:$0xff]
        %v1057 = vld [vmem:[#allocation8 + $0x28] sm:$0xff]
        %v1058 = vld [vmem:[#allocation8 + $0x30] sm:$0xff]
        %v1059 = vld [vmem:[#allocation8 + $0x38] sm:$0xff]
        %v1060 = vld [vmem:[#allocation8 + $0x40] sm:$0xff]
        %v1061 = vld [vmem:[#allocation8 + $0x48] sm:$0xff]
        %v1062 = vld [vmem:[#allocation8 + $0x50] sm:$0xff]
        %v1063 = vld [vmem:[#allocation8 + $0x58] sm:$0xff]
        %v1064 = vld [vmem:[#allocation8 + $0x60] sm:$0xff]
        %v1065 = vld [vmem:[#allocation8 + $0x68] sm:$0xff]
        %v1066 = vld [vmem:[#allocation8 + $0x70] sm:$0xff]
        %v1067 = vld [vmem:[#allocation8 + $0x78] sm:$0xff]
        %v1068 = vld [vmem:[#allocation8 + $0x80] sm:$0xff]
        %v1069 = vld [vmem:[#allocation8 + $0x88] sm:$0xff]
        %v1070 = vld [vmem:[#allocation8 + $0x90] sm:$0xff]
        %v1071 = vld [vmem:[#allocation8 + $0x98] sm:$0xff]
        %v1072 = vld [vmem:[#allocation8 + $0xa0] sm:$0xff]
        %v1073 = vld [vmem:[#allocation8 + $0xa8] sm:$0xff]
        %v1074 = vld [vmem:[#allocation8 + $0xb0] sm:$0xff]
        %v1075 = vld [vmem:[#allocation8 + $0xb8] sm:$0xff]
        %v1076 = vld [vmem:[#allocation8 + $0xc0] sm:$0xff]
        %v1077 = vld [vmem:[#allocation8 + $0xc8] sm:$0xff]
        %v1078 = vld [vmem:[#allocation8 + $0xd0] sm:$0xff]
        %v1079 = vld [vmem:[#allocation8 + $0xd8] sm:$0xff]
        %v1080 = vld [vmem:[#allocation8 + $0xe0] sm:$0xff]
        %v1081 = vld [vmem:[#allocation8 + $0xe8] sm:$0xff]
        %v1082 = vld [vmem:[#allocation8 + $0xf0] sm:$0xff]
        %v1083 = vld [vmem:[#allocation8 + $0xf8] sm:$0xff]
        %v1084 = vld [vmem:[#allocation8 + $0x100] sm:$0xff]
        %v1085 = vld [vmem:[#allocation8 + $0x108] sm:$0xff]
        %v1086 = vld [vmem:[#allocation8 + $0x110] sm:$0xff]
        %v1087 = vld [vmem:[#allocation8 + $0x118] sm:$0xff]
        %v1088 = vld [vmem:[#allocation8 + $0x120] sm:$0xff]
        %v1089 = vld [vmem:[#allocation8 + $0x128] sm:$0xff]
        %v1090 = vld [vmem:[#allocation8 + $0x130] sm:$0xff]
        %v1091 = vld [vmem:[#allocation8 + $0x138] sm:$0xff]
        %v1092 = vld [vmem:[#allocation8 + $0x140] sm:$0xff]
        %v1093 = vld [vmem:[#allocation8 + $0x148] sm:$0xff]
        %v1094 = vld [vmem:[#allocation8 + $0x150] sm:$0xff]
        %v1095 = vld [vmem:[#allocation8 + $0x158] sm:$0xff]
        %v1096 = vld [vmem:[#allocation8 + $0x160] sm:$0xff]
        %v1097 = vld [vmem:[#allocation8 + $0x168] sm:$0xff]
        %v1098 = vld [vmem:[#allocation8 + $0x170] sm:$0xff]
        %v1099 = vld [vmem:[#allocation8 + $0x178] sm:$0xff]
        %v1100 = vld [vmem:[#allocation8 + $0x180] sm:$0xff]
        %v1101 = vld [vmem:[#allocation8 + $0x188] sm:$0xff]
        %v1102 = vld [vmem:[#allocation8 + $0x190] sm:$0xff]
        %v1103 = vld [vmem:[#allocation8 + $0x198] sm:$0xff]
        %v1104 = vld [vmem:[#allocation8 + $0x1a0] sm:$0xff]
        %v1105 = vld [vmem:[#allocation8 + $0x1a8] sm:$0xff]
        %v1106 = vld [vmem:[#allocation8 + $0x1b0] sm:$0xff]
        %v1107 = vld [vmem:[#allocation8 + $0x1b8] sm:$0xff]
        %v1108 = vld [vmem:[#allocation8 + $0x1c0] sm:$0xff]
        %v1109 = vld [vmem:[#allocation8 + $0x1c8] sm:$0xff]
        %v1110 = vld [vmem:[#allocation8 + $0x1d0] sm:$0xff]
        %v1111 = vld [vmem:[#allocation8 + $0x1d8] sm:$0xff]
        %v1112 = vld [vmem:[#allocation8 + $0x1e0] sm:$0xff]
        %v1113 = vld [vmem:[#allocation8 + $0x1e8] sm:$0xff]
        %v1114 = vld [vmem:[#allocation8 + $0x1f0] sm:$0xff]
        %v1115 = vld [vmem:[#allocation8 + $0x1f8] sm:$0xff]
        %v1116 = vld [vmem:[#allocation8 + $0x200] sm:$0xff]
        %v1117 = vld [vmem:[#allocation8 + $0x208] sm:$0xff]
        %v1118 = vld [vmem:[#allocation8 + $0x210] sm:$0xff]
        %v1119 = vld [vmem:[#allocation8 + $0x218] sm:$0xff]
        %v1120 = vld [vmem:[#allocation8 + $0x220] sm:$0xff]
        %v1121 = vld [vmem:[#allocation8 + $0x228] sm:$0xff]
        %v1122 = vld [vmem:[#allocation8 + $0x230] sm:$0xff]
        %v1123 = vld [vmem:[#allocation8 + $0x238] sm:$0xff]
        %v1124 = vld [vmem:[#allocation8 + $0x240] sm:$0xff]
        %v1125 = vld [vmem:[#allocation8 + $0x248] sm:$0xff]
        %v1126 = vld [vmem:[#allocation8 + $0x250] sm:$0xff]
        %v1127 = vld [vmem:[#allocation8 + $0x258] sm:$0xff]
        %v1128 = vld [vmem:[#allocation8 + $0x260] sm:$0xff]
        %v1129 = vld [vmem:[#allocation8 + $0x268] sm:$0xff]
        %v1130 = vld [vmem:[#allocation8 + $0x270] sm:$0xff]
        %v1131 = vld [vmem:[#allocation8 + $0x278] sm:$0xff]
        %v1132 = vld [vmem:[#allocation8 + $0x280] sm:$0xff]
        %v1133 = vld [vmem:[#allocation8 + $0x288] sm:$0xff]
        %v1134 = vld [vmem:[#allocation8 + $0x290] sm:$0xff]
        %v1135 = vld [vmem:[#allocation8 + $0x298] sm:$0xff]
        %v1136 = vld [vmem:[#allocation8 + $0x2a0] sm:$0xff]
        %v1137 = vld [vmem:[#allocation8 + $0x2a8] sm:$0xff]
        %v1138 = vld [vmem:[#allocation8 + $0x2b0] sm:$0xff]
        %v1139 = vld [vmem:[#allocation8 + $0x2b8] sm:$0xff]
        %v1140 = vld [vmem:[#allocation8 + $0x2c0] sm:$0xff]
        %v1141 = vld [vmem:[#allocation8 + $0x2c8] sm:$0xff]
        %v1142 = vld [vmem:[#allocation8 + $0x2d0] sm:$0xff]
        %v1143 = vld [vmem:[#allocation8 + $0x2d8] sm:$0xff]
        %v1144 = vld [vmem:[#allocation8 + $0x2e0] sm:$0xff]
        %v1145 = vld [vmem:[#allocation8 + $0x2e8] sm:$0xff]
        %v1146 = vld [vmem:[#allocation8 + $0x2f0] sm:$0xff]
        %v1147 = vld [vmem:[#allocation8 + $0x2f8] sm:$0xff]
        %v1148 = vld [vmem:[#allocation8 + $0x300] sm:$0xff]
        %v1149 = vld [vmem:[#allocation8 + $0x308] sm:$0xff]
        %v1150 = vld [vmem:[#allocation8 + $0x310] sm:$0xff]
        %v1151 = vld [vmem:[#allocation8 + $0x318] sm:$0xff]
        %v1152 = vld [vmem:[#allocation8 + $0x320] sm:$0xff]
        %v1153 = vld [vmem:[#allocation8 + $0x328] sm:$0xff]
        %v1154 = vld [vmem:[#allocation8 + $0x330] sm:$0xff]
        %v1155 = vld [vmem:[#allocation8 + $0x338] sm:$0xff]
        %v1156 = vld [vmem:[#allocation8 + $0x340] sm:$0xff]
        %v1157 = vld [vmem:[#allocation8 + $0x348] sm:$0xff]
        %v1158 = vld [vmem:[#allocation8 + $0x350] sm:$0xff]
        %v1159 = vld [vmem:[#allocation8 + $0x358] sm:$0xff]
        %v1160 = vld [vmem:[#allocation8 + $0x360] sm:$0xff]
        %v1161 = vld [vmem:[#allocation8 + $0x368] sm:$0xff]
        %v1162 = vld [vmem:[#allocation8 + $0x370] sm:$0xff]
        %v1163 = vld [vmem:[#allocation8 + $0x378] sm:$0xff]
        %v1164 = vld [vmem:[#allocation8 + $0x380] sm:$0xff]
        %v1165 = vld [vmem:[#allocation8 + $0x388] sm:$0xff]
        %v1166 = vld [vmem:[#allocation8 + $0x390] sm:$0xff]
        %v1167 = vld [vmem:[#allocation8 + $0x398] sm:$0xff]
        %v1168 = vld [vmem:[#allocation8 + $0x3a0] sm:$0xff]
        %v1169 = vld [vmem:[#allocation8 + $0x3a8] sm:$0xff]
        %v1170 = vld [vmem:[#allocation8 + $0x3b0] sm:$0xff]
        %v1171 = vld [vmem:[#allocation8 + $0x3b8] sm:$0xff]
        %v1172 = vld [vmem:[#allocation8 + $0x3c0] sm:$0xff]
        %v1173 = vld [vmem:[#allocation8 + $0x3c8] sm:$0xff]
        %v1174 = vld [vmem:[#allocation8 + $0x3d0] sm:$0xff]
        %v1175 = vld [vmem:[#allocation8 + $0x3d8] sm:$0xff]
        %v1176 = vld [vmem:[#allocation8 + $0x3e0] sm:$0xff]
        %v1177 = vld [vmem:[#allocation8 + $0x3e8] sm:$0xff]
        %v1178 = vld [vmem:[#allocation8 + $0x3f0] sm:$0xff]
        %v1179 = vld [vmem:[#allocation8 + $0x3f8] sm:$0xff]
        %v1180 = vld [vmem:[#allocation8 + $0x400] sm:$0xff]
        %v1181 = vld [vmem:[#allocation8 + $0x408] sm:$0xff]
        %v1182 = vld [vmem:[#allocation8 + $0x410] sm:$0xff]
        %v1183 = vld [vmem:[#allocation8 + $0x418] sm:$0xff]
        %v1184 = vld [vmem:[#allocation8 + $0x420] sm:$0xff]
        %v1185 = vld [vmem:[#allocation8 + $0x428] sm:$0xff]
        %v1186 = vld [vmem:[#allocation8 + $0x430] sm:$0xff]
        %v1187 = vld [vmem:[#allocation8 + $0x438] sm:$0xff]
        %v1188 = vld [vmem:[#allocation8 + $0x440] sm:$0xff]
        %v1189 = vld [vmem:[#allocation8 + $0x448] sm:$0xff]
        %v1190 = vld [vmem:[#allocation8 + $0x450] sm:$0xff]
        %v1191 = vld [vmem:[#allocation8 + $0x458] sm:$0xff]
        %v1192 = vld [vmem:[#allocation8 + $0x460] sm:$0xff]
        %v1193 = vld [vmem:[#allocation8 + $0x468] sm:$0xff]
        %v1194 = vld [vmem:[#allocation8 + $0x470] sm:$0xff]
        %v1195 = vld [vmem:[#allocation8 + $0x478] sm:$0xff]
        %v1196 = vld [vmem:[#allocation8 + $0x480] sm:$0xff]
        %v1197 = vld [vmem:[#allocation8 + $0x488] sm:$0xff]
        %v1198 = vld [vmem:[#allocation8 + $0x490] sm:$0xff]
        %v1199 = vld [vmem:[#allocation8 + $0x498] sm:$0xff]
        %v1200 = vld [vmem:[#allocation8 + $0x4a0] sm:$0xff]
        %v1201 = vld [vmem:[#allocation8 + $0x4a8] sm:$0xff]
        %v1202 = vld [vmem:[#allocation8 + $0x4b0] sm:$0xff]
        %v1203 = vld [vmem:[#allocation8 + $0x4b8] sm:$0xff]
        %v1204 = vld [vmem:[#allocation8 + $0x4c0] sm:$0xff]
        %v1205 = vld [vmem:[#allocation8 + $0x4c8] sm:$0xff]
        %v1206 = vld [vmem:[#allocation8 + $0x4d0] sm:$0xff]
        %v1207 = vld [vmem:[#allocation8 + $0x4d8] sm:$0xff]
        %v1208 = vld [vmem:[#allocation8 + $0x4e0] sm:$0xff]
        %v1209 = vld [vmem:[#allocation8 + $0x4e8] sm:$0xff]
        %v1210 = vld [vmem:[#allocation8 + $0x4f0] sm:$0xff]
        %v1211 = vld [vmem:[#allocation8 + $0x4f8] sm:$0xff]
        %v1212 = vld [vmem:[#allocation8 + $0x500] sm:$0xff]
        %v1213 = vld [vmem:[#allocation8 + $0x508] sm:$0xff]
        %v1214 = vld [vmem:[#allocation8 + $0x510] sm:$0xff]
        %v1215 = vld [vmem:[#allocation8 + $0x518] sm:$0xff]
        %v1216 = vld [vmem:[#allocation8 + $0x520] sm:$0xff]
        %v1217 = vld [vmem:[#allocation8 + $0x528] sm:$0xff]
        %v1218 = vld [vmem:[#allocation8 + $0x530] sm:$0xff]
        %v1219 = vld [vmem:[#allocation8 + $0x538] sm:$0xff]
        %v1220 = vld [vmem:[#allocation8 + $0x540] sm:$0xff]
        %v1221 = vld [vmem:[#allocation8 + $0x548] sm:$0xff]
        %v1222 = vld [vmem:[#allocation8 + $0x550] sm:$0xff]
        %v1223 = vld [vmem:[#allocation8 + $0x558] sm:$0xff]
        %v1224 = vld [vmem:[#allocation8 + $0x560] sm:$0xff]
        %v1225 = vld [vmem:[#allocation8 + $0x568] sm:$0xff]
        %v1226 = vld [vmem:[#allocation8 + $0x570] sm:$0xff]
        %v1227 = vld [vmem:[#allocation8 + $0x578] sm:$0xff]
        %v1228 = vld [vmem:[#allocation8 + $0x580] sm:$0xff]
        %v1229 = vld [vmem:[#allocation8 + $0x588] sm:$0xff]
        %v1230 = vld [vmem:[#allocation8 + $0x590] sm:$0xff]
        %v1231 = vld [vmem:[#allocation8 + $0x598] sm:$0xff]
        %v1232 = vld [vmem:[#allocation8 + $0x5a0] sm:$0xff]
        %v1233 = vld [vmem:[#allocation8 + $0x5a8] sm:$0xff]
        %v1234 = vld [vmem:[#allocation8 + $0x5b0] sm:$0xff]
        %v1235 = vld [vmem:[#allocation8 + $0x5b8] sm:$0xff]
        %v1236 = vld [vmem:[#allocation8 + $0x5c0] sm:$0xff]
        %v1237 = vld [vmem:[#allocation8 + $0x5c8] sm:$0xff]
        %v1238 = vld [vmem:[#allocation8 + $0x5d0] sm:$0xff]
        %v1239 = vld [vmem:[#allocation8 + $0x5d8] sm:$0xff]
        %v1240 = vld [vmem:[#allocation8 + $0x5e0] sm:$0xff]
        %v1241 = vld [vmem:[#allocation8 + $0x5e8] sm:$0xff]
        %v1242 = vld [vmem:[#allocation8 + $0x5f0] sm:$0xff]
        %v1243 = vld [vmem:[#allocation8 + $0x5f8] sm:$0xff]
        %v1244 = vld [vmem:[#allocation8 + $0x600] sm:$0xff]
        %v1245 = vld [vmem:[#allocation8 + $0x608] sm:$0xff]
        %v1246 = vld [vmem:[#allocation8 + $0x610] sm:$0xff]
        %v1247 = vld [vmem:[#allocation8 + $0x618] sm:$0xff]
        %v1248 = vld [vmem:[#allocation8 + $0x620] sm:$0xff]
        %v1249 = vld [vmem:[#allocation8 + $0x628] sm:$0xff]
        %v1250 = vld [vmem:[#allocation8 + $0x630] sm:$0xff]
        %v1251 = vld [vmem:[#allocation8 + $0x638] sm:$0xff]
        %v1252 = vld [vmem:[#allocation8 + $0x640] sm:$0xff]
        %v1253 = vld [vmem:[#allocation8 + $0x648] sm:$0xff]
        %v1254 = vld [vmem:[#allocation8 + $0x650] sm:$0xff]
        %v1255 = vld [vmem:[#allocation8 + $0x658] sm:$0xff]
        %v1256 = vld [vmem:[#allocation8 + $0x660] sm:$0xff]
        %v1257 = vld [vmem:[#allocation8 + $0x668] sm:$0xff]
        %v1258 = vld [vmem:[#allocation8 + $0x670] sm:$0xff]
        %v1259 = vld [vmem:[#allocation8 + $0x678] sm:$0xff]
        %v1260 = vld [vmem:[#allocation8 + $0x680] sm:$0xff]
        %v1261 = vld [vmem:[#allocation8 + $0x688] sm:$0xff]
        %v1262 = vld [vmem:[#allocation8 + $0x690] sm:$0xff]
        %v1263 = vld [vmem:[#allocation8 + $0x698] sm:$0xff]
        %v1264 = vld [vmem:[#allocation8 + $0x6a0] sm:$0xff]
        %v1265 = vld [vmem:[#allocation8 + $0x6a8] sm:$0xff]
        %v1266 = vld [vmem:[#allocation8 + $0x6b0] sm:$0xff]
        %v1267 = vld [vmem:[#allocation8 + $0x6b8] sm:$0xff]
        %v1268 = vld [vmem:[#allocation8 + $0x6c0] sm:$0xff]
        %v1269 = vld [vmem:[#allocation8 + $0x6c8] sm:$0xff]
        %v1270 = vld [vmem:[#allocation8 + $0x6d0] sm:$0xff]
        %v1271 = vld [vmem:[#allocation8 + $0x6d8] sm:$0xff]
        %v1272 = vld [vmem:[#allocation8 + $0x6e0] sm:$0xff]
        %v1273 = vld [vmem:[#allocation8 + $0x6e8] sm:$0xff]
        %v1274 = vld [vmem:[#allocation8 + $0x6f0] sm:$0xff]
        %v1275 = vld [vmem:[#allocation8 + $0x6f8] sm:$0xff]
        %v1276 = vld [vmem:[#allocation8 + $0x700] sm:$0xff]
        %v1277 = vld [vmem:[#allocation8 + $0x708] sm:$0xff]
        %v1278 = vld [vmem:[#allocation8 + $0x710] sm:$0xff]
        %v1279 = vld [vmem:[#allocation8 + $0x718] sm:$0xff]
        %v1280 = vld [vmem:[#allocation8 + $0x720] sm:$0xff]
        %v1281 = vld [vmem:[#allocation8 + $0x728] sm:$0xff]
        %v1282 = vld [vmem:[#allocation8 + $0x730] sm:$0xff]
        %v1283 = vld [vmem:[#allocation8 + $0x738] sm:$0xff]
        %v1284 = vld [vmem:[#allocation8 + $0x740] sm:$0xff]
        %v1285 = vld [vmem:[#allocation8 + $0x748] sm:$0xff]
        %v1286 = vld [vmem:[#allocation8 + $0x750] sm:$0xff]
        %v1287 = vld [vmem:[#allocation8 + $0x758] sm:$0xff]
        %v1288 = vld [vmem:[#allocation8 + $0x760] sm:$0xff]
        %v1289 = vld [vmem:[#allocation8 + $0x768] sm:$0xff]
        %v1290 = vld [vmem:[#allocation8 + $0x770] sm:$0xff]
        %v1291 = vld [vmem:[#allocation8 + $0x778] sm:$0xff]
        %v1292 = vld [vmem:[#allocation8 + $0x780] sm:$0xff]
        %v1293 = vld [vmem:[#allocation8 + $0x788] sm:$0xff]
        %v1294 = vld [vmem:[#allocation8 + $0x790] sm:$0xff]
        %v1295 = vld [vmem:[#allocation8 + $0x798] sm:$0xff]
        %v1296 = vld [vmem:[#allocation8 + $0x7a0] sm:$0xff]
        %v1297 = vld [vmem:[#allocation8 + $0x7a8] sm:$0xff]
        %v1298 = vld [vmem:[#allocation8 + $0x7b0] sm:$0xff]
        %v1299 = vld [vmem:[#allocation8 + $0x7b8] sm:$0xff]
        %v1300 = vld [vmem:[#allocation8 + $0x7c0] sm:$0xff]
        %v1301 = vld [vmem:[#allocation8 + $0x7c8] sm:$0xff]
        %v1302 = vld [vmem:[#allocation8 + $0x7d0] sm:$0xff]
        %v1303 = vld [vmem:[#allocation8 + $0x7d8] sm:$0xff]
        %v1304 = vld [vmem:[#allocation8 + $0x7e0] sm:$0xff]
        %v1305 = vld [vmem:[#allocation8 + $0x7e8] sm:$0xff]
        %v1306 = vld [vmem:[#allocation8 + $0x7f0] sm:$0xff]
        %v1307 = vld [vmem:[#allocation8 + $0x7f8] sm:$0xff]
        %v1308 = vld [vmem:[#allocation8 + $0x800] sm:$0xff]
        %v1309 = vld [vmem:[#allocation8 + $0x808] sm:$0xff]
        %v1310 = vld [vmem:[#allocation8 + $0x810] sm:$0xff]
        %v1311 = vld [vmem:[#allocation8 + $0x818] sm:$0xff]
        %v1312 = vld [vmem:[#allocation8 + $0x820] sm:$0xff]
        %v1313 = vld [vmem:[#allocation8 + $0x828] sm:$0xff]
        %v1314 = vld [vmem:[#allocation8 + $0x830] sm:$0xff]
        %v1315 = vld [vmem:[#allocation8 + $0x838] sm:$0xff]
        %v1316 = vld [vmem:[#allocation8 + $0x840] sm:$0xff]
        %v1317 = vld [vmem:[#allocation8 + $0x848] sm:$0xff]
        %v1318 = vld [vmem:[#allocation8 + $0x850] sm:$0xff]
        %v1319 = vld [vmem:[#allocation8 + $0x858] sm:$0xff]
        %v1320 = vld [vmem:[#allocation8 + $0x860] sm:$0xff]
        %v1321 = vld [vmem:[#allocation8 + $0x868] sm:$0xff]
        %v1322 = vld [vmem:[#allocation8 + $0x870] sm:$0xff]
        %v1323 = vld [vmem:[#allocation8 + $0x878] sm:$0xff]
        %v1324 = vld [vmem:[#allocation8 + $0x880] sm:$0xff]
        %v1325 = vld [vmem:[#allocation8 + $0x888] sm:$0xff]
        %v1326 = vld [vmem:[#allocation8 + $0x890] sm:$0xff]
        %v1327 = vld [vmem:[#allocation8 + $0x898] sm:$0xff]
        %v1328 = vld [vmem:[#allocation8 + $0x8a0] sm:$0xff]
        %v1329 = vld [vmem:[#allocation8 + $0x8a8] sm:$0xff]
        %v1330 = vld [vmem:[#allocation8 + $0x8b0] sm:$0xff]
        %v1331 = vld [vmem:[#allocation8 + $0x8b8] sm:$0xff]
        %v1332 = vld [vmem:[#allocation8 + $0x8c0] sm:$0xff]
        %v1333 = vld [vmem:[#allocation8 + $0x8c8] sm:$0xff]
        %v1334 = vld [vmem:[#allocation8 + $0x8d0] sm:$0xff]
        %v1335 = vld [vmem:[#allocation8 + $0x8d8] sm:$0xff]
        %v1336 = vld [vmem:[#allocation8 + $0x8e0] sm:$0xff]
        %v1337 = vld [vmem:[#allocation8 + $0x8e8] sm:$0xff]
        %v1338 = vld [vmem:[#allocation8 + $0x8f0] sm:$0xff]
        %v1339 = vld [vmem:[#allocation8 + $0x8f8] sm:$0xff]
        %v1340 = vld [vmem:[#allocation8 + $0x900] sm:$0xff]
        %v1341 = vld [vmem:[#allocation8 + $0x908] sm:$0xff]
        %v1342 = vld [vmem:[#allocation8 + $0x910] sm:$0xff]
        %v1343 = vld [vmem:[#allocation8 + $0x918] sm:$0xff]
        %v1344 = vld [vmem:[#allocation8 + $0x920] sm:$0xff]
        %v1345 = vld [vmem:[#allocation8 + $0x928] sm:$0xff]
        %v1346 = vld [vmem:[#allocation8 + $0x930] sm:$0xff]
        %v1347 = vld [vmem:[#allocation8 + $0x938] sm:$0xff]
        %v1348 = vld [vmem:[#allocation8 + $0x940] sm:$0xff]
        %v1349 = vld [vmem:[#allocation8 + $0x948] sm:$0xff]
        %v1350 = vld [vmem:[#allocation8 + $0x950] sm:$0xff]
        %v1351 = vld [vmem:[#allocation8 + $0x958] sm:$0xff]
        %v1352 = vld [vmem:[#allocation8 + $0x960] sm:$0xff]
        %v1353 = vld [vmem:[#allocation8 + $0x968] sm:$0xff]
        %v1354 = vld [vmem:[#allocation8 + $0x970] sm:$0xff]
        %v1355 = vld [vmem:[#allocation8 + $0x978] sm:$0xff]
        %v1356 = vld [vmem:[#allocation8 + $0x980] sm:$0xff]
        %v1357 = vld [vmem:[#allocation8 + $0x988] sm:$0xff]
        %v1358 = vld [vmem:[#allocation8 + $0x990] sm:$0xff]
        %v1359 = vld [vmem:[#allocation8 + $0x998] sm:$0xff]
        %v1360 = vld [vmem:[#allocation8 + $0x9a0] sm:$0xff]
        %v1361 = vld [vmem:[#allocation8 + $0x9a8] sm:$0xff]
        %v1362 = vld [vmem:[#allocation8 + $0x9b0] sm:$0xff]
        %v1363 = vld [vmem:[#allocation8 + $0x9b8] sm:$0xff]
        %v1364 = vld [vmem:[#allocation8 + $0x9c0] sm:$0xff]
        %v1365 = vld [vmem:[#allocation8 + $0x9c8] sm:$0xff]
        %v1366 = vld [vmem:[#allocation8 + $0x9d0] sm:$0xff]
        %v1367 = vld [vmem:[#allocation8 + $0x9d8] sm:$0xff]
        %v1368 = vld [vmem:[#allocation8 + $0x9e0] sm:$0xff]
        %v1369 = vld [vmem:[#allocation8 + $0x9e8] sm:$0xff]
        %v1370 = vld [vmem:[#allocation8 + $0x9f0] sm:$0xff]
        %v1371 = vld [vmem:[#allocation8 + $0x9f8] sm:$0xff]
        %v1372 = vld [vmem:[#allocation8 + $0xa00] sm:$0xff]
        %v1373 = vld [vmem:[#allocation8 + $0xa08] sm:$0xff]
        %v1374 = vld [vmem:[#allocation8 + $0xa10] sm:$0xff]
        %v1375 = vld [vmem:[#allocation8 + $0xa18] sm:$0xff]
        %v1376 = vld [vmem:[#allocation8 + $0xa20] sm:$0xff]
        %v1377 = vld [vmem:[#allocation8 + $0xa28] sm:$0xff]
        %v1378 = vld [vmem:[#allocation8 + $0xa30] sm:$0xff]
        %v1379 = vld [vmem:[#allocation8 + $0xa38] sm:$0xff]
        %v1380 = vld [vmem:[#allocation8 + $0xa40] sm:$0xff]
        %v1381 = vld [vmem:[#allocation8 + $0xa48] sm:$0xff]
        %v1382 = vld [vmem:[#allocation8 + $0xa50] sm:$0xff]
        %v1383 = vld [vmem:[#allocation8 + $0xa58] sm:$0xff]
        %v1384 = vld [vmem:[#allocation8 + $0xa60] sm:$0xff]
        %v1385 = vld [vmem:[#allocation8 + $0xa68] sm:$0xff]
        %v1386 = vld [vmem:[#allocation8 + $0xa70] sm:$0xff]
        %v1387 = vld [vmem:[#allocation8 + $0xa78] sm:$0xff]
        %v1388 = vld [vmem:[#allocation8 + $0xa80] sm:$0xff]
        %v1389 = vld [vmem:[#allocation8 + $0xa88] sm:$0xff]
        %v1390 = vld [vmem:[#allocation8 + $0xa90] sm:$0xff]
        %v1391 = vld [vmem:[#allocation8 + $0xa98] sm:$0xff]
        %v1392 = vld [vmem:[#allocation8 + $0xaa0] sm:$0xff]
        %v1393 = vld [vmem:[#allocation8 + $0xaa8] sm:$0xff]
        %v1394 = vld [vmem:[#allocation8 + $0xab0] sm:$0xff]
        %v1395 = vld [vmem:[#allocation8 + $0xab8] sm:$0xff]
        %v1396 = vld [vmem:[#allocation8 + $0xac0] sm:$0xff]
        %v1397 = vld [vmem:[#allocation8 + $0xac8] sm:$0xff]
        %v1398 = vld [vmem:[#allocation8 + $0xad0] sm:$0xff]
        %v1399 = vld [vmem:[#allocation8 + $0xad8] sm:$0xff]
        %v1400 = vld [vmem:[#allocation8 + $0xae0] sm:$0xff]
        %v1401 = vld [vmem:[#allocation8 + $0xae8] sm:$0xff]
        %v1402 = vld [vmem:[#allocation8 + $0xaf0] sm:$0xff]
        %v1403 = vld [vmem:[#allocation8 + $0xaf8] sm:$0xff]
        %v1404 = vld [vmem:[#allocation8 + $0xb00] sm:$0xff]
        %v1405 = vld [vmem:[#allocation8 + $0xb08] sm:$0xff]
        %v1406 = vld [vmem:[#allocation8 + $0xb10] sm:$0xff]
        %v1407 = vld [vmem:[#allocation8 + $0xb18] sm:$0xff]
        %v1408 = vld [vmem:[#allocation8 + $0xb20] sm:$0xff]
        %v1409 = vld [vmem:[#allocation8 + $0xb28] sm:$0xff]
        %v1410 = vld [vmem:[#allocation8 + $0xb30] sm:$0xff]
        %v1411 = vld [vmem:[#allocation8 + $0xb38] sm:$0xff]
        %v1412 = vld [vmem:[#allocation8 + $0xb40] sm:$0xff]
        %v1413 = vld [vmem:[#allocation8 + $0xb48] sm:$0xff]
        %v1414 = vld [vmem:[#allocation8 + $0xb50] sm:$0xff]
        %v1415 = vld [vmem:[#allocation8 + $0xb58] sm:$0xff]
        %v1416 = vld [vmem:[#allocation8 + $0xb60] sm:$0xff]
        %v1417 = vld [vmem:[#allocation8 + $0xb68] sm:$0xff]
        %v1418 = vld [vmem:[#allocation8 + $0xb70] sm:$0xff]
        %v1419 = vld [vmem:[#allocation8 + $0xb78] sm:$0xff]
        %v1420 = vld [vmem:[#allocation8 + $0xb80] sm:$0xff]
        %v1421 = vld [vmem:[#allocation8 + $0xb88] sm:$0xff]
        %v1422 = vld [vmem:[#allocation8 + $0xb90] sm:$0xff]
        %v1423 = vld [vmem:[#allocation8 + $0xb98] sm:$0xff]
        %v1424 = vld [vmem:[#allocation8 + $0xba0] sm:$0xff]
        %v1425 = vld [vmem:[#allocation8 + $0xba8] sm:$0xff]
        %v1426 = vld [vmem:[#allocation8 + $0xbb0] sm:$0xff]
        %v1427 = vld [vmem:[#allocation8 + $0xbb8] sm:$0xff]
        %v1428 = vld [vmem:[#allocation8 + $0xbc0] sm:$0xff]
        %v1429 = vld [vmem:[#allocation8 + $0xbc8] sm:$0xff]
        %v1430 = vld [vmem:[#allocation8 + $0xbd0] sm:$0xff]
        %v1431 = vld [vmem:[#allocation8 + $0xbd8] sm:$0xff]
        %v1432 = vld [vmem:[#allocation8 + $0xbe0] sm:$0xff]
        %v1433 = vld [vmem:[#allocation8 + $0xbe8] sm:$0xff]
        %v1434 = vld [vmem:[#allocation8 + $0xbf0] sm:$0xff]
        %v1435 = vld [vmem:[#allocation8 + $0xbf8] sm:$0xff]
        %v1436 = vld [vmem:[#allocation8 + $0xc00] sm:$0xff]
        %v1437 = vld [vmem:[#allocation8 + $0xc08] sm:$0xff]
        %v1438 = vld [vmem:[#allocation8 + $0xc10] sm:$0xff]
        %v1439 = vld [vmem:[#allocation8 + $0xc18] sm:$0xff]
        %v1440 = vld [vmem:[#allocation8 + $0xc20] sm:$0xff]
        %v1441 = vld [vmem:[#allocation8 + $0xc28] sm:$0xff]
        %v1442 = vld [vmem:[#allocation8 + $0xc30] sm:$0xff]
        %v1443 = vld [vmem:[#allocation8 + $0xc38] sm:$0xff]
        %v1444 = vld [vmem:[#allocation8 + $0xc40] sm:$0xff]
        %v1445 = vld [vmem:[#allocation8 + $0xc48] sm:$0xff]
        %v1446 = vld [vmem:[#allocation8 + $0xc50] sm:$0xff]
        %v1447 = vld [vmem:[#allocation8 + $0xc58] sm:$0xff]
        %v1448 = vld [vmem:[#allocation8 + $0xc60] sm:$0xff]
        %v1449 = vld [vmem:[#allocation8 + $0xc68] sm:$0xff]
        %v1450 = vld [vmem:[#allocation8 + $0xc70] sm:$0xff]
        %v1451 = vld [vmem:[#allocation8 + $0xc78] sm:$0xff]
        %v1452 = vld [vmem:[#allocation8 + $0xc80] sm:$0xff]
        %v1453 = vld [vmem:[#allocation8 + $0xc88] sm:$0xff]
        %v1454 = vld [vmem:[#allocation8 + $0xc90] sm:$0xff]
        %v1455 = vld [vmem:[#allocation8 + $0xc98] sm:$0xff]
        %v1456 = vld [vmem:[#allocation8 + $0xca0] sm:$0xff]
        %v1457 = vld [vmem:[#allocation8 + $0xca8] sm:$0xff]
        %v1458 = vld [vmem:[#allocation8 + $0xcb0] sm:$0xff]
        %v1459 = vld [vmem:[#allocation8 + $0xcb8] sm:$0xff]
        %v1460 = vld [vmem:[#allocation8 + $0xcc0] sm:$0xff]
        %v1461 = vld [vmem:[#allocation8 + $0xcc8] sm:$0xff]
        %v1462 = vld [vmem:[#allocation8 + $0xcd0] sm:$0xff]
        %v1463 = vld [vmem:[#allocation8 + $0xcd8] sm:$0xff]
        %v1464 = vld [vmem:[#allocation8 + $0xce0] sm:$0xff]
        %v1465 = vld [vmem:[#allocation8 + $0xce8] sm:$0xff]
        %v1466 = vld [vmem:[#allocation8 + $0xcf0] sm:$0xff]
        %v1467 = vld [vmem:[#allocation8 + $0xcf8] sm:$0xff]
        %v1468 = vld [vmem:[#allocation8 + $0xd00] sm:$0xff]
        %v1469 = vld [vmem:[#allocation8 + $0xd08] sm:$0xff]
        %v1470 = vld [vmem:[#allocation8 + $0xd10] sm:$0xff]
        %v1471 = vld [vmem:[#allocation8 + $0xd18] sm:$0xff]
        %v1472 = vld [vmem:[#allocation8 + $0xd20] sm:$0xff]
        %v1473 = vld [vmem:[#allocation8 + $0xd28] sm:$0xff]
        %v1474 = vld [vmem:[#allocation8 + $0xd30] sm:$0xff]
        %v1475 = vld [vmem:[#allocation8 + $0xd38] sm:$0xff]
        %v1476 = vld [vmem:[#allocation8 + $0xd40] sm:$0xff]
        %v1477 = vld [vmem:[#allocation8 + $0xd48] sm:$0xff]
        %v1478 = vld [vmem:[#allocation8 + $0xd50] sm:$0xff]
        %v1479 = vld [vmem:[#allocation8 + $0xd58] sm:$0xff]
        %v1480 = vld [vmem:[#allocation8 + $0xd60] sm:$0xff]
        %v1481 = vld [vmem:[#allocation8 + $0xd68] sm:$0xff]
        %v1482 = vld [vmem:[#allocation8 + $0xd70] sm:$0xff]
        %v1483 = vld [vmem:[#allocation8 + $0xd78] sm:$0xff]
        %v1484 = vld [vmem:[#allocation8 + $0xd80] sm:$0xff]
        %v1485 = vld [vmem:[#allocation8 + $0xd88] sm:$0xff]
        %v1486 = vld [vmem:[#allocation8 + $0xd90] sm:$0xff]
        %v1487 = vld [vmem:[#allocation8 + $0xd98] sm:$0xff]
        %v1488 = vld [vmem:[#allocation8 + $0xda0] sm:$0xff]
        %v1489 = vld [vmem:[#allocation8 + $0xda8] sm:$0xff]
        %v1490 = vld [vmem:[#allocation8 + $0xdb0] sm:$0xff]
        %v1491 = vld [vmem:[#allocation8 + $0xdb8] sm:$0xff]
        %v1492 = vld [vmem:[#allocation8 + $0xdc0] sm:$0xff]
        %v1493 = vld [vmem:[#allocation8 + $0xdc8] sm:$0xff]
        %v1494 = vld [vmem:[#allocation8 + $0xdd0] sm:$0xff]
        %v1495 = vld [vmem:[#allocation8 + $0xdd8] sm:$0xff]
        %v1496 = vld [vmem:[#allocation8 + $0xde0] sm:$0xff]
        %v1497 = vld [vmem:[#allocation8 + $0xde8] sm:$0xff]
        %v1498 = vld [vmem:[#allocation8 + $0xdf0] sm:$0xff]
        %v1499 = vld [vmem:[#allocation8 + $0xdf8] sm:$0xff]
        %v1500 = vld [vmem:[#allocation8 + $0xe00] sm:$0xff]
        %v1501 = vld [vmem:[#allocation8 + $0xe08] sm:$0xff]
        %v1502 = vld [vmem:[#allocation8 + $0xe10] sm:$0xff]
        %v1503 = vld [vmem:[#allocation8 + $0xe18] sm:$0xff]
        %v1504 = vld [vmem:[#allocation8 + $0xe20] sm:$0xff]
        %v1505 = vld [vmem:[#allocation8 + $0xe28] sm:$0xff]
        %v1506 = vld [vmem:[#allocation8 + $0xe30] sm:$0xff]
        %v1507 = vld [vmem:[#allocation8 + $0xe38] sm:$0xff]
        %v1508 = vld [vmem:[#allocation8 + $0xe40] sm:$0xff]
        %v1509 = vld [vmem:[#allocation8 + $0xe48] sm:$0xff]
        %v1510 = vld [vmem:[#allocation8 + $0xe50] sm:$0xff]
        %v1511 = vld [vmem:[#allocation8 + $0xe58] sm:$0xff]
        %v1512 = vld [vmem:[#allocation8 + $0xe60] sm:$0xff]
        %v1513 = vld [vmem:[#allocation8 + $0xe68] sm:$0xff]
        %v1514 = vld [vmem:[#allocation8 + $0xe70] sm:$0xff]
        %v1515 = vld [vmem:[#allocation8 + $0xe78] sm:$0xff]
        %v1516 = vld [vmem:[#allocation8 + $0xe80] sm:$0xff]
        %v1517 = vld [vmem:[#allocation8 + $0xe88] sm:$0xff]
        %v1518 = vld [vmem:[#allocation8 + $0xe90] sm:$0xff]
        %v1519 = vld [vmem:[#allocation8 + $0xe98] sm:$0xff]
        %v1520 = vld [vmem:[#allocation8 + $0xea0] sm:$0xff]
        %v1521 = vld [vmem:[#allocation8 + $0xea8] sm:$0xff]
        %v1522 = vld [vmem:[#allocation8 + $0xeb0] sm:$0xff]
        %v1523 = vld [vmem:[#allocation8 + $0xeb8] sm:$0xff]
        %v1524 = vld [vmem:[#allocation8 + $0xec0] sm:$0xff]
        %v1525 = vld [vmem:[#allocation8 + $0xec8] sm:$0xff]
        %v1526 = vld [vmem:[#allocation8 + $0xed0] sm:$0xff]
        %v1527 = vld [vmem:[#allocation8 + $0xed8] sm:$0xff]
        %v1528 = vld [vmem:[#allocation8 + $0xee0] sm:$0xff]
        %v1529 = vld [vmem:[#allocation8 + $0xee8] sm:$0xff]
        %v1530 = vld [vmem:[#allocation8 + $0xef0] sm:$0xff]
        %v1531 = vld [vmem:[#allocation8 + $0xef8] sm:$0xff]
        %v1532 = vld [vmem:[#allocation8 + $0xf00] sm:$0xff]
        %v1533 = vld [vmem:[#allocation8 + $0xf08] sm:$0xff]
        %v1534 = vld [vmem:[#allocation8 + $0xf10] sm:$0xff]
        %v1535 = vld [vmem:[#allocation8 + $0xf18] sm:$0xff]
        %v1536 = vld [vmem:[#allocation8 + $0xf20] sm:$0xff]
        %v1537 = vld [vmem:[#allocation8 + $0xf28] sm:$0xff]
        %v1538 = vld [vmem:[#allocation8 + $0xf30] sm:$0xff]
        %v1539 = vld [vmem:[#allocation8 + $0xf38] sm:$0xff]
        %v1540 = vld [vmem:[#allocation8 + $0xf40] sm:$0xff]
        %v1541 = vld [vmem:[#allocation8 + $0xf48] sm:$0xff]
        %v1542 = vld [vmem:[#allocation8 + $0xf50] sm:$0xff]
        %v1543 = vld [vmem:[#allocation8 + $0xf58] sm:$0xff]
        %v1544 = vld [vmem:[#allocation8 + $0xf60] sm:$0xff]
        %v1545 = vld [vmem:[#allocation8 + $0xf68] sm:$0xff]
        %v1546 = vld [vmem:[#allocation8 + $0xf70] sm:$0xff]
        %v1547 = vld [vmem:[#allocation8 + $0xf78] sm:$0xff]
        %v1548 = vld [vmem:[#allocation8 + $0xf80] sm:$0xff]
        %v1549 = vld [vmem:[#allocation8 + $0xf88] sm:$0xff]
        %v1550 = vld [vmem:[#allocation8 + $0xf90] sm:$0xff]
        %v1551 = vld [vmem:[#allocation8 + $0xf98] sm:$0xff]
        %v1552 = vld [vmem:[#allocation8 + $0xfa0] sm:$0xff]
        %v1553 = vld [vmem:[#allocation8 + $0xfa8] sm:$0xff]
        %v1554 = vld [vmem:[#allocation8 + $0xfb0] sm:$0xff]
        %v1555 = vld [vmem:[#allocation8 + $0xfb8] sm:$0xff]
        %v1556 = vld [vmem:[#allocation8 + $0xfc0] sm:$0xff]
        %v1557 = vld [vmem:[#allocation8 + $0xfc8] sm:$0xff]
        %v1558 = vld [vmem:[#allocation8 + $0xfd0] sm:$0xff]
        %v1559 = vld [vmem:[#allocation8 + $0xfd8] sm:$0xff]
        %v1560 = vld [vmem:[#allocation8 + $0xfe0] sm:$0xff]
        %v1561 = vld [vmem:[#allocation8 + $0xfe8] sm:$0xff]
        %v1562 = vld [vmem:[#allocation8 + $0xff0] sm:$0xff]
        %v1563 = vld [vmem:[#allocation8 + $0xff8] sm:$0xff]
        %v1564 = vld [vmem:[#allocation8 + $0x1000] sm:$0xff]
        %v1565 = vld [vmem:[#allocation8 + $0x1008] sm:$0xff]
        %v1566 = vld [vmem:[#allocation8 + $0x1010] sm:$0xff]
        %v1567 = vld [vmem:[#allocation8 + $0x1018] sm:$0xff]
        %v1568 = vld [vmem:[#allocation8 + $0x1020] sm:$0xff]
        %v1569 = vld [vmem:[#allocation8 + $0x1028] sm:$0xff]
        %v1570 = vld [vmem:[#allocation8 + $0x1030] sm:$0xff]
        %v1571 = vld [vmem:[#allocation8 + $0x1038] sm:$0xff]
        %v1572 = vld [vmem:[#allocation8 + $0x1040] sm:$0xff]
        %v1573 = vld [vmem:[#allocation8 + $0x1048] sm:$0xff]
        %v1574 = vld [vmem:[#allocation8 + $0x1050] sm:$0xff]
        %v1575 = vld [vmem:[#allocation8 + $0x1058] sm:$0xff]
        %v1576 = vld [vmem:[#allocation8 + $0x1060] sm:$0xff]
        %v1577 = vld [vmem:[#allocation8 + $0x1068] sm:$0xff]
        %v1578 = vld [vmem:[#allocation8 + $0x1070] sm:$0xff]
        %v1579 = vld [vmem:[#allocation8 + $0x1078] sm:$0xff]
        %v1580 = vld [vmem:[#allocation8 + $0x1080] sm:$0xff]
        %v1581 = vld [vmem:[#allocation8 + $0x1088] sm:$0xff]
        %v1582 = vld [vmem:[#allocation8 + $0x1090] sm:$0xff]
        %v1583 = vld [vmem:[#allocation8 + $0x1098] sm:$0xff]
        %v1584 = vld [vmem:[#allocation8 + $0x10a0] sm:$0xff]
        %v1585 = vld [vmem:[#allocation8 + $0x10a8] sm:$0xff]
        %v1586 = vld [vmem:[#allocation8 + $0x10b0] sm:$0xff]
        %v1587 = vld [vmem:[#allocation8 + $0x10b8] sm:$0xff]
        %v1588 = vld [vmem:[#allocation8 + $0x10c0] sm:$0xff]
        %v1589 = vld [vmem:[#allocation8 + $0x10c8] sm:$0xff]
        %v1590 = vld [vmem:[#allocation8 + $0x10d0] sm:$0xff]
        %v1591 = vld [vmem:[#allocation8 + $0x10d8] sm:$0xff]
        %v1592 = vld [vmem:[#allocation8 + $0x10e0] sm:$0xff]
        %v1593 = vld [vmem:[#allocation8 + $0x10e8] sm:$0xff]
        %v1594 = vld [vmem:[#allocation8 + $0x10f0] sm:$0xff]
        %v1595 = vld [vmem:[#allocation8 + $0x10f8] sm:$0xff]
        %v1596 = vld [vmem:[#allocation8 + $0x1100] sm:$0xff]
        %v1597 = vld [vmem:[#allocation8 + $0x1108] sm:$0xff]
        %v1598 = vld [vmem:[#allocation8 + $0x1110] sm:$0xff]
        %v1599 = vld [vmem:[#allocation8 + $0x1118] sm:$0xff]
        %v1600 = vld [vmem:[#allocation8 + $0x1120] sm:$0xff]
        %v1601 = vld [vmem:[#allocation8 + $0x1128] sm:$0xff]
        %v1602 = vld [vmem:[#allocation8 + $0x1130] sm:$0xff]
        %v1603 = vld [vmem:[#allocation8 + $0x1138] sm:$0xff]
        %v1604 = vld [vmem:[#allocation8 + $0x1140] sm:$0xff]
        %v1605 = vld [vmem:[#allocation8 + $0x1148] sm:$0xff]
        %v1606 = vld [vmem:[#allocation8 + $0x1150] sm:$0xff]
        %v1607 = vld [vmem:[#allocation8 + $0x1158] sm:$0xff]
        %v1608 = vld [vmem:[#allocation8 + $0x1160] sm:$0xff]
        %v1609 = vld [vmem:[#allocation8 + $0x1168] sm:$0xff]
        %v1610 = vld [vmem:[#allocation8 + $0x1170] sm:$0xff]
        %v1611 = vld [vmem:[#allocation8 + $0x1178] sm:$0xff]
        %v1612 = vld [vmem:[#allocation8 + $0x1180] sm:$0xff]
        %v1613 = vld [vmem:[#allocation8 + $0x1188] sm:$0xff]
        %v1614 = vld [vmem:[#allocation8 + $0x1190] sm:$0xff]
        %v1615 = vld [vmem:[#allocation8 + $0x1198] sm:$0xff]
        %v1616 = vld [vmem:[#allocation8 + $0x11a0] sm:$0xff]
        %v1617 = vld [vmem:[#allocation8 + $0x11a8] sm:$0xff]
        %v1618 = vld [vmem:[#allocation8 + $0x11b0] sm:$0xff]
        %v1619 = vld [vmem:[#allocation8 + $0x11b8] sm:$0xff]
        %v1620 = vld [vmem:[#allocation8 + $0x11c0] sm:$0xff]
        %v1621 = vld [vmem:[#allocation8 + $0x11c8] sm:$0xff]
        %v1622 = vld [vmem:[#allocation8 + $0x11d0] sm:$0xff]
        %v1623 = vld [vmem:[#allocation8 + $0x11d8] sm:$0xff]
        %v1624 = vld [vmem:[#allocation8 + $0x11e0] sm:$0xff]
        %v1625 = vld [vmem:[#allocation8 + $0x11e8] sm:$0xff]
        %v1626 = vld [vmem:[#allocation8 + $0x11f0] sm:$0xff]
        %v1627 = vld [vmem:[#allocation8 + $0x11f8] sm:$0xff]
        %v1628 = vld [vmem:[#allocation8 + $0x1200] sm:$0xff]
        %v1629 = vld [vmem:[#allocation8 + $0x1208] sm:$0xff]
        %v1630 = vld [vmem:[#allocation8 + $0x1210] sm:$0xff]
        %v1631 = vld [vmem:[#allocation8 + $0x1218] sm:$0xff]
        %v1632 = vld [vmem:[#allocation8 + $0x1220] sm:$0xff]
        %v1633 = vld [vmem:[#allocation8 + $0x1228] sm:$0xff]
        %v1634 = vld [vmem:[#allocation8 + $0x1230] sm:$0xff]
        %v1635 = vld [vmem:[#allocation8 + $0x1238] sm:$0xff]
        %v1636 = vld [vmem:[#allocation8 + $0x1240] sm:$0xff]
        %v1637 = vld [vmem:[#allocation8 + $0x1248] sm:$0xff]
        %v1638 = vld [vmem:[#allocation8 + $0x1250] sm:$0xff]
        %v1639 = vld [vmem:[#allocation8 + $0x1258] sm:$0xff]
        %v1640 = vld [vmem:[#allocation8 + $0x1260] sm:$0xff]
        %v1641 = vld [vmem:[#allocation8 + $0x1268] sm:$0xff]
        %v1642 = vld [vmem:[#allocation8 + $0x1270] sm:$0xff]
        %v1643 = vld [vmem:[#allocation8 + $0x1278] sm:$0xff]
        %v1644 = vld [vmem:[#allocation8 + $0x1280] sm:$0xff]
        %v1645 = vld [vmem:[#allocation8 + $0x1288] sm:$0xff]
        %v1646 = vld [vmem:[#allocation8 + $0x1290] sm:$0xff]
        %v1647 = vld [vmem:[#allocation8 + $0x1298] sm:$0xff]
        %v1648 = vld [vmem:[#allocation8 + $0x12a0] sm:$0xff]
        %v1649 = vld [vmem:[#allocation8 + $0x12a8] sm:$0xff]
        %v1650 = vld [vmem:[#allocation8 + $0x12b0] sm:$0xff]
        %v1651 = vld [vmem:[#allocation8 + $0x12b8] sm:$0xff]
        %v1652 = vld [vmem:[#allocation8 + $0x12c0] sm:$0xff]
        %v1653 = vld [vmem:[#allocation8 + $0x12c8] sm:$0xff]
        %v1654 = vld [vmem:[#allocation8 + $0x12d0] sm:$0xff]
        %v1655 = vld [vmem:[#allocation8 + $0x12d8] sm:$0xff]
        %v1656 = vld [vmem:[#allocation8 + $0x12e0] sm:$0xff]
        %v1657 = vld [vmem:[#allocation8 + $0x12e8] sm:$0xff]
        %v1658 = vld [vmem:[#allocation8 + $0x12f0] sm:$0xff]
        %v1659 = vld [vmem:[#allocation8 + $0x12f8] sm:$0xff]
        %v1660 = vld [vmem:[#allocation8 + $0x1300] sm:$0xff]
        %v1661 = vld [vmem:[#allocation8 + $0x1308] sm:$0xff]
        %v1662 = vld [vmem:[#allocation8 + $0x1310] sm:$0xff]
        %v1663 = vld [vmem:[#allocation8 + $0x1318] sm:$0xff]
        %v1664 = vld [vmem:[#allocation8 + $0x1320] sm:$0xff]
        %v1665 = vld [vmem:[#allocation8 + $0x1328] sm:$0xff]
        %v1666 = vld [vmem:[#allocation8 + $0x1330] sm:$0xff]
        %v1667 = vld [vmem:[#allocation8 + $0x1338] sm:$0xff]
        %v1668 = vld [vmem:[#allocation8 + $0x1340] sm:$0xff]
        %v1669 = vld [vmem:[#allocation8 + $0x1348] sm:$0xff]
        %v1670 = vld [vmem:[#allocation8 + $0x1350] sm:$0xff]
        %v1671 = vld [vmem:[#allocation8 + $0x1358] sm:$0xff]
        %v1672 = vld [vmem:[#allocation8 + $0x1360] sm:$0xff]
        %v1673 = vld [vmem:[#allocation8 + $0x1368] sm:$0xff]
        %v1674 = vld [vmem:[#allocation8 + $0x1370] sm:$0xff]
        %v1675 = vld [vmem:[#allocation8 + $0x1378] sm:$0xff]
        %v1676 = vld [vmem:[#allocation8 + $0x1380] sm:$0xff]
        %v1677 = vld [vmem:[#allocation8 + $0x1388] sm:$0xff]
        %v1678 = vld [vmem:[#allocation8 + $0x1390] sm:$0xff]
        %v1679 = vld [vmem:[#allocation8 + $0x1398] sm:$0xff]
        %v1680 = vld [vmem:[#allocation8 + $0x13a0] sm:$0xff]
        %v1681 = vld [vmem:[#allocation8 + $0x13a8] sm:$0xff]
        %v1682 = vld [vmem:[#allocation8 + $0x13b0] sm:$0xff]
        %v1683 = vld [vmem:[#allocation8 + $0x13b8] sm:$0xff]
        %v1684 = vld [vmem:[#allocation8 + $0x13c0] sm:$0xff]
        %v1685 = vld [vmem:[#allocation8 + $0x13c8] sm:$0xff]
        %v1686 = vld [vmem:[#allocation8 + $0x13d0] sm:$0xff]
        %v1687 = vld [vmem:[#allocation8 + $0x13d8] sm:$0xff]
        %v1688 = vld [vmem:[#allocation8 + $0x13e0] sm:$0xff]
        %v1689 = vld [vmem:[#allocation8 + $0x13e8] sm:$0xff]
        %v1690 = vld [vmem:[#allocation8 + $0x13f0] sm:$0xff]
        %v1691 = vld [vmem:[#allocation8 + $0x13f8] sm:$0xff]
        %v1692 = vld [vmem:[#allocation8 + $0x1400] sm:$0xff]
        %v1693 = vld [vmem:[#allocation8 + $0x1408] sm:$0xff]
        %v1694 = vld [vmem:[#allocation8 + $0x1410] sm:$0xff]
        %v1695 = vld [vmem:[#allocation8 + $0x1418] sm:$0xff]
        %v1696 = vld [vmem:[#allocation8 + $0x1420] sm:$0xff]
        %v1697 = vld [vmem:[#allocation8 + $0x1428] sm:$0xff]
        %v1698 = vld [vmem:[#allocation8 + $0x1430] sm:$0xff]
        %v1699 = vld [vmem:[#allocation8 + $0x1438] sm:$0xff]
        %v1700 = vld [vmem:[#allocation8 + $0x1440] sm:$0xff]
        %v1701 = vld [vmem:[#allocation8 + $0x1448] sm:$0xff]
        %v1702 = vld [vmem:[#allocation8 + $0x1450] sm:$0xff]
        %v1703 = vld [vmem:[#allocation8 + $0x1458] sm:$0xff]
        %v1704 = vld [vmem:[#allocation8 + $0x1460] sm:$0xff]
        %v1705 = vld [vmem:[#allocation8 + $0x1468] sm:$0xff]
        %v1706 = vld [vmem:[#allocation8 + $0x1470] sm:$0xff]
        %v1707 = vld [vmem:[#allocation8 + $0x1478] sm:$0xff]
        %v1708 = vld [vmem:[#allocation8 + $0x1480] sm:$0xff]
        %v1709 = vld [vmem:[#allocation8 + $0x1488] sm:$0xff]
        %v1710 = vld [vmem:[#allocation8 + $0x1490] sm:$0xff]
        %v1711 = vld [vmem:[#allocation8 + $0x1498] sm:$0xff]
        %v1712 = vld [vmem:[#allocation8 + $0x14a0] sm:$0xff]
        %v1713 = vld [vmem:[#allocation8 + $0x14a8] sm:$0xff]
        %v1714 = vld [vmem:[#allocation8 + $0x14b0] sm:$0xff]
        %v1715 = vld [vmem:[#allocation8 + $0x14b8] sm:$0xff]
        %v1716 = vld [vmem:[#allocation8 + $0x14c0] sm:$0xff]
        %v1717 = vld [vmem:[#allocation8 + $0x14c8] sm:$0xff]
        %v1718 = vld [vmem:[#allocation8 + $0x14d0] sm:$0xff]
        %v1719 = vld [vmem:[#allocation8 + $0x14d8] sm:$0xff]
        %v1720 = vld [vmem:[#allocation8 + $0x14e0] sm:$0xff]
        %v1721 = vld [vmem:[#allocation8 + $0x14e8] sm:$0xff]
        %v1722 = vld [vmem:[#allocation8 + $0x14f0] sm:$0xff]
        %v1723 = vld [vmem:[#allocation8 + $0x14f8] sm:$0xff]
        %v1724 = vld [vmem:[#allocation8 + $0x1500] sm:$0xff]
        %v1725 = vld [vmem:[#allocation8 + $0x1508] sm:$0xff]
        %v1726 = vld [vmem:[#allocation8 + $0x1510] sm:$0xff]
        %v1727 = vld [vmem:[#allocation8 + $0x1518] sm:$0xff]
        %v1728 = vld [vmem:[#allocation8 + $0x1520] sm:$0xff]
        %v1729 = vld [vmem:[#allocation8 + $0x1528] sm:$0xff]
        %v1730 = vld [vmem:[#allocation8 + $0x1530] sm:$0xff]
        %v1731 = vld [vmem:[#allocation8 + $0x1538] sm:$0xff]
        %v1732 = vld [vmem:[#allocation8 + $0x1540] sm:$0xff]
        %v1733 = vld [vmem:[#allocation8 + $0x1548] sm:$0xff]
        %v1734 = vld [vmem:[#allocation8 + $0x1550] sm:$0xff]
        %v1735 = vld [vmem:[#allocation8 + $0x1558] sm:$0xff]
        %v1736 = vld [vmem:[#allocation8 + $0x1560] sm:$0xff]
        %v1737 = vld [vmem:[#allocation8 + $0x1568] sm:$0xff]
        %v1738 = vld [vmem:[#allocation8 + $0x1570] sm:$0xff]
        %v1739 = vld [vmem:[#allocation8 + $0x1578] sm:$0xff]
        %v1740 = vld [vmem:[#allocation8 + $0x1580] sm:$0xff]
        %v1741 = vld [vmem:[#allocation8 + $0x1588] sm:$0xff]
        %v1742 = vld [vmem:[#allocation8 + $0x1590] sm:$0xff]
        %v1743 = vld [vmem:[#allocation8 + $0x1598] sm:$0xff]
        %v1744 = vld [vmem:[#allocation8 + $0x15a0] sm:$0xff]
        %v1745 = vld [vmem:[#allocation8 + $0x15a8] sm:$0xff]
        %v1746 = vld [vmem:[#allocation8 + $0x15b0] sm:$0xff]
        %v1747 = vld [vmem:[#allocation8 + $0x15b8] sm:$0xff]
        %v1748 = vld [vmem:[#allocation8 + $0x15c0] sm:$0xff]
        %v1749 = vld [vmem:[#allocation8 + $0x15c8] sm:$0xff]
        %v1750 = vld [vmem:[#allocation8 + $0x15d0] sm:$0xff]
        %v1751 = vld [vmem:[#allocation8 + $0x15d8] sm:$0xff]
        %v1752 = vld [vmem:[#allocation8 + $0x15e0] sm:$0xff]
        %v1753 = vld [vmem:[#allocation8 + $0x15e8] sm:$0xff]
        %v1754 = vld [vmem:[#allocation8 + $0x15f0] sm:$0xff]
        %v1755 = vld [vmem:[#allocation8 + $0x15f8] sm:$0xff]
        %v1756 = vld [vmem:[#allocation8 + $0x1600] sm:$0xff]
        %v1757 = vld [vmem:[#allocation8 + $0x1608] sm:$0xff]
        %v1758 = vld [vmem:[#allocation8 + $0x1610] sm:$0xff]
        %v1759 = vld [vmem:[#allocation8 + $0x1618] sm:$0xff]
        %v1760 = vld [vmem:[#allocation8 + $0x1620] sm:$0xff]
        %v1761 = vld [vmem:[#allocation8 + $0x1628] sm:$0xff]
        %v1762 = vld [vmem:[#allocation8 + $0x1630] sm:$0xff]
        %v1763 = vld [vmem:[#allocation8 + $0x1638] sm:$0xff]
        %v1764 = vld [vmem:[#allocation8 + $0x1640] sm:$0xff]
        %v1765 = vld [vmem:[#allocation8 + $0x1648] sm:$0xff]
        %v1766 = vld [vmem:[#allocation8 + $0x1650] sm:$0xff]
        %v1767 = vld [vmem:[#allocation8 + $0x1658] sm:$0xff]
        %v1768 = vld [vmem:[#allocation8 + $0x1660] sm:$0xff]
        %v1769 = vld [vmem:[#allocation8 + $0x1668] sm:$0xff]
        %v1770 = vld [vmem:[#allocation8 + $0x1670] sm:$0xff]
        %v1771 = vld [vmem:[#allocation8 + $0x1678] sm:$0xff]
        %v1772 = vld [vmem:[#allocation8 + $0x1680] sm:$0xff]
        %v1773 = vld [vmem:[#allocation8 + $0x1688] sm:$0xff]
        %v1774 = vld [vmem:[#allocation8 + $0x1690] sm:$0xff]
        %v1775 = vld [vmem:[#allocation8 + $0x1698] sm:$0xff]
        %v1776 = vld [vmem:[#allocation8 + $0x16a0] sm:$0xff]
        %v1777 = vld [vmem:[#allocation8 + $0x16a8] sm:$0xff]
        %v1778 = vld [vmem:[#allocation8 + $0x16b0] sm:$0xff]
        %v1779 = vld [vmem:[#allocation8 + $0x16b8] sm:$0xff]
        %v1780 = vld [vmem:[#allocation8 + $0x16c0] sm:$0xff]
        %v1781 = vld [vmem:[#allocation8 + $0x16c8] sm:$0xff]
        %v1782 = vld [vmem:[#allocation8 + $0x16d0] sm:$0xff]
        %v1783 = vld [vmem:[#allocation8 + $0x16d8] sm:$0xff]
        %v1784 = vld [vmem:[#allocation8 + $0x16e0] sm:$0xff]
        %v1785 = vld [vmem:[#allocation8 + $0x16e8] sm:$0xff]
        %v1786 = vld [vmem:[#allocation8 + $0x16f0] sm:$0xff]
        %v1787 = vld [vmem:[#allocation8 + $0x16f8] sm:$0xff]
        %v1788 = vld [vmem:[#allocation8 + $0x1700] sm:$0xff]
        %v1789 = vld [vmem:[#allocation8 + $0x1708] sm:$0xff]
        %v1790 = vld [vmem:[#allocation8 + $0x1710] sm:$0xff]
        %v1791 = vld [vmem:[#allocation8 + $0x1718] sm:$0xff]
        %v1792 = vld [vmem:[#allocation8 + $0x1720] sm:$0xff]
        %v1793 = vld [vmem:[#allocation8 + $0x1728] sm:$0xff]
        %v1794 = vld [vmem:[#allocation8 + $0x1730] sm:$0xff]
        %v1795 = vld [vmem:[#allocation8 + $0x1738] sm:$0xff]
        %v1796 = vld [vmem:[#allocation8 + $0x1740] sm:$0xff]
        %v1797 = vld [vmem:[#allocation8 + $0x1748] sm:$0xff]
        %v1798 = vld [vmem:[#allocation8 + $0x1750] sm:$0xff]
        %v1799 = vld [vmem:[#allocation8 + $0x1758] sm:$0xff]
        %v1800 = vld [vmem:[#allocation8 + $0x1760] sm:$0xff]
        %v1801 = vld [vmem:[#allocation8 + $0x1768] sm:$0xff]
        %v1802 = vld [vmem:[#allocation8 + $0x1770] sm:$0xff]
        %v1803 = vld [vmem:[#allocation8 + $0x1778] sm:$0xff]
        %v1804 = vld [vmem:[#allocation8 + $0x1780] sm:$0xff]
        %v1805 = vld [vmem:[#allocation8 + $0x1788] sm:$0xff]
        %v1806 = vld [vmem:[#allocation8 + $0x1790] sm:$0xff]
        %v1807 = vld [vmem:[#allocation8 + $0x1798] sm:$0xff]
        %v1808 = vld [vmem:[#allocation8 + $0x17a0] sm:$0xff]
        %v1809 = vld [vmem:[#allocation8 + $0x17a8] sm:$0xff]
        %v1810 = vld [vmem:[#allocation8 + $0x17b0] sm:$0xff]
        %v1811 = vld [vmem:[#allocation8 + $0x17b8] sm:$0xff]
        %v1812 = vld [vmem:[#allocation8 + $0x17c0] sm:$0xff]
        %v1813 = vld [vmem:[#allocation8 + $0x17c8] sm:$0xff]
        %v1814 = vld [vmem:[#allocation8 + $0x17d0] sm:$0xff]
        %v1815 = vld [vmem:[#allocation8 + $0x17d8] sm:$0xff]
        %v1816 = vld [vmem:[#allocation8 + $0x17e0] sm:$0xff]
        %v1817 = vld [vmem:[#allocation8 + $0x17e8] sm:$0xff]
        %v1818 = vld [vmem:[#allocation8 + $0x17f0] sm:$0xff]
        %v1819 = vld [vmem:[#allocation8 + $0x17f8] sm:$0xff]
        %v1820 = vld [vmem:[#allocation8 + $0x1800] sm:$0xff]
        %v1821 = vld [vmem:[#allocation8 + $0x1808] sm:$0xff]
        %v1822 = vld [vmem:[#allocation8 + $0x1810] sm:$0xff]
        %v1823 = vld [vmem:[#allocation8 + $0x1818] sm:$0xff]
        %v1824 = vld [vmem:[#allocation8 + $0x1820] sm:$0xff]
        %v1825 = vld [vmem:[#allocation8 + $0x1828] sm:$0xff]
        %v1826 = vld [vmem:[#allocation8 + $0x1830] sm:$0xff]
        %v1827 = vld [vmem:[#allocation8 + $0x1838] sm:$0xff]
        %v1828 = vld [vmem:[#allocation8 + $0x1840] sm:$0xff]
        %v1829 = vld [vmem:[#allocation8 + $0x1848] sm:$0xff]
        %v1830 = vld [vmem:[#allocation8 + $0x1850] sm:$0xff]
        %v1831 = vld [vmem:[#allocation8 + $0x1858] sm:$0xff]
        %v1832 = vld [vmem:[#allocation8 + $0x1860] sm:$0xff]
        %v1833 = vld [vmem:[#allocation8 + $0x1868] sm:$0xff]
        %v1834 = vld [vmem:[#allocation8 + $0x1870] sm:$0xff]
        %v1835 = vld [vmem:[#allocation8 + $0x1878] sm:$0xff]
        %v1836 = vld [vmem:[#allocation8 + $0x1880] sm:$0xff]
        %v1837 = vld [vmem:[#allocation8 + $0x1888] sm:$0xff]
        %v1838 = vld [vmem:[#allocation8 + $0x1890] sm:$0xff]
        %v1839 = vld [vmem:[#allocation8 + $0x1898] sm:$0xff]
        %v1840 = vld [vmem:[#allocation8 + $0x18a0] sm:$0xff]
        %v1841 = vld [vmem:[#allocation8 + $0x18a8] sm:$0xff]
        %v1842 = vld [vmem:[#allocation8 + $0x18b0] sm:$0xff]
        %v1843 = vld [vmem:[#allocation8 + $0x18b8] sm:$0xff]
        %v1844 = vld [vmem:[#allocation8 + $0x18c0] sm:$0xff]
        %v1845 = vld [vmem:[#allocation8 + $0x18c8] sm:$0xff]
        %v1846 = vld [vmem:[#allocation8 + $0x18d0] sm:$0xff]
        %v1847 = vld [vmem:[#allocation8 + $0x18d8] sm:$0xff]
        %v1848 = vld [vmem:[#allocation8 + $0x18e0] sm:$0xff]
        %v1849 = vld [vmem:[#allocation8 + $0x18e8] sm:$0xff]
        %v1850 = vld [vmem:[#allocation8 + $0x18f0] sm:$0xff]
        %v1851 = vld [vmem:[#allocation8 + $0x18f8] sm:$0xff]
        %v1852 = vld [vmem:[#allocation8 + $0x1900] sm:$0xff]
        %v1853 = vld [vmem:[#allocation8 + $0x1908] sm:$0xff]
        %v1854 = vld [vmem:[#allocation8 + $0x1910] sm:$0xff]
        %v1855 = vld [vmem:[#allocation8 + $0x1918] sm:$0xff]
        %v1856 = vld [vmem:[#allocation8 + $0x1920] sm:$0xff]
        %v1857 = vld [vmem:[#allocation8 + $0x1928] sm:$0xff]
        %v1858 = vld [vmem:[#allocation8 + $0x1930] sm:$0xff]
        %v1859 = vld [vmem:[#allocation8 + $0x1938] sm:$0xff]
        %v1860 = vld [vmem:[#allocation8 + $0x1940] sm:$0xff]
        %v1861 = vld [vmem:[#allocation8 + $0x1948] sm:$0xff]
        %v1862 = vld [vmem:[#allocation8 + $0x1950] sm:$0xff]
        %v1863 = vld [vmem:[#allocation8 + $0x1958] sm:$0xff]
        %v1864 = vld [vmem:[#allocation8 + $0x1960] sm:$0xff]
        %v1865 = vld [vmem:[#allocation8 + $0x1968] sm:$0xff]
        %v1866 = vld [vmem:[#allocation8 + $0x1970] sm:$0xff]
        %v1867 = vld [vmem:[#allocation8 + $0x1978] sm:$0xff]
        %v1868 = vld [vmem:[#allocation8 + $0x1980] sm:$0xff]
        %v1869 = vld [vmem:[#allocation8 + $0x1988] sm:$0xff]
        %v1870 = vld [vmem:[#allocation8 + $0x1990] sm:$0xff]
        %v1871 = vld [vmem:[#allocation8 + $0x1998] sm:$0xff]
        %v1872 = vld [vmem:[#allocation8 + $0x19a0] sm:$0xff]
        %v1873 = vld [vmem:[#allocation8 + $0x19a8] sm:$0xff]
        %v1874 = vld [vmem:[#allocation8 + $0x19b0] sm:$0xff]
        %v1875 = vld [vmem:[#allocation8 + $0x19b8] sm:$0xff]
        %v1876 = vld [vmem:[#allocation8 + $0x19c0] sm:$0xff]
        %v1877 = vld [vmem:[#allocation8 + $0x19c8] sm:$0xff]
        %v1878 = vld [vmem:[#allocation8 + $0x19d0] sm:$0xff]
        %v1879 = vld [vmem:[#allocation8 + $0x19d8] sm:$0xff]
        %v1880 = vld [vmem:[#allocation8 + $0x19e0] sm:$0xff]
        %v1881 = vld [vmem:[#allocation8 + $0x19e8] sm:$0xff]
        %v1882 = vld [vmem:[#allocation8 + $0x19f0] sm:$0xff]
        %v1883 = vld [vmem:[#allocation8 + $0x19f8] sm:$0xff]
        %v1884 = vld [vmem:[#allocation8 + $0x1a00] sm:$0xff]
        %v1885 = vld [vmem:[#allocation8 + $0x1a08] sm:$0xff]
        %v1886 = vld [vmem:[#allocation8 + $0x1a10] sm:$0xff]
        %v1887 = vld [vmem:[#allocation8 + $0x1a18] sm:$0xff]
        %v1888 = vld [vmem:[#allocation8 + $0x1a20] sm:$0xff]
        %v1889 = vld [vmem:[#allocation8 + $0x1a28] sm:$0xff]
        %v1890 = vld [vmem:[#allocation8 + $0x1a30] sm:$0xff]
        %v1891 = vld [vmem:[#allocation8 + $0x1a38] sm:$0xff]
        %v1892 = vld [vmem:[#allocation8 + $0x1a40] sm:$0xff]
        %v1893 = vld [vmem:[#allocation8 + $0x1a48] sm:$0xff]
        %v1894 = vld [vmem:[#allocation8 + $0x1a50] sm:$0xff]
        %v1895 = vld [vmem:[#allocation8 + $0x1a58] sm:$0xff]
        %v1896 = vld [vmem:[#allocation8 + $0x1a60] sm:$0xff]
        %v1897 = vld [vmem:[#allocation8 + $0x1a68] sm:$0xff]
        %v1898 = vld [vmem:[#allocation8 + $0x1a70] sm:$0xff]
        %v1899 = vld [vmem:[#allocation8 + $0x1a78] sm:$0xff]
        %v1900 = vld [vmem:[#allocation8 + $0x1a80] sm:$0xff]
        %v1901 = vld [vmem:[#allocation8 + $0x1a88] sm:$0xff]
        %v1902 = vld [vmem:[#allocation8 + $0x1a90] sm:$0xff]
        %v1903 = vld [vmem:[#allocation8 + $0x1a98] sm:$0xff]
        %v1904 = vld [vmem:[#allocation8 + $0x1aa0] sm:$0xff]
        %v1905 = vld [vmem:[#allocation8 + $0x1aa8] sm:$0xff]
        %v1906 = vld [vmem:[#allocation8 + $0x1ab0] sm:$0xff]
        %v1907 = vld [vmem:[#allocation8 + $0x1ab8] sm:$0xff]
        %v1908 = vld [vmem:[#allocation8 + $0x1ac0] sm:$0xff]
        %v1909 = vld [vmem:[#allocation8 + $0x1ac8] sm:$0xff]
        %v1910 = vld [vmem:[#allocation8 + $0x1ad0] sm:$0xff]
        %v1911 = vld [vmem:[#allocation8 + $0x1ad8] sm:$0xff]
        %v1912 = vld [vmem:[#allocation8 + $0x1ae0] sm:$0xff]
        %v1913 = vld [vmem:[#allocation8 + $0x1ae8] sm:$0xff]
        %v1914 = vld [vmem:[#allocation8 + $0x1af0] sm:$0xff]
        %v1915 = vld [vmem:[#allocation8 + $0x1af8] sm:$0xff]
        %v1916 = vld [vmem:[#allocation8 + $0x1b00] sm:$0xff]
        %v1917 = vld [vmem:[#allocation8 + $0x1b08] sm:$0xff]
        %v1918 = vld [vmem:[#allocation8 + $0x1b10] sm:$0xff]
        %v1919 = vld [vmem:[#allocation8 + $0x1b18] sm:$0xff]
        %v1920 = vld [vmem:[#allocation8 + $0x1b20] sm:$0xff]
        %v1921 = vld [vmem:[#allocation8 + $0x1b28] sm:$0xff]
        %v1922 = vld [vmem:[#allocation8 + $0x1b30] sm:$0xff]
        %v1923 = vld [vmem:[#allocation8 + $0x1b38] sm:$0xff]
        %v1924 = vld [vmem:[#allocation8 + $0x1b40] sm:$0xff]
        %v1925 = vld [vmem:[#allocation8 + $0x1b48] sm:$0xff]
        %v1926 = vld [vmem:[#allocation8 + $0x1b50] sm:$0xff]
        %v1927 = vld [vmem:[#allocation8 + $0x1b58] sm:$0xff]
        %v1928 = vld [vmem:[#allocation8 + $0x1b60] sm:$0xff]
        %v1929 = vld [vmem:[#allocation8 + $0x1b68] sm:$0xff]
        %v1930 = vld [vmem:[#allocation8 + $0x1b70] sm:$0xff]
        %v1931 = vld [vmem:[#allocation8 + $0x1b78] sm:$0xff]
        %v1932 = vld [vmem:[#allocation8 + $0x1b80] sm:$0xff]
        %v1933 = vld [vmem:[#allocation8 + $0x1b88] sm:$0xff]
        %v1934 = vld [vmem:[#allocation8 + $0x1b90] sm:$0xff]
        %v1935 = vld [vmem:[#allocation8 + $0x1b98] sm:$0xff]
        %v1936 = vld [vmem:[#allocation8 + $0x1ba0] sm:$0xff]
        %v1937 = vld [vmem:[#allocation8 + $0x1ba8] sm:$0xff]
        %v1938 = vld [vmem:[#allocation8 + $0x1bb0] sm:$0xff]
        %v1939 = vld [vmem:[#allocation8 + $0x1bb8] sm:$0xff]
        %v1940 = vld [vmem:[#allocation8 + $0x1bc0] sm:$0xff]
        %v1941 = vld [vmem:[#allocation8 + $0x1bc8] sm:$0xff]
        %v1942 = vld [vmem:[#allocation8 + $0x1bd0] sm:$0xff]
        %v1943 = vld [vmem:[#allocation8 + $0x1bd8] sm:$0xff]
        %v1944 = vld [vmem:[#allocation8 + $0x1be0] sm:$0xff]
        %v1945 = vld [vmem:[#allocation8 + $0x1be8] sm:$0xff]
        %v1946 = vld [vmem:[#allocation8 + $0x1bf0] sm:$0xff]
        %v1947 = vld [vmem:[#allocation8 + $0x1bf8] sm:$0xff]
        %v1948 = vld [vmem:[#allocation8 + $0x1c00] sm:$0xff]
        %v1949 = vld [vmem:[#allocation8 + $0x1c08] sm:$0xff]
        %v1950 = vld [vmem:[#allocation8 + $0x1c10] sm:$0xff]
        %v1951 = vld [vmem:[#allocation8 + $0x1c18] sm:$0xff]
        %v1952 = vld [vmem:[#allocation8 + $0x1c20] sm:$0xff]
        %v1953 = vld [vmem:[#allocation8 + $0x1c28] sm:$0xff]
        %v1954 = vld [vmem:[#allocation8 + $0x1c30] sm:$0xff]
        %v1955 = vld [vmem:[#allocation8 + $0x1c38] sm:$0xff]
        %v1956 = vld [vmem:[#allocation8 + $0x1c40] sm:$0xff]
        %v1957 = vld [vmem:[#allocation8 + $0x1c48] sm:$0xff]
        %v1958 = vld [vmem:[#allocation8 + $0x1c50] sm:$0xff]
        %v1959 = vld [vmem:[#allocation8 + $0x1c58] sm:$0xff]
        %v1960 = vld [vmem:[#allocation8 + $0x1c60] sm:$0xff]
        %v1961 = vld [vmem:[#allocation8 + $0x1c68] sm:$0xff]
        %v1962 = vld [vmem:[#allocation8 + $0x1c70] sm:$0xff]
        %v1963 = vld [vmem:[#allocation8 + $0x1c78] sm:$0xff]
        %v1964 = vld [vmem:[#allocation8 + $0x1c80] sm:$0xff]
        %v1965 = vld [vmem:[#allocation8 + $0x1c88] sm:$0xff]
        %v1966 = vld [vmem:[#allocation8 + $0x1c90] sm:$0xff]
        %v1967 = vld [vmem:[#allocation8 + $0x1c98] sm:$0xff]
        %v1968 = vld [vmem:[#allocation8 + $0x1ca0] sm:$0xff]
        %v1969 = vld [vmem:[#allocation8 + $0x1ca8] sm:$0xff]
        %v1970 = vld [vmem:[#allocation8 + $0x1cb0] sm:$0xff]
        %v1971 = vld [vmem:[#allocation8 + $0x1cb8] sm:$0xff]
        %v1972 = vld [vmem:[#allocation8 + $0x1cc0] sm:$0xff]
        %v1973 = vld [vmem:[#allocation8 + $0x1cc8] sm:$0xff]
        %v1974 = vld [vmem:[#allocation8 + $0x1cd0] sm:$0xff]
        %v1975 = vld [vmem:[#allocation8 + $0x1cd8] sm:$0xff]
        %v1976 = vld [vmem:[#allocation8 + $0x1ce0] sm:$0xff]
        %v1977 = vld [vmem:[#allocation8 + $0x1ce8] sm:$0xff]
        %v1978 = vld [vmem:[#allocation8 + $0x1cf0] sm:$0xff]
        %v1979 = vld [vmem:[#allocation8 + $0x1cf8] sm:$0xff]
        %v1980 = vld [vmem:[#allocation8 + $0x1d00] sm:$0xff]
        %v1981 = vld [vmem:[#allocation8 + $0x1d08] sm:$0xff]
        %v1982 = vld [vmem:[#allocation8 + $0x1d10] sm:$0xff]
        %v1983 = vld [vmem:[#allocation8 + $0x1d18] sm:$0xff]
        %v1984 = vld [vmem:[#allocation8 + $0x1d20] sm:$0xff]
        %v1985 = vld [vmem:[#allocation8 + $0x1d28] sm:$0xff]
        %v1986 = vld [vmem:[#allocation8 + $0x1d30] sm:$0xff]
        %v1987 = vld [vmem:[#allocation8 + $0x1d38] sm:$0xff]
        %v1988 = vld [vmem:[#allocation8 + $0x1d40] sm:$0xff]
        %v1989 = vld [vmem:[#allocation8 + $0x1d48] sm:$0xff]
        %v1990 = vld [vmem:[#allocation8 + $0x1d50] sm:$0xff]
        %v1991 = vld [vmem:[#allocation8 + $0x1d58] sm:$0xff]
        %v1992 = vld [vmem:[#allocation8 + $0x1d60] sm:$0xff]
        %v1993 = vld [vmem:[#allocation8 + $0x1d68] sm:$0xff]
        %v1994 = vld [vmem:[#allocation8 + $0x1d70] sm:$0xff]
        %v1995 = vld [vmem:[#allocation8 + $0x1d78] sm:$0xff]
        %v1996 = vld [vmem:[#allocation8 + $0x1d80] sm:$0xff]
        %v1997 = vld [vmem:[#allocation8 + $0x1d88] sm:$0xff]
        %v1998 = vld [vmem:[#allocation8 + $0x1d90] sm:$0xff]
        %v1999 = vld [vmem:[#allocation8 + $0x1d98] sm:$0xff]
        %v2000 = vld [vmem:[#allocation8 + $0x1da0] sm:$0xff]
        %v2001 = vld [vmem:[#allocation8 + $0x1da8] sm:$0xff]
        %v2002 = vld [vmem:[#allocation8 + $0x1db0] sm:$0xff]
        %v2003 = vld [vmem:[#allocation8 + $0x1db8] sm:$0xff]
        %v2004 = vld [vmem:[#allocation8 + $0x1dc0] sm:$0xff]
        %v2005 = vld [vmem:[#allocation8 + $0x1dc8] sm:$0xff]
        %v2006 = vld [vmem:[#allocation8 + $0x1dd0] sm:$0xff]
        %v2007 = vld [vmem:[#allocation8 + $0x1dd8] sm:$0xff]
        %v2008 = vld [vmem:[#allocation8 + $0x1de0] sm:$0xff]
        %v2009 = vld [vmem:[#allocation8 + $0x1de8] sm:$0xff]
        %v2010 = vld [vmem:[#allocation8 + $0x1df0] sm:$0xff]
        %v2011 = vld [vmem:[#allocation8 + $0x1df8] sm:$0xff]
        %v2012 = vld [vmem:[#allocation8 + $0x1e00] sm:$0xff]
        %v2013 = vld [vmem:[#allocation8 + $0x1e08] sm:$0xff]
        %v2014 = vld [vmem:[#allocation8 + $0x1e10] sm:$0xff]
        %v2015 = vld [vmem:[#allocation8 + $0x1e18] sm:$0xff]
        %v2016 = vld [vmem:[#allocation8 + $0x1e20] sm:$0xff]
        %v2017 = vld [vmem:[#allocation8 + $0x1e28] sm:$0xff]
        %v2018 = vld [vmem:[#allocation8 + $0x1e30] sm:$0xff]
        %v2019 = vld [vmem:[#allocation8 + $0x1e38] sm:$0xff]
        %v2020 = vld [vmem:[#allocation8 + $0x1e40] sm:$0xff]
        %v2021 = vld [vmem:[#allocation8 + $0x1e48] sm:$0xff]
        %v2022 = vld [vmem:[#allocation8 + $0x1e50] sm:$0xff]
        %v2023 = vld [vmem:[#allocation8 + $0x1e58] sm:$0xff]
        %v2024 = vld [vmem:[#allocation8 + $0x1e60] sm:$0xff]
        %v2025 = vld [vmem:[#allocation8 + $0x1e68] sm:$0xff]
        %v2026 = vld [vmem:[#allocation8 + $0x1e70] sm:$0xff]
        %v2027 = vld [vmem:[#allocation8 + $0x1e78] sm:$0xff]
        %v2028 = vld [vmem:[#allocation8 + $0x1e80] sm:$0xff]
        %v2029 = vld [vmem:[#allocation8 + $0x1e88] sm:$0xff]
        %v2030 = vld [vmem:[#allocation8 + $0x1e90] sm:$0xff]
        %v2031 = vld [vmem:[#allocation8 + $0x1e98] sm:$0xff]
        %v2032 = vld [vmem:[#allocation8 + $0x1ea0] sm:$0xff]
        %v2033 = vld [vmem:[#allocation8 + $0x1ea8] sm:$0xff]
        %v2034 = vld [vmem:[#allocation8 + $0x1eb0] sm:$0xff]
        %v2035 = vld [vmem:[#allocation8 + $0x1eb8] sm:$0xff]
        %v2036 = vld [vmem:[#allocation8 + $0x1ec0] sm:$0xff]
        %v2037 = vld [vmem:[#allocation8 + $0x1ec8] sm:$0xff]
        %v2038 = vld [vmem:[#allocation8 + $0x1ed0] sm:$0xff]
        %v2039 = vld [vmem:[#allocation8 + $0x1ed8] sm:$0xff]
        %v2040 = vld [vmem:[#allocation8 + $0x1ee0] sm:$0xff]
        %v2041 = vld [vmem:[#allocation8 + $0x1ee8] sm:$0xff]
        %v2042 = vld [vmem:[#allocation8 + $0x1ef0] sm:$0xff]
        %v2043 = vld [vmem:[#allocation8 + $0x1ef8] sm:$0xff]
        %v2044 = vld [vmem:[#allocation8 + $0x1f00] sm:$0xff]
        %v2045 = vld [vmem:[#allocation8 + $0x1f08] sm:$0xff]
        %v2046 = vld [vmem:[#allocation8 + $0x1f10] sm:$0xff]
        %v2047 = vld [vmem:[#allocation8 + $0x1f18] sm:$0xff]
        %v2048 = vld [vmem:[#allocation8 + $0x1f20] sm:$0xff]
        %v2049 = vld [vmem:[#allocation8 + $0x1f28] sm:$0xff]
        %v2050 = vld [vmem:[#allocation8 + $0x1f30] sm:$0xff]
        %v2051 = vld [vmem:[#allocation8 + $0x1f38] sm:$0xff]
        %v2052 = vld [vmem:[#allocation8 + $0x1f40] sm:$0xff]
        %v2053 = vld [vmem:[#allocation8 + $0x1f48] sm:$0xff]
        %v2054 = vld [vmem:[#allocation8 + $0x1f50] sm:$0xff]
        %v2055 = vld [vmem:[#allocation8 + $0x1f58] sm:$0xff]
        %v2056 = vld [vmem:[#allocation8 + $0x1f60] sm:$0xff]
        %v2057 = vld [vmem:[#allocation8 + $0x1f68] sm:$0xff]
        %v2058 = vld [vmem:[#allocation8 + $0x1f70] sm:$0xff]
        %v2059 = vld [vmem:[#allocation8 + $0x1f78] sm:$0xff]
        %v2060 = vld [vmem:[#allocation8 + $0x1f80] sm:$0xff]
        %v2061 = vld [vmem:[#allocation8 + $0x1f88] sm:$0xff]
        %v2062 = vld [vmem:[#allocation8 + $0x1f90] sm:$0xff]
        %v2063 = vld [vmem:[#allocation8 + $0x1f98] sm:$0xff]
        %v2064 = vld [vmem:[#allocation8 + $0x1fa0] sm:$0xff]
        %v2065 = vld [vmem:[#allocation8 + $0x1fa8] sm:$0xff]
        %v2066 = vld [vmem:[#allocation8 + $0x1fb0] sm:$0xff]
        %v2067 = vld [vmem:[#allocation8 + $0x1fb8] sm:$0xff]
        %v2068 = vld [vmem:[#allocation8 + $0x1fc0] sm:$0xff]
        %v2069 = vld [vmem:[#allocation8 + $0x1fc8] sm:$0xff]
        %v2070 = vld [vmem:[#allocation8 + $0x1fd0] sm:$0xff]
        %v2071 = vld [vmem:[#allocation8 + $0x1fd8] sm:$0xff]
        %v2072 = vld [vmem:[#allocation8 + $0x1fe0] sm:$0xff]
        %v2073 = vld [vmem:[#allocation8 + $0x1fe8] sm:$0xff]
        %v2074 = vld [vmem:[#allocation8 + $0x1ff0] sm:$0xff]
        %v2075 = vld [vmem:[#allocation8 + $0x1ff8] sm:$0xff]
        %2076 = vmatprep.subr.mxu0 %v1053
        %2077 = vmatpush1.msra.mxu0 %v1052
        %2078 = vmatprep.subr.mxu0 %v1061
        %2079 = vmatpush1.msra.mxu0 %v1060
        %2080 = vmatprep.subr.mxu0 %v1069
        %2081 = vmatpush1.msra.mxu0 %v1068
        %2082 = vmatprep.subr.mxu0 %v1077
        %2083 = vmatpush1.msra.mxu0 %v1076
        %2084 = vmatprep.subr.mxu0 %v1085
        %2085 = vmatpush1.msra.mxu0 %v1084
        %2086 = vmatprep.subr.mxu0 %v1093
        %2087 = vmatpush1.msra.mxu0 %v1092
        %2088 = vmatprep.subr.mxu0 %v1101
        %2089 = vmatpush1.msra.mxu0 %v1100
        %2090 = vmatprep.subr.mxu0 %v1109
        %2091 = vmatpush1.msra.mxu0 %v1108
        %2092 = vmatprep.subr.mxu0 %v1117
        %2093 = vmatpush1.msra.mxu0 %v1116
        %2094 = vmatprep.subr.mxu0 %v1125
        %2095 = vmatpush1.msra.mxu0 %v1124
        %2096 = vmatprep.subr.mxu0 %v1133
        %2097 = vmatpush1.msra.mxu0 %v1132
        %2098 = vmatprep.subr.mxu0 %v1141
        %2099 = vmatpush1.msra.mxu0 %v1140
        %2100 = vmatprep.subr.mxu0 %v1149
        %2101 = vmatpush1.msra.mxu0 %v1148
        %2102 = vmatprep.subr.mxu0 %v1157
        %2103 = vmatpush1.msra.mxu0 %v1156
        %2104 = vmatprep.subr.mxu0 %v1165
        %2105 = vmatpush1.msra.mxu0 %v1164
        %2106 = vmatprep.subr.mxu0 %v1173
        %2107 = vmatpush1.msra.mxu0 %v1172
        %2108 = vmatprep.subr.mxu0 %v1181
        %2109 = vmatpush1.msra.mxu0 %v1180
        %2110 = vmatprep.subr.mxu0 %v1189
        %2111 = vmatpush1.msra.mxu0 %v1188
        %2112 = vmatprep.subr.mxu0 %v1197
        %2113 = vmatpush1.msra.mxu0 %v1196
        %2114 = vmatprep.subr.mxu0 %v1205
        %2115 = vmatpush1.msra.mxu0 %v1204
        %2116 = vmatprep.subr.mxu0 %v1213
        %2117 = vmatpush1.msra.mxu0 %v1212
        %2118 = vmatprep.subr.mxu0 %v1221
        %2119 = vmatpush1.msra.mxu0 %v1220
        %2120 = vmatprep.subr.mxu0 %v1229
        %2121 = vmatpush1.msra.mxu0 %v1228
        %2122 = vmatprep.subr.mxu0 %v1237
        %2123 = vmatpush1.msra.mxu0 %v1236
        %2124 = vmatprep.subr.mxu0 %v1245
        %2125 = vmatpush1.msra.mxu0 %v1244
        %2126 = vmatprep.subr.mxu0 %v1253
        %2127 = vmatpush1.msra.mxu0 %v1252
        %2128 = vmatprep.subr.mxu0 %v1261
        %2129 = vmatpush1.msra.mxu0 %v1260
        %2130 = vmatprep.subr.mxu0 %v1269
        %2131 = vmatpush1.msra.mxu0 %v1268
        %2132 = vmatprep.subr.mxu0 %v1277
        %2133 = vmatpush1.msra.mxu0 %v1276
        %2134 = vmatprep.subr.mxu0 %v1285
        %2135 = vmatpush1.msra.mxu0 %v1284
        %2136 = vmatprep.subr.mxu0 %v1293
        %2137 = vmatpush1.msra.mxu0 %v1292
        %2138 = vmatprep.subr.mxu0 %v1301
        %2139 = vmatpush1.msra.mxu0 %v1300
        %2140 = vmatprep.mubr.f32.mxu0 %v1045
        %2141 = vmatmul.mubr.f32.gmra.mrb[0].mxu0 %v1044
        %v2142 = vpop.f32.mrb[0].mxu0
        %v2143 = vadd.f32 0.0, %v2142
        %v2144 = vpop.f32.mrb[0].mxu0
        %v2145 = vadd.f32 0.0, %v2144
        %2146 = vdwg.mxu0
        %2147 = vmatprep.subr.mxu0 %v1309
        %2148 = vmatpush1.msra.mxu0 %v1308
        %2149 = vmatprep.subr.mxu0 %v1317
        %2150 = vmatpush1.msra.mxu0 %v1316
        %2151 = vmatprep.subr.mxu0 %v1325
        %2152 = vmatpush1.msra.mxu0 %v1324
        %2153 = vmatprep.subr.mxu0 %v1333
        %2154 = vmatpush1.msra.mxu0 %v1332
        %2155 = vmatprep.subr.mxu0 %v1341
        %2156 = vmatpush1.msra.mxu0 %v1340
        %2157 = vmatprep.subr.mxu0 %v1349
        %2158 = vmatpush1.msra.mxu0 %v1348
        %2159 = vmatprep.subr.mxu0 %v1357
        %2160 = vmatpush1.msra.mxu0 %v1356
        %2161 = vmatprep.subr.mxu0 %v1365
        %2162 = vmatpush1.msra.mxu0 %v1364
        %2163 = vmatprep.subr.mxu0 %v1373
        %2164 = vmatpush1.msra.mxu0 %v1372
        %2165 = vmatprep.subr.mxu0 %v1381
        %2166 = vmatpush1.msra.mxu0 %v1380
        %2167 = vmatprep.subr.mxu0 %v1389
        %2168 = vmatpush1.msra.mxu0 %v1388
        %2169 = vmatprep.subr.mxu0 %v1397
        %2170 = vmatpush1.msra.mxu0 %v1396
        %2171 = vmatprep.subr.mxu0 %v1405
        %2172 = vmatpush1.msra.mxu0 %v1404
        %2173 = vmatprep.subr.mxu0 %v1413
        %2174 = vmatpush1.msra.mxu0 %v1412
        %2175 = vmatprep.subr.mxu0 %v1421
        %2176 = vmatpush1.msra.mxu0 %v1420
        %2177 = vmatprep.subr.mxu0 %v1429
        %2178 = vmatpush1.msra.mxu0 %v1428
        %2179 = vmatprep.subr.mxu0 %v1437
        %2180 = vmatpush1.msra.mxu0 %v1436
        %2181 = vmatprep.subr.mxu0 %v1445
        %2182 = vmatpush1.msra.mxu0 %v1444
        %2183 = vmatprep.subr.mxu0 %v1453
        %2184 = vmatpush1.msra.mxu0 %v1452
        %2185 = vmatprep.subr.mxu0 %v1461
        %2186 = vmatpush1.msra.mxu0 %v1460
        %2187 = vmatprep.subr.mxu0 %v1469
        %2188 = vmatpush1.msra.mxu0 %v1468
        %2189 = vmatprep.subr.mxu0 %v1477
        %2190 = vmatpush1.msra.mxu0 %v1476
        %2191 = vmatprep.subr.mxu0 %v1485
        %2192 = vmatpush1.msra.mxu0 %v1484
        %2193 = vmatprep.subr.mxu0 %v1493
        %2194 = vmatpush1.msra.mxu0 %v1492
        %2195 = vmatprep.subr.mxu0 %v1501
        %2196 = vmatpush1.msra.mxu0 %v1500
        %2197 = vmatprep.subr.mxu0 %v1509
        %2198 = vmatpush1.msra.mxu0 %v1508
        %2199 = vmatprep.subr.mxu0 %v1517
        %2200 = vmatpush1.msra.mxu0 %v1516
        %2201 = vmatprep.subr.mxu0 %v1525
        %2202 = vmatpush1.msra.mxu0 %v1524
        %2203 = vmatprep.subr.mxu0 %v1533
        %2204 = vmatpush1.msra.mxu0 %v1532
        %2205 = vmatprep.subr.mxu0 %v1541
        %2206 = vmatpush1.msra.mxu0 %v1540
        %2207 = vmatprep.subr.mxu0 %v1549
        %2208 = vmatpush1.msra.mxu0 %v1548
        %2209 = vmatprep.subr.mxu0 %v1557
        %2210 = vmatpush1.msra.mxu0 %v1556
        %2211 = vmatprep.mubr.f32.mxu0 %v1047
        %2212 = vmatmul.mubr.f32.gmra.mrb[0].mxu0 %v1046
        %v2213 = vpop.f32.mrb[0].mxu0
        %v2214 = vadd.f32 %v2143, %v2213
        %v2215 = vpop.f32.mrb[0].mxu0
        %v2216 = vadd.f32 %v2145, %v2215
        %2217 = vdwg.mxu0
        %2218 = vmatprep.subr.mxu0 %v1565
        %2219 = vmatpush1.msra.mxu0 %v1564
        %2220 = vmatprep.subr.mxu0 %v1573
        %2221 = vmatpush1.msra.mxu0 %v1572
        %2222 = vmatprep.subr.mxu0 %v1581
        %2223 = vmatpush1.msra.mxu0 %v1580
        %2224 = vmatprep.subr.mxu0 %v1589
        %2225 = vmatpush1.msra.mxu0 %v1588
        %2226 = vmatprep.subr.mxu0 %v1597
        %2227 = vmatpush1.msra.mxu0 %v1596
        %2228 = vmatprep.subr.mxu0 %v1605
        %2229 = vmatpush1.msra.mxu0 %v1604
        %2230 = vmatprep.subr.mxu0 %v1613
        %2231 = vmatpush1.msra.mxu0 %v1612
        %2232 = vmatprep.subr.mxu0 %v1621
        %2233 = vmatpush1.msra.mxu0 %v1620
        %2234 = vmatprep.subr.mxu0 %v1629
        %2235 = vmatpush1.msra.mxu0 %v1628
        %2236 = vmatprep.subr.mxu0 %v1637
        %2237 = vmatpush1.msra.mxu0 %v1636
        %2238 = vmatprep.subr.mxu0 %v1645
        %2239 = vmatpush1.msra.mxu0 %v1644
        %2240 = vmatprep.subr.mxu0 %v1653
        %2241 = vmatpush1.msra.mxu0 %v1652
        %2242 = vmatprep.subr.mxu0 %v1661
        %2243 = vmatpush1.msra.mxu0 %v1660
        %2244 = vmatprep.subr.mxu0 %v1669
        %2245 = vmatpush1.msra.mxu0 %v1668
        %2246 = vmatprep.subr.mxu0 %v1677
        %2247 = vmatpush1.msra.mxu0 %v1676
        %2248 = vmatprep.subr.mxu0 %v1685
        %2249 = vmatpush1.msra.mxu0 %v1684
        %2250 = vmatprep.subr.mxu0 %v1693
        %2251 = vmatpush1.msra.mxu0 %v1692
        %2252 = vmatprep.subr.mxu0 %v1701
        %2253 = vmatpush1.msra.mxu0 %v1700
        %2254 = vmatprep.subr.mxu0 %v1709
        %2255 = vmatpush1.msra.mxu0 %v1708
        %2256 = vmatprep.subr.mxu0 %v1717
        %2257 = vmatpush1.msra.mxu0 %v1716
        %2258 = vmatprep.subr.mxu0 %v1725
        %2259 = vmatpush1.msra.mxu0 %v1724
        %2260 = vmatprep.subr.mxu0 %v1733
        %2261 = vmatpush1.msra.mxu0 %v1732
        %2262 = vmatprep.subr.mxu0 %v1741
        %2263 = vmatpush1.msra.mxu0 %v1740
        %2264 = vmatprep.subr.mxu0 %v1749
        %2265 = vmatpush1.msra.mxu0 %v1748
        %2266 = vmatprep.subr.mxu0 %v1757
        %2267 = vmatpush1.msra.mxu0 %v1756
        %2268 = vmatprep.subr.mxu0 %v1765
        %2269 = vmatpush1.msra.mxu0 %v1764
        %2270 = vmatprep.subr.mxu0 %v1773
        %2271 = vmatpush1.msra.mxu0 %v1772
        %2272 = vmatprep.subr.mxu0 %v1781
        %2273 = vmatpush1.msra.mxu0 %v1780
        %2274 = vmatprep.subr.mxu0 %v1789
        %2275 = vmatpush1.msra.mxu0 %v1788
        %2276 = vmatprep.subr.mxu0 %v1797
        %2277 = vmatpush1.msra.mxu0 %v1796
        %2278 = vmatprep.subr.mxu0 %v1805
        %2279 = vmatpush1.msra.mxu0 %v1804
        %2280 = vmatprep.subr.mxu0 %v1813
        %2281 = vmatpush1.msra.mxu0 %v1812
        %2282 = vmatprep.mubr.f32.mxu0 %v1049
        %2283 = vmatmul.mubr.f32.gmra.mrb[0].mxu0 %v1048
        %v2284 = vpop.f32.mrb[0].mxu0
        %v2285 = vadd.f32 %v2214, %v2284
        %v2286 = vpop.f32.mrb[0].mxu0
        %v2287 = vadd.f32 %v2216, %v2286
        %2288 = vdwg.mxu0
        %2289 = vmatprep.subr.mxu0 %v1821
        %2290 = vmatpush1.msra.mxu0 %v1820
        %2291 = vmatprep.subr.mxu0 %v1829
        %2292 = vmatpush1.msra.mxu0 %v1828
        %2293 = vmatprep.subr.mxu0 %v1837
        %2294 = vmatpush1.msra.mxu0 %v1836
        %2295 = vmatprep.subr.mxu0 %v1845
        %2296 = vmatpush1.msra.mxu0 %v1844
        %2297 = vmatprep.subr.mxu0 %v1853
        %2298 = vmatpush1.msra.mxu0 %v1852
        %2299 = vmatprep.subr.mxu0 %v1861
        %2300 = vmatpush1.msra.mxu0 %v1860
        %2301 = vmatprep.subr.mxu0 %v1869
        %2302 = vmatpush1.msra.mxu0 %v1868
        %2303 = vmatprep.subr.mxu0 %v1877
        %2304 = vmatpush1.msra.mxu0 %v1876
        %2305 = vmatprep.subr.mxu0 %v1885
        %2306 = vmatpush1.msra.mxu0 %v1884
        %2307 = vmatprep.subr.mxu0 %v1893
        %2308 = vmatpush1.msra.mxu0 %v1892
        %2309 = vmatprep.subr.mxu0 %v1901
        %2310 = vmatpush1.msra.mxu0 %v1900
        %2311 = vmatprep.subr.mxu0 %v1909
        %2312 = vmatpush1.msra.mxu0 %v1908
        %2313 = vmatprep.subr.mxu0 %v1917
        %2314 = vmatpush1.msra.mxu0 %v1916
        %2315 = vmatprep.subr.mxu0 %v1925
        %2316 = vmatpush1.msra.mxu0 %v1924
        %2317 = vmatprep.subr.mxu0 %v1933
        %2318 = vmatpush1.msra.mxu0 %v1932
        %2319 = vmatprep.subr.mxu0 %v1941
        %2320 = vmatpush1.msra.mxu0 %v1940
        %2321 = vmatprep.subr.mxu0 %v1949
        %2322 = vmatpush1.msra.mxu0 %v1948
        %2323 = vmatprep.subr.mxu0 %v1957
        %2324 = vmatpush1.msra.mxu0 %v1956
        %2325 = vmatprep.subr.mxu0 %v1965
        %2326 = vmatpush1.msra.mxu0 %v1964
        %2327 = vmatprep.subr.mxu0 %v1973
        %2328 = vmatpush1.msra.mxu0 %v1972
        %2329 = vmatprep.subr.mxu0 %v1981
        %2330 = vmatpush1.msra.mxu0 %v1980
        %2331 = vmatprep.subr.mxu0 %v1989
        %2332 = vmatpush1.msra.mxu0 %v1988
        %2333 = vmatprep.subr.mxu0 %v1997
        %2334 = vmatpush1.msra.mxu0 %v1996
        %2335 = vmatprep.subr.mxu0 %v2005
        %2336 = vmatpush1.msra.mxu0 %v2004
        %2337 = vmatprep.subr.mxu0 %v2013
        %2338 = vmatpush1.msra.mxu0 %v2012
        %2339 = vmatprep.subr.mxu0 %v2021
        %2340 = vmatpush1.msra.mxu0 %v2020
        %2341 = vmatprep.subr.mxu0 %v2029
        %2342 = vmatpush1.msra.mxu0 %v2028
        %2343 = vmatprep.subr.mxu0 %v2037
        %2344 = vmatpush1.msra.mxu0 %v2036
        %2345 = vmatprep.subr.mxu0 %v2045
        %2346 = vmatpush1.msra.mxu0 %v2044
        %2347 = vmatprep.subr.mxu0 %v2053
        %2348 = vmatpush1.msra.mxu0 %v2052
        %2349 = vmatprep.subr.mxu0 %v2061
        %2350 = vmatpush1.msra.mxu0 %v2060
        %2351 = vmatprep.subr.mxu0 %v2069
        %2352 = vmatpush1.msra.mxu0 %v2068
        %2353 = vmatprep.mubr.f32.mxu0 %v1051
        %2354 = vmatmul.mubr.f32.gmra.mrb[0].mxu0 %v1050
        %v2355 = vpop.f32.mrb[0].mxu0
        %v2356 = vadd.f32 %v2285, %v2355
        %v2357 = vpop.f32.mrb[0].mxu0
        %v2358 = vadd.f32 %v2287, %v2357
        %2359 = vdwg.mxu0
        %2360 = vmatprep.subr.mxu0 %v1055
        %2361 = vmatpush1.msra.mxu0 %v1054
        %2362 = vmatprep.subr.mxu0 %v1063
        %2363 = vmatpush1.msra.mxu0 %v1062
        %2364 = vmatprep.subr.mxu0 %v1071
        %2365 = vmatpush1.msra.mxu0 %v1070
        %2366 = vmatprep.subr.mxu0 %v1079
        %2367 = vmatpush1.msra.mxu0 %v1078
        %2368 = vmatprep.subr.mxu0 %v1087
        %2369 = vmatpush1.msra.mxu0 %v1086
        %2370 = vmatprep.subr.mxu0 %v1095
        %2371 = vmatpush1.msra.mxu0 %v1094
        %2372 = vmatprep.subr.mxu0 %v1103
        %2373 = vmatpush1.msra.mxu0 %v1102
        %2374 = vmatprep.subr.mxu0 %v1111
        %2375 = vmatpush1.msra.mxu0 %v1110
        %2376 = vmatprep.subr.mxu0 %v1119
        %2377 = vmatpush1.msra.mxu0 %v1118
        %2378 = vmatprep.subr.mxu0 %v1127
        %2379 = vmatpush1.msra.mxu0 %v1126
        %2380 = vmatprep.subr.mxu0 %v1135
        %2381 = vmatpush1.msra.mxu0 %v1134
        %2382 = vmatprep.subr.mxu0 %v1143
        %2383 = vmatpush1.msra.mxu0 %v1142
        %2384 = vmatprep.subr.mxu0 %v1151
        %2385 = vmatpush1.msra.mxu0 %v1150
        %2386 = vmatprep.subr.mxu0 %v1159
        %2387 = vmatpush1.msra.mxu0 %v1158
        %2388 = vmatprep.subr.mxu0 %v1167
        %2389 = vmatpush1.msra.mxu0 %v1166
        %2390 = vmatprep.subr.mxu0 %v1175
        %2391 = vmatpush1.msra.mxu0 %v1174
        %2392 = vmatprep.subr.mxu0 %v1183
        %2393 = vmatpush1.msra.mxu0 %v1182
        %2394 = vmatprep.subr.mxu0 %v1191
        %2395 = vmatpush1.msra.mxu0 %v1190
        %2396 = vmatprep.subr.mxu0 %v1199
        %2397 = vmatpush1.msra.mxu0 %v1198
        %2398 = vmatprep.subr.mxu0 %v1207
        %2399 = vmatpush1.msra.mxu0 %v1206
        %2400 = vmatprep.subr.mxu0 %v1215
        %2401 = vmatpush1.msra.mxu0 %v1214
        %2402 = vmatprep.subr.mxu0 %v1223
        %2403 = vmatpush1.msra.mxu0 %v1222
        %2404 = vmatprep.subr.mxu0 %v1231
        %2405 = vmatpush1.msra.mxu0 %v1230
        %2406 = vmatprep.subr.mxu0 %v1239
        %2407 = vmatpush1.msra.mxu0 %v1238
        %2408 = vmatprep.subr.mxu0 %v1247
        %2409 = vmatpush1.msra.mxu0 %v1246
        %2410 = vmatprep.subr.mxu0 %v1255
        %2411 = vmatpush1.msra.mxu0 %v1254
        %2412 = vmatprep.subr.mxu0 %v1263
        %2413 = vmatpush1.msra.mxu0 %v1262
        %2414 = vmatprep.subr.mxu0 %v1271
        %2415 = vmatpush1.msra.mxu0 %v1270
        %2416 = vmatprep.subr.mxu0 %v1279
        %2417 = vmatpush1.msra.mxu0 %v1278
        %2418 = vmatprep.subr.mxu0 %v1287
        %2419 = vmatpush1.msra.mxu0 %v1286
        %2420 = vmatprep.subr.mxu0 %v1295
        %2421 = vmatpush1.msra.mxu0 %v1294
        %2422 = vmatprep.subr.mxu0 %v1303
        %2423 = vmatpush1.msra.mxu0 %v1302
        %2424 = vmatprep.mubr.f32.mxu0 %v1045
        %2425 = vmatmul.mubr.f32.gmra.mrb[0].mxu0 %v1044
        %v2426 = vpop.f32.mrb[0].mxu0
        %v2427 = vadd.f32 0.0, %v2426
        %v2428 = vpop.f32.mrb[0].mxu0
        %v2429 = vadd.f32 0.0, %v2428
        %2430 = vdwg.mxu0
        %2431 = vmatprep.subr.mxu0 %v1311
        %2432 = vmatpush1.msra.mxu0 %v1310
        %2433 = vmatprep.subr.mxu0 %v1319
        %2434 = vmatpush1.msra.mxu0 %v1318
        %2435 = vmatprep.subr.mxu0 %v1327
        %2436 = vmatpush1.msra.mxu0 %v1326
        %2437 = vmatprep.subr.mxu0 %v1335
        %2438 = vmatpush1.msra.mxu0 %v1334
        %2439 = vmatprep.subr.mxu0 %v1343
        %2440 = vmatpush1.msra.mxu0 %v1342
        %2441 = vmatprep.subr.mxu0 %v1351
        %2442 = vmatpush1.msra.mxu0 %v1350
        %2443 = vmatprep.subr.mxu0 %v1359
        %2444 = vmatpush1.msra.mxu0 %v1358
        %2445 = vmatprep.subr.mxu0 %v1367
        %2446 = vmatpush1.msra.mxu0 %v1366
        %2447 = vmatprep.subr.mxu0 %v1375
        %2448 = vmatpush1.msra.mxu0 %v1374
        %2449 = vmatprep.subr.mxu0 %v1383
        %2450 = vmatpush1.msra.mxu0 %v1382
        %2451 = vmatprep.subr.mxu0 %v1391
        %2452 = vmatpush1.msra.mxu0 %v1390
        %2453 = vmatprep.subr.mxu0 %v1399
        %2454 = vmatpush1.msra.mxu0 %v1398
        %2455 = vmatprep.subr.mxu0 %v1407
        %2456 = vmatpush1.msra.mxu0 %v1406
        %2457 = vmatprep.subr.mxu0 %v1415
        %2458 = vmatpush1.msra.mxu0 %v1414
        %2459 = vmatprep.subr.mxu0 %v1423
        %2460 = vmatpush1.msra.mxu0 %v1422
        %2461 = vmatprep.subr.mxu0 %v1431
        %2462 = vmatpush1.msra.mxu0 %v1430
        %2463 = vmatprep.subr.mxu0 %v1439
        %2464 = vmatpush1.msra.mxu0 %v1438
        %2465 = vmatprep.subr.mxu0 %v1447
        %2466 = vmatpush1.msra.mxu0 %v1446
        %2467 = vmatprep.subr.mxu0 %v1455
        %2468 = vmatpush1.msra.mxu0 %v1454
        %2469 = vmatprep.subr.mxu0 %v1463
        %2470 = vmatpush1.msra.mxu0 %v1462
        %2471 = vmatprep.subr.mxu0 %v1471
        %2472 = vmatpush1.msra.mxu0 %v1470
        %2473 = vmatprep.subr.mxu0 %v1479
        %2474 = vmatpush1.msra.mxu0 %v1478
        %2475 = vmatprep.subr.mxu0 %v1487
        %2476 = vmatpush1.msra.mxu0 %v1486
        %2477 = vmatprep.subr.mxu0 %v1495
        %2478 = vmatpush1.msra.mxu0 %v1494
        %2479 = vmatprep.subr.mxu0 %v1503
        %2480 = vmatpush1.msra.mxu0 %v1502
        %2481 = vmatprep.subr.mxu0 %v1511
        %2482 = vmatpush1.msra.mxu0 %v1510
        %2483 = vmatprep.subr.mxu0 %v1519
        %2484 = vmatpush1.msra.mxu0 %v1518
        %2485 = vmatprep.subr.mxu0 %v1527
        %2486 = vmatpush1.msra.mxu0 %v1526
        %2487 = vmatprep.subr.mxu0 %v1535
        %2488 = vmatpush1.msra.mxu0 %v1534
        %2489 = vmatprep.subr.mxu0 %v1543
        %2490 = vmatpush1.msra.mxu0 %v1542
        %2491 = vmatprep.subr.mxu0 %v1551
        %2492 = vmatpush1.msra.mxu0 %v1550
        %2493 = vmatprep.subr.mxu0 %v1559
        %2494 = vmatpush1.msra.mxu0 %v1558
        %2495 = vmatprep.mubr.f32.mxu0 %v1047
        %2496 = vmatmul.mubr.f32.gmra.mrb[0].mxu0 %v1046
        %v2497 = vpop.f32.mrb[0].mxu0
        %v2498 = vadd.f32 %v2427, %v2497
        %v2499 = vpop.f32.mrb[0].mxu0
        %v2500 = vadd.f32 %v2429, %v2499
        %2501 = vdwg.mxu0
        %2502 = vmatprep.subr.mxu0 %v1567
        %2503 = vmatpush1.msra.mxu0 %v1566
        %2504 = vmatprep.subr.mxu0 %v1575
        %2505 = vmatpush1.msra.mxu0 %v1574
        %2506 = vmatprep.subr.mxu0 %v1583
        %2507 = vmatpush1.msra.mxu0 %v1582
        %2508 = vmatprep.subr.mxu0 %v1591
        %2509 = vmatpush1.msra.mxu0 %v1590
        %2510 = vmatprep.subr.mxu0 %v1599
        %2511 = vmatpush1.msra.mxu0 %v1598
        %2512 = vmatprep.subr.mxu0 %v1607
        %2513 = vmatpush1.msra.mxu0 %v1606
        %2514 = vmatprep.subr.mxu0 %v1615
        %2515 = vmatpush1.msra.mxu0 %v1614
        %2516 = vmatprep.subr.mxu0 %v1623
        %2517 = vmatpush1.msra.mxu0 %v1622
        %2518 = vmatprep.subr.mxu0 %v1631
        %2519 = vmatpush1.msra.mxu0 %v1630
        %2520 = vmatprep.subr.mxu0 %v1639
        %2521 = vmatpush1.msra.mxu0 %v1638
        %2522 = vmatprep.subr.mxu0 %v1647
        %2523 = vmatpush1.msra.mxu0 %v1646
        %2524 = vmatprep.subr.mxu0 %v1655
        %2525 = vmatpush1.msra.mxu0 %v1654
        %2526 = vmatprep.subr.mxu0 %v1663
        %2527 = vmatpush1.msra.mxu0 %v1662
        %2528 = vmatprep.subr.mxu0 %v1671
        %2529 = vmatpush1.msra.mxu0 %v1670
        %2530 = vmatprep.subr.mxu0 %v1679
        %2531 = vmatpush1.msra.mxu0 %v1678
        %2532 = vmatprep.subr.mxu0 %v1687
        %2533 = vmatpush1.msra.mxu0 %v1686
        %2534 = vmatprep.subr.mxu0 %v1695
        %2535 = vmatpush1.msra.mxu0 %v1694
        %2536 = vmatprep.subr.mxu0 %v1703
        %2537 = vmatpush1.msra.mxu0 %v1702
        %2538 = vmatprep.subr.mxu0 %v1711
        %2539 = vmatpush1.msra.mxu0 %v1710
        %2540 = vmatprep.subr.mxu0 %v1719
        %2541 = vmatpush1.msra.mxu0 %v1718
        %2542 = vmatprep.subr.mxu0 %v1727
        %2543 = vmatpush1.msra.mxu0 %v1726
        %2544 = vmatprep.subr.mxu0 %v1735
        %2545 = vmatpush1.msra.mxu0 %v1734
        %2546 = vmatprep.subr.mxu0 %v1743
        %2547 = vmatpush1.msra.mxu0 %v1742
        %2548 = vmatprep.subr.mxu0 %v1751
        %2549 = vmatpush1.msra.mxu0 %v1750
        %2550 = vmatprep.subr.mxu0 %v1759
        %2551 = vmatpush1.msra.mxu0 %v1758
        %2552 = vmatprep.subr.mxu0 %v1767
        %2553 = vmatpush1.msra.mxu0 %v1766
        %2554 = vmatprep.subr.mxu0 %v1775
        %2555 = vmatpush1.msra.mxu0 %v1774
        %2556 = vmatprep.subr.mxu0 %v1783
        %2557 = vmatpush1.msra.mxu0 %v1782
        %2558 = vmatprep.subr.mxu0 %v1791
        %2559 = vmatpush1.msra.mxu0 %v1790
        %2560 = vmatprep.subr.mxu0 %v1799
        %2561 = vmatpush1.msra.mxu0 %v1798
        %2562 = vmatprep.subr.mxu0 %v1807
        %2563 = vmatpush1.msra.mxu0 %v1806
        %2564 = vmatprep.subr.mxu0 %v1815
        %2565 = vmatpush1.msra.mxu0 %v1814
        %2566 = vmatprep.mubr.f32.mxu0 %v1049
        %2567 = vmatmul.mubr.f32.gmra.mrb[0].mxu0 %v1048
        %v2568 = vpop.f32.mrb[0].mxu0
        %v2569 = vadd.f32 %v2498, %v2568
        %v2570 = vpop.f32.mrb[0].mxu0
        %v2571 = vadd.f32 %v2500, %v2570
        %2572 = vdwg.mxu0
        %2573 = vmatprep.subr.mxu0 %v1823
        %2574 = vmatpush1.msra.mxu0 %v1822
        %2575 = vmatprep.subr.mxu0 %v1831
        %2576 = vmatpush1.msra.mxu0 %v1830
        %2577 = vmatprep.subr.mxu0 %v1839
        %2578 = vmatpush1.msra.mxu0 %v1838
        %2579 = vmatprep.subr.mxu0 %v1847
        %2580 = vmatpush1.msra.mxu0 %v1846
        %2581 = vmatprep.subr.mxu0 %v1855
        %2582 = vmatpush1.msra.mxu0 %v1854
        %2583 = vmatprep.subr.mxu0 %v1863
        %2584 = vmatpush1.msra.mxu0 %v1862
        %2585 = vmatprep.subr.mxu0 %v1871
        %2586 = vmatpush1.msra.mxu0 %v1870
        %2587 = vmatprep.subr.mxu0 %v1879
        %2588 = vmatpush1.msra.mxu0 %v1878
        %2589 = vmatprep.subr.mxu0 %v1887
        %2590 = vmatpush1.msra.mxu0 %v1886
        %2591 = vmatprep.subr.mxu0 %v1895
        %2592 = vmatpush1.msra.mxu0 %v1894
        %2593 = vmatprep.subr.mxu0 %v1903
        %2594 = vmatpush1.msra.mxu0 %v1902
        %2595 = vmatprep.subr.mxu0 %v1911
        %2596 = vmatpush1.msra.mxu0 %v1910
        %2597 = vmatprep.subr.mxu0 %v1919
        %2598 = vmatpush1.msra.mxu0 %v1918
        %2599 = vmatprep.subr.mxu0 %v1927
        %2600 = vmatpush1.msra.mxu0 %v1926
        %2601 = vmatprep.subr.mxu0 %v1935
        %2602 = vmatpush1.msra.mxu0 %v1934
        %2603 = vmatprep.subr.mxu0 %v1943
        %2604 = vmatpush1.msra.mxu0 %v1942
        %2605 = vmatprep.subr.mxu0 %v1951
        %2606 = vmatpush1.msra.mxu0 %v1950
        %2607 = vmatprep.subr.mxu0 %v1959
        %2608 = vmatpush1.msra.mxu0 %v1958
        %2609 = vmatprep.subr.mxu0 %v1967
        %2610 = vmatpush1.msra.mxu0 %v1966
        %2611 = vmatprep.subr.mxu0 %v1975
        %2612 = vmatpush1.msra.mxu0 %v1974
        %2613 = vmatprep.subr.mxu0 %v1983
        %2614 = vmatpush1.msra.mxu0 %v1982
        %2615 = vmatprep.subr.mxu0 %v1991
        %2616 = vmatpush1.msra.mxu0 %v1990
        %2617 = vmatprep.subr.mxu0 %v1999
        %2618 = vmatpush1.msra.mxu0 %v1998
        %2619 = vmatprep.subr.mxu0 %v2007
        %2620 = vmatpush1.msra.mxu0 %v2006
        %2621 = vmatprep.subr.mxu0 %v2015
        %2622 = vmatpush1.msra.mxu0 %v2014
        %2623 = vmatprep.subr.mxu0 %v2023
        %2624 = vmatpush1.msra.mxu0 %v2022
        %2625 = vmatprep.subr.mxu0 %v2031
        %2626 = vmatpush1.msra.mxu0 %v2030
        %2627 = vmatprep.subr.mxu0 %v2039
        %2628 = vmatpush1.msra.mxu0 %v2038
        %2629 = vmatprep.subr.mxu0 %v2047
        %2630 = vmatpush1.msra.mxu0 %v2046
        %2631 = vmatprep.subr.mxu0 %v2055
        %2632 = vmatpush1.msra.mxu0 %v2054
        %2633 = vmatprep.subr.mxu0 %v2063
        %2634 = vmatpush1.msra.mxu0 %v2062
        %2635 = vmatprep.subr.mxu0 %v2071
        %2636 = vmatpush1.msra.mxu0 %v2070
        %2637 = vmatprep.mubr.f32.mxu0 %v1051
        %2638 = vmatmul.mubr.f32.gmra.mrb[0].mxu0 %v1050
        %v2639 = vpop.f32.mrb[0].mxu0
        %v2640 = vadd.f32 %v2569, %v2639
        %v2641 = vpop.f32.mrb[0].mxu0
        %v2642 = vadd.f32 %v2571, %v2641
        %2643 = vdwg.mxu0
        %2644 = vmatprep.subr.mxu0 %v1057
        %2645 = vmatpush1.msra.mxu0 %v1056
        %2646 = vmatprep.subr.mxu0 %v1065
        %2647 = vmatpush1.msra.mxu0 %v1064
        %2648 = vmatprep.subr.mxu0 %v1073
        %2649 = vmatpush1.msra.mxu0 %v1072
        %2650 = vmatprep.subr.mxu0 %v1081
        %2651 = vmatpush1.msra.mxu0 %v1080
        %2652 = vmatprep.subr.mxu0 %v1089
        %2653 = vmatpush1.msra.mxu0 %v1088
        %2654 = vmatprep.subr.mxu0 %v1097
        %2655 = vmatpush1.msra.mxu0 %v1096
        %2656 = vmatprep.subr.mxu0 %v1105
        %2657 = vmatpush1.msra.mxu0 %v1104
        %2658 = vmatprep.subr.mxu0 %v1113
        %2659 = vmatpush1.msra.mxu0 %v1112
        %2660 = vmatprep.subr.mxu0 %v1121
        %2661 = vmatpush1.msra.mxu0 %v1120
        %2662 = vmatprep.subr.mxu0 %v1129
        %2663 = vmatpush1.msra.mxu0 %v1128
        %2664 = vmatprep.subr.mxu0 %v1137
        %2665 = vmatpush1.msra.mxu0 %v1136
        %2666 = vmatprep.subr.mxu0 %v1145
        %2667 = vmatpush1.msra.mxu0 %v1144
        %2668 = vmatprep.subr.mxu0 %v1153
        %2669 = vmatpush1.msra.mxu0 %v1152
        %2670 = vmatprep.subr.mxu0 %v1161
        %2671 = vmatpush1.msra.mxu0 %v1160
        %2672 = vmatprep.subr.mxu0 %v1169
        %2673 = vmatpush1.msra.mxu0 %v1168
        %2674 = vmatprep.subr.mxu0 %v1177
        %2675 = vmatpush1.msra.mxu0 %v1176
        %2676 = vmatprep.subr.mxu0 %v1185
        %2677 = vmatpush1.msra.mxu0 %v1184
        %2678 = vmatprep.subr.mxu0 %v1193
        %2679 = vmatpush1.msra.mxu0 %v1192
        %2680 = vmatprep.subr.mxu0 %v1201
        %2681 = vmatpush1.msra.mxu0 %v1200
        %2682 = vmatprep.subr.mxu0 %v1209
        %2683 = vmatpush1.msra.mxu0 %v1208
        %2684 = vmatprep.subr.mxu0 %v1217
        %2685 = vmatpush1.msra.mxu0 %v1216
        %2686 = vmatprep.subr.mxu0 %v1225
        %2687 = vmatpush1.msra.mxu0 %v1224
        %2688 = vmatprep.subr.mxu0 %v1233
        %2689 = vmatpush1.msra.mxu0 %v1232
        %2690 = vmatprep.subr.mxu0 %v1241
        %2691 = vmatpush1.msra.mxu0 %v1240
        %2692 = vmatprep.subr.mxu0 %v1249
        %2693 = vmatpush1.msra.mxu0 %v1248
        %2694 = vmatprep.subr.mxu0 %v1257
        %2695 = vmatpush1.msra.mxu0 %v1256
        %2696 = vmatprep.subr.mxu0 %v1265
        %2697 = vmatpush1.msra.mxu0 %v1264
        %2698 = vmatprep.subr.mxu0 %v1273
        %2699 = vmatpush1.msra.mxu0 %v1272
        %2700 = vmatprep.subr.mxu0 %v1281
        %2701 = vmatpush1.msra.mxu0 %v1280
        %2702 = vmatprep.subr.mxu0 %v1289
        %2703 = vmatpush1.msra.mxu0 %v1288
        %2704 = vmatprep.subr.mxu0 %v1297
        %2705 = vmatpush1.msra.mxu0 %v1296
        %2706 = vmatprep.subr.mxu0 %v1305
        %2707 = vmatpush1.msra.mxu0 %v1304
        %2708 = vmatprep.mubr.f32.mxu0 %v1045
        %2709 = vmatmul.mubr.f32.gmra.mrb[0].mxu0 %v1044
        %v2710 = vpop.f32.mrb[0].mxu0
        %v2711 = vadd.f32 0.0, %v2710
        %v2712 = vpop.f32.mrb[0].mxu0
        %v2713 = vadd.f32 0.0, %v2712
        %2714 = vdwg.mxu0
        %2715 = vmatprep.subr.mxu0 %v1313
        %2716 = vmatpush1.msra.mxu0 %v1312
        %2717 = vmatprep.subr.mxu0 %v1321
        %2718 = vmatpush1.msra.mxu0 %v1320
        %2719 = vmatprep.subr.mxu0 %v1329
        %2720 = vmatpush1.msra.mxu0 %v1328
        %2721 = vmatprep.subr.mxu0 %v1337
        %2722 = vmatpush1.msra.mxu0 %v1336
        %2723 = vmatprep.subr.mxu0 %v1345
        %2724 = vmatpush1.msra.mxu0 %v1344
        %2725 = vmatprep.subr.mxu0 %v1353
        %2726 = vmatpush1.msra.mxu0 %v1352
        %2727 = vmatprep.subr.mxu0 %v1361
        %2728 = vmatpush1.msra.mxu0 %v1360
        %2729 = vmatprep.subr.mxu0 %v1369
        %2730 = vmatpush1.msra.mxu0 %v1368
        %2731 = vmatprep.subr.mxu0 %v1377
        %2732 = vmatpush1.msra.mxu0 %v1376
        %2733 = vmatprep.subr.mxu0 %v1385
        %2734 = vmatpush1.msra.mxu0 %v1384
        %2735 = vmatprep.subr.mxu0 %v1393
        %2736 = vmatpush1.msra.mxu0 %v1392
        %2737 = vmatprep.subr.mxu0 %v1401
        %2738 = vmatpush1.msra.mxu0 %v1400
        %2739 = vmatprep.subr.mxu0 %v1409
        %2740 = vmatpush1.msra.mxu0 %v1408
        %2741 = vmatprep.subr.mxu0 %v1417
        %2742 = vmatpush1.msra.mxu0 %v1416
        %2743 = vmatprep.subr.mxu0 %v1425
        %2744 = vmatpush1.msra.mxu0 %v1424
        %2745 = vmatprep.subr.mxu0 %v1433
        %2746 = vmatpush1.msra.mxu0 %v1432
        %2747 = vmatprep.subr.mxu0 %v1441
        %2748 = vmatpush1.msra.mxu0 %v1440
        %2749 = vmatprep.subr.mxu0 %v1449
        %2750 = vmatpush1.msra.mxu0 %v1448
        %2751 = vmatprep.subr.mxu0 %v1457
        %2752 = vmatpush1.msra.mxu0 %v1456
        %2753 = vmatprep.subr.mxu0 %v1465
        %2754 = vmatpush1.msra.mxu0 %v1464
        %2755 = vmatprep.subr.mxu0 %v1473
        %2756 = vmatpush1.msra.mxu0 %v1472
        %2757 = vmatprep.subr.mxu0 %v1481
        %2758 = vmatpush1.msra.mxu0 %v1480
        %2759 = vmatprep.subr.mxu0 %v1489
        %2760 = vmatpush1.msra.mxu0 %v1488
        %2761 = vmatprep.subr.mxu0 %v1497
        %2762 = vmatpush1.msra.mxu0 %v1496
        %2763 = vmatprep.subr.mxu0 %v1505
        %2764 = vmatpush1.msra.mxu0 %v1504
        %2765 = vmatprep.subr.mxu0 %v1513
        %2766 = vmatpush1.msra.mxu0 %v1512
        %2767 = vmatprep.subr.mxu0 %v1521
        %2768 = vmatpush1.msra.mxu0 %v1520
        %2769 = vmatprep.subr.mxu0 %v1529
        %2770 = vmatpush1.msra.mxu0 %v1528
        %2771 = vmatprep.subr.mxu0 %v1537
        %2772 = vmatpush1.msra.mxu0 %v1536
        %2773 = vmatprep.subr.mxu0 %v1545
        %2774 = vmatpush1.msra.mxu0 %v1544
        %2775 = vmatprep.subr.mxu0 %v1553
        %2776 = vmatpush1.msra.mxu0 %v1552
        %2777 = vmatprep.subr.mxu0 %v1561
        %2778 = vmatpush1.msra.mxu0 %v1560
        %2779 = vmatprep.mubr.f32.mxu0 %v1047
        %2780 = vmatmul.mubr.f32.gmra.mrb[0].mxu0 %v1046
        %v2781 = vpop.f32.mrb[0].mxu0
        %v2782 = vadd.f32 %v2711, %v2781
        %v2783 = vpop.f32.mrb[0].mxu0
        %v2784 = vadd.f32 %v2713, %v2783
        %2785 = vdwg.mxu0
        %2786 = vmatprep.subr.mxu0 %v1569
        %2787 = vmatpush1.msra.mxu0 %v1568
        %2788 = vmatprep.subr.mxu0 %v1577
        %2789 = vmatpush1.msra.mxu0 %v1576
        %2790 = vmatprep.subr.mxu0 %v1585
        %2791 = vmatpush1.msra.mxu0 %v1584
        %2792 = vmatprep.subr.mxu0 %v1593
        %2793 = vmatpush1.msra.mxu0 %v1592
        %2794 = vmatprep.subr.mxu0 %v1601
        %2795 = vmatpush1.msra.mxu0 %v1600
        %2796 = vmatprep.subr.mxu0 %v1609
        %2797 = vmatpush1.msra.mxu0 %v1608
        %2798 = vmatprep.subr.mxu0 %v1617
        %2799 = vmatpush1.msra.mxu0 %v1616
        %2800 = vmatprep.subr.mxu0 %v1625
        %2801 = vmatpush1.msra.mxu0 %v1624
        %2802 = vmatprep.subr.mxu0 %v1633
        %2803 = vmatpush1.msra.mxu0 %v1632
        %2804 = vmatprep.subr.mxu0 %v1641
        %2805 = vmatpush1.msra.mxu0 %v1640
        %2806 = vmatprep.subr.mxu0 %v1649
        %2807 = vmatpush1.msra.mxu0 %v1648
        %2808 = vmatprep.subr.mxu0 %v1657
        %2809 = vmatpush1.msra.mxu0 %v1656
        %2810 = vmatprep.subr.mxu0 %v1665
        %2811 = vmatpush1.msra.mxu0 %v1664
        %2812 = vmatprep.subr.mxu0 %v1673
        %2813 = vmatpush1.msra.mxu0 %v1672
        %2814 = vmatprep.subr.mxu0 %v1681
        %2815 = vmatpush1.msra.mxu0 %v1680
        %2816 = vmatprep.subr.mxu0 %v1689
        %2817 = vmatpush1.msra.mxu0 %v1688
        %2818 = vmatprep.subr.mxu0 %v1697
        %2819 = vmatpush1.msra.mxu0 %v1696
        %2820 = vmatprep.subr.mxu0 %v1705
        %2821 = vmatpush1.msra.mxu0 %v1704
        %2822 = vmatprep.subr.mxu0 %v1713
        %2823 = vmatpush1.msra.mxu0 %v1712
        %2824 = vmatprep.subr.mxu0 %v1721
        %2825 = vmatpush1.msra.mxu0 %v1720
        %2826 = vmatprep.subr.mxu0 %v1729
        %2827 = vmatpush1.msra.mxu0 %v1728
        %2828 = vmatprep.subr.mxu0 %v1737
        %2829 = vmatpush1.msra.mxu0 %v1736
        %2830 = vmatprep.subr.mxu0 %v1745
        %2831 = vmatpush1.msra.mxu0 %v1744
        %2832 = vmatprep.subr.mxu0 %v1753
        %2833 = vmatpush1.msra.mxu0 %v1752
        %2834 = vmatprep.subr.mxu0 %v1761
        %2835 = vmatpush1.msra.mxu0 %v1760
        %2836 = vmatprep.subr.mxu0 %v1769
        %2837 = vmatpush1.msra.mxu0 %v1768
        %2838 = vmatprep.subr.mxu0 %v1777
        %2839 = vmatpush1.msra.mxu0 %v1776
        %2840 = vmatprep.subr.mxu0 %v1785
        %2841 = vmatpush1.msra.mxu0 %v1784
        %2842 = vmatprep.subr.mxu0 %v1793
        %2843 = vmatpush1.msra.mxu0 %v1792
        %2844 = vmatprep.subr.mxu0 %v1801
        %2845 = vmatpush1.msra.mxu0 %v1800
        %2846 = vmatprep.subr.mxu0 %v1809
        %2847 = vmatpush1.msra.mxu0 %v1808
        %2848 = vmatprep.subr.mxu0 %v1817
        %2849 = vmatpush1.msra.mxu0 %v1816
        %2850 = vmatprep.mubr.f32.mxu0 %v1049
        %2851 = vmatmul.mubr.f32.gmra.mrb[0].mxu0 %v1048
        %v2852 = vpop.f32.mrb[0].mxu0
        %v2853 = vadd.f32 %v2782, %v2852
        %v2854 = vpop.f32.mrb[0].mxu0
        %v2855 = vadd.f32 %v2784, %v2854
        %2856 = vdwg.mxu0
        %2857 = vmatprep.subr.mxu0 %v1825
        %2858 = vmatpush1.msra.mxu0 %v1824
        %2859 = vmatprep.subr.mxu0 %v1833
        %2860 = vmatpush1.msra.mxu0 %v1832
        %2861 = vmatprep.subr.mxu0 %v1841
        %2862 = vmatpush1.msra.mxu0 %v1840
        %2863 = vmatprep.subr.mxu0 %v1849
        %2864 = vmatpush1.msra.mxu0 %v1848
        %2865 = vmatprep.subr.mxu0 %v1857
        %2866 = vmatpush1.msra.mxu0 %v1856
        %2867 = vmatprep.subr.mxu0 %v1865
        %2868 = vmatpush1.msra.mxu0 %v1864
        %2869 = vmatprep.subr.mxu0 %v1873
        %2870 = vmatpush1.msra.mxu0 %v1872
        %2871 = vmatprep.subr.mxu0 %v1881
        %2872 = vmatpush1.msra.mxu0 %v1880
        %2873 = vmatprep.subr.mxu0 %v1889
        %2874 = vmatpush1.msra.mxu0 %v1888
        %2875 = vmatprep.subr.mxu0 %v1897
        %2876 = vmatpush1.msra.mxu0 %v1896
        %2877 = vmatprep.subr.mxu0 %v1905
        %2878 = vmatpush1.msra.mxu0 %v1904
        %2879 = vmatprep.subr.mxu0 %v1913
        %2880 = vmatpush1.msra.mxu0 %v1912
        %2881 = vmatprep.subr.mxu0 %v1921
        %2882 = vmatpush1.msra.mxu0 %v1920
        %2883 = vmatprep.subr.mxu0 %v1929
        %2884 = vmatpush1.msra.mxu0 %v1928
        %2885 = vmatprep.subr.mxu0 %v1937
        %2886 = vmatpush1.msra.mxu0 %v1936
        %2887 = vmatprep.subr.mxu0 %v1945
        %2888 = vmatpush1.msra.mxu0 %v1944
        %2889 = vmatprep.subr.mxu0 %v1953
        %2890 = vmatpush1.msra.mxu0 %v1952
        %2891 = vmatprep.subr.mxu0 %v1961
        %2892 = vmatpush1.msra.mxu0 %v1960
        %2893 = vmatprep.subr.mxu0 %v1969
        %2894 = vmatpush1.msra.mxu0 %v1968
        %2895 = vmatprep.subr.mxu0 %v1977
        %2896 = vmatpush1.msra.mxu0 %v1976
        %2897 = vmatprep.subr.mxu0 %v1985
        %2898 = vmatpush1.msra.mxu0 %v1984
        %2899 = vmatprep.subr.mxu0 %v1993
        %2900 = vmatpush1.msra.mxu0 %v1992
        %2901 = vmatprep.subr.mxu0 %v2001
        %2902 = vmatpush1.msra.mxu0 %v2000
        %2903 = vmatprep.subr.mxu0 %v2009
        %2904 = vmatpush1.msra.mxu0 %v2008
        %2905 = vmatprep.subr.mxu0 %v2017
        %2906 = vmatpush1.msra.mxu0 %v2016
        %2907 = vmatprep.subr.mxu0 %v2025
        %2908 = vmatpush1.msra.mxu0 %v2024
        %2909 = vmatprep.subr.mxu0 %v2033
        %2910 = vmatpush1.msra.mxu0 %v2032
        %2911 = vmatprep.subr.mxu0 %v2041
        %2912 = vmatpush1.msra.mxu0 %v2040
        %2913 = vmatprep.subr.mxu0 %v2049
        %2914 = vmatpush1.msra.mxu0 %v2048
        %2915 = vmatprep.subr.mxu0 %v2057
        %2916 = vmatpush1.msra.mxu0 %v2056
        %2917 = vmatprep.subr.mxu0 %v2065
        %2918 = vmatpush1.msra.mxu0 %v2064
        %2919 = vmatprep.subr.mxu0 %v2073
        %2920 = vmatpush1.msra.mxu0 %v2072
        %2921 = vmatprep.mubr.f32.mxu0 %v1051
        %2922 = vmatmul.mubr.f32.gmra.mrb[0].mxu0 %v1050
        %v2923 = vpop.f32.mrb[0].mxu0
        %v2924 = vadd.f32 %v2853, %v2923
        %v2925 = vpop.f32.mrb[0].mxu0
        %v2926 = vadd.f32 %v2855, %v2925
        %2927 = vdwg.mxu0
        %2928 = vmatprep.subr.mxu0 %v1059
        %2929 = vmatpush1.msra.mxu0 %v1058
        %2930 = vmatprep.subr.mxu0 %v1067
        %2931 = vmatpush1.msra.mxu0 %v1066
        %2932 = vmatprep.subr.mxu0 %v1075
        %2933 = vmatpush1.msra.mxu0 %v1074
        %2934 = vmatprep.subr.mxu0 %v1083
        %2935 = vmatpush1.msra.mxu0 %v1082
        %2936 = vmatprep.subr.mxu0 %v1091
        %2937 = vmatpush1.msra.mxu0 %v1090
        %2938 = vmatprep.subr.mxu0 %v1099
        %2939 = vmatpush1.msra.mxu0 %v1098
        %2940 = vmatprep.subr.mxu0 %v1107
        %2941 = vmatpush1.msra.mxu0 %v1106
        %2942 = vmatprep.subr.mxu0 %v1115
        %2943 = vmatpush1.msra.mxu0 %v1114
        %2944 = vmatprep.subr.mxu0 %v1123
        %2945 = vmatpush1.msra.mxu0 %v1122
        %2946 = vmatprep.subr.mxu0 %v1131
        %2947 = vmatpush1.msra.mxu0 %v1130
        %2948 = vmatprep.subr.mxu0 %v1139
        %2949 = vmatpush1.msra.mxu0 %v1138
        %2950 = vmatprep.subr.mxu0 %v1147
        %2951 = vmatpush1.msra.mxu0 %v1146
        %2952 = vmatprep.subr.mxu0 %v1155
        %2953 = vmatpush1.msra.mxu0 %v1154
        %2954 = vmatprep.subr.mxu0 %v1163
        %2955 = vmatpush1.msra.mxu0 %v1162
        %2956 = vmatprep.subr.mxu0 %v1171
        %2957 = vmatpush1.msra.mxu0 %v1170
        %2958 = vmatprep.subr.mxu0 %v1179
        %2959 = vmatpush1.msra.mxu0 %v1178
        %2960 = vmatprep.subr.mxu0 %v1187
        %2961 = vmatpush1.msra.mxu0 %v1186
        %2962 = vmatprep.subr.mxu0 %v1195
        %2963 = vmatpush1.msra.mxu0 %v1194
        %2964 = vmatprep.subr.mxu0 %v1203
        %2965 = vmatpush1.msra.mxu0 %v1202
        %2966 = vmatprep.subr.mxu0 %v1211
        %2967 = vmatpush1.msra.mxu0 %v1210
        %2968 = vmatprep.subr.mxu0 %v1219
        %2969 = vmatpush1.msra.mxu0 %v1218
        %2970 = vmatprep.subr.mxu0 %v1227
        %2971 = vmatpush1.msra.mxu0 %v1226
        %2972 = vmatprep.subr.mxu0 %v1235
        %2973 = vmatpush1.msra.mxu0 %v1234
        %2974 = vmatprep.subr.mxu0 %v1243
        %2975 = vmatpush1.msra.mxu0 %v1242
        %2976 = vmatprep.subr.mxu0 %v1251
        %2977 = vmatpush1.msra.mxu0 %v1250
        %2978 = vmatprep.subr.mxu0 %v1259
        %2979 = vmatpush1.msra.mxu0 %v1258
        %2980 = vmatprep.subr.mxu0 %v1267
        %2981 = vmatpush1.msra.mxu0 %v1266
        %2982 = vmatprep.subr.mxu0 %v1275
        %2983 = vmatpush1.msra.mxu0 %v1274
        %2984 = vmatprep.subr.mxu0 %v1283
        %2985 = vmatpush1.msra.mxu0 %v1282
        %2986 = vmatprep.subr.mxu0 %v1291
        %2987 = vmatpush1.msra.mxu0 %v1290
        %2988 = vmatprep.subr.mxu0 %v1299
        %2989 = vmatpush1.msra.mxu0 %v1298
        %2990 = vmatprep.subr.mxu0 %v1307
        %2991 = vmatpush1.msra.mxu0 %v1306
        %2992 = vmatprep.mubr.f32.mxu0 %v1045
        %2993 = vmatmul.mubr.f32.gmra.mrb[0].mxu0 %v1044
        %v2994 = vpop.f32.mrb[0].mxu0
        %v2995 = vadd.f32 0.0, %v2994
        %v2996 = vpop.f32.mrb[0].mxu0
        %v2997 = vadd.f32 0.0, %v2996
        %2998 = vdwg.mxu0
        %2999 = vmatprep.subr.mxu0 %v1315
        %3000 = vmatpush1.msra.mxu0 %v1314
        %3001 = vmatprep.subr.mxu0 %v1323
        %3002 = vmatpush1.msra.mxu0 %v1322
        %3003 = vmatprep.subr.mxu0 %v1331
        %3004 = vmatpush1.msra.mxu0 %v1330
        %3005 = vmatprep.subr.mxu0 %v1339
        %3006 = vmatpush1.msra.mxu0 %v1338
        %3007 = vmatprep.subr.mxu0 %v1347
        %3008 = vmatpush1.msra.mxu0 %v1346
        %3009 = vmatprep.subr.mxu0 %v1355
        %3010 = vmatpush1.msra.mxu0 %v1354
        %3011 = vmatprep.subr.mxu0 %v1363
        %3012 = vmatpush1.msra.mxu0 %v1362
        %3013 = vmatprep.subr.mxu0 %v1371
        %3014 = vmatpush1.msra.mxu0 %v1370
        %3015 = vmatprep.subr.mxu0 %v1379
        %3016 = vmatpush1.msra.mxu0 %v1378
        %3017 = vmatprep.subr.mxu0 %v1387
        %3018 = vmatpush1.msra.mxu0 %v1386
        %3019 = vmatprep.subr.mxu0 %v1395
        %3020 = vmatpush1.msra.mxu0 %v1394
        %3021 = vmatprep.subr.mxu0 %v1403
        %3022 = vmatpush1.msra.mxu0 %v1402
        %3023 = vmatprep.subr.mxu0 %v1411
        %3024 = vmatpush1.msra.mxu0 %v1410
        %3025 = vmatprep.subr.mxu0 %v1419
        %3026 = vmatpush1.msra.mxu0 %v1418
        %3027 = vmatprep.subr.mxu0 %v1427
        %3028 = vmatpush1.msra.mxu0 %v1426
        %3029 = vmatprep.subr.mxu0 %v1435
        %3030 = vmatpush1.msra.mxu0 %v1434
        %3031 = vmatprep.subr.mxu0 %v1443
        %3032 = vmatpush1.msra.mxu0 %v1442
        %3033 = vmatprep.subr.mxu0 %v1451
        %3034 = vmatpush1.msra.mxu0 %v1450
        %3035 = vmatprep.subr.mxu0 %v1459
        %3036 = vmatpush1.msra.mxu0 %v1458
        %3037 = vmatprep.subr.mxu0 %v1467
        %3038 = vmatpush1.msra.mxu0 %v1466
        %3039 = vmatprep.subr.mxu0 %v1475
        %3040 = vmatpush1.msra.mxu0 %v1474
        %3041 = vmatprep.subr.mxu0 %v1483
        %3042 = vmatpush1.msra.mxu0 %v1482
        %3043 = vmatprep.subr.mxu0 %v1491
        %3044 = vmatpush1.msra.mxu0 %v1490
        %3045 = vmatprep.subr.mxu0 %v1499
        %3046 = vmatpush1.msra.mxu0 %v1498
        %3047 = vmatprep.subr.mxu0 %v1507
        %3048 = vmatpush1.msra.mxu0 %v1506
        %3049 = vmatprep.subr.mxu0 %v1515
        %3050 = vmatpush1.msra.mxu0 %v1514
        %3051 = vmatprep.subr.mxu0 %v1523
        %3052 = vmatpush1.msra.mxu0 %v1522
        %3053 = vmatprep.subr.mxu0 %v1531
        %3054 = vmatpush1.msra.mxu0 %v1530
        %3055 = vmatprep.subr.mxu0 %v1539
        %3056 = vmatpush1.msra.mxu0 %v1538
        %3057 = vmatprep.subr.mxu0 %v1547
        %3058 = vmatpush1.msra.mxu0 %v1546
        %3059 = vmatprep.subr.mxu0 %v1555
        %3060 = vmatpush1.msra.mxu0 %v1554
        %3061 = vmatprep.subr.mxu0 %v1563
        %3062 = vmatpush1.msra.mxu0 %v1562
        %3063 = vmatprep.mubr.f32.mxu0 %v1047
        %3064 = vmatmul.mubr.f32.gmra.mrb[0].mxu0 %v1046
        %v3065 = vpop.f32.mrb[0].mxu0
        %v3066 = vadd.f32 %v2995, %v3065
        %v3067 = vpop.f32.mrb[0].mxu0
        %v3068 = vadd.f32 %v2997, %v3067
        %3069 = vdwg.mxu0
        %3070 = vmatprep.subr.mxu0 %v1571
        %3071 = vmatpush1.msra.mxu0 %v1570
        %3072 = vmatprep.subr.mxu0 %v1579
        %3073 = vmatpush1.msra.mxu0 %v1578
        %3074 = vmatprep.subr.mxu0 %v1587
        %3075 = vmatpush1.msra.mxu0 %v1586
        %3076 = vmatprep.subr.mxu0 %v1595
        %3077 = vmatpush1.msra.mxu0 %v1594
        %3078 = vmatprep.subr.mxu0 %v1603
        %3079 = vmatpush1.msra.mxu0 %v1602
        %3080 = vmatprep.subr.mxu0 %v1611
        %3081 = vmatpush1.msra.mxu0 %v1610
        %3082 = vmatprep.subr.mxu0 %v1619
        %3083 = vmatpush1.msra.mxu0 %v1618
        %3084 = vmatprep.subr.mxu0 %v1627
        %3085 = vmatpush1.msra.mxu0 %v1626
        %3086 = vmatprep.subr.mxu0 %v1635
        %3087 = vmatpush1.msra.mxu0 %v1634
        %3088 = vmatprep.subr.mxu0 %v1643
        %3089 = vmatpush1.msra.mxu0 %v1642
        %3090 = vmatprep.subr.mxu0 %v1651
        %3091 = vmatpush1.msra.mxu0 %v1650
        %3092 = vmatprep.subr.mxu0 %v1659
        %3093 = vmatpush1.msra.mxu0 %v1658
        %3094 = vmatprep.subr.mxu0 %v1667
        %3095 = vmatpush1.msra.mxu0 %v1666
        %3096 = vmatprep.subr.mxu0 %v1675
        %3097 = vmatpush1.msra.mxu0 %v1674
        %3098 = vmatprep.subr.mxu0 %v1683
        %3099 = vmatpush1.msra.mxu0 %v1682
        %3100 = vmatprep.subr.mxu0 %v1691
        %3101 = vmatpush1.msra.mxu0 %v1690
        %3102 = vmatprep.subr.mxu0 %v1699
        %3103 = vmatpush1.msra.mxu0 %v1698
        %3104 = vmatprep.subr.mxu0 %v1707
        %3105 = vmatpush1.msra.mxu0 %v1706
        %3106 = vmatprep.subr.mxu0 %v1715
        %3107 = vmatpush1.msra.mxu0 %v1714
        %3108 = vmatprep.subr.mxu0 %v1723
        %3109 = vmatpush1.msra.mxu0 %v1722
        %3110 = vmatprep.subr.mxu0 %v1731
        %3111 = vmatpush1.msra.mxu0 %v1730
        %3112 = vmatprep.subr.mxu0 %v1739
        %3113 = vmatpush1.msra.mxu0 %v1738
        %3114 = vmatprep.subr.mxu0 %v1747
        %3115 = vmatpush1.msra.mxu0 %v1746
        %3116 = vmatprep.subr.mxu0 %v1755
        %3117 = vmatpush1.msra.mxu0 %v1754
        %3118 = vmatprep.subr.mxu0 %v1763
        %3119 = vmatpush1.msra.mxu0 %v1762
        %3120 = vmatprep.subr.mxu0 %v1771
        %3121 = vmatpush1.msra.mxu0 %v1770
        %3122 = vmatprep.subr.mxu0 %v1779
        %3123 = vmatpush1.msra.mxu0 %v1778
        %3124 = vmatprep.subr.mxu0 %v1787
        %3125 = vmatpush1.msra.mxu0 %v1786
        %3126 = vmatprep.subr.mxu0 %v1795
        %3127 = vmatpush1.msra.mxu0 %v1794
        %3128 = vmatprep.subr.mxu0 %v1803
        %3129 = vmatpush1.msra.mxu0 %v1802
        %3130 = vmatprep.subr.mxu0 %v1811
        %3131 = vmatpush1.msra.mxu0 %v1810
        %3132 = vmatprep.subr.mxu0 %v1819
        %3133 = vmatpush1.msra.mxu0 %v1818
        %3134 = vmatprep.mubr.f32.mxu0 %v1049
        %3135 = vmatmul.mubr.f32.gmra.mrb[0].mxu0 %v1048
        %v3136 = vpop.f32.mrb[0].mxu0
        %v3137 = vadd.f32 %v3066, %v3136
        %v3138 = vpop.f32.mrb[0].mxu0
        %v3139 = vadd.f32 %v3068, %v3138
        %3140 = vdwg.mxu0
        %3141 = vmatprep.subr.mxu0 %v1827
        %3142 = vmatpush1.msra.mxu0 %v1826
        %3143 = vmatprep.subr.mxu0 %v1835
        %3144 = vmatpush1.msra.mxu0 %v1834
        %3145 = vmatprep.subr.mxu0 %v1843
        %3146 = vmatpush1.msra.mxu0 %v1842
        %3147 = vmatprep.subr.mxu0 %v1851
        %3148 = vmatpush1.msra.mxu0 %v1850
        %3149 = vmatprep.subr.mxu0 %v1859
        %3150 = vmatpush1.msra.mxu0 %v1858
        %3151 = vmatprep.subr.mxu0 %v1867
        %3152 = vmatpush1.msra.mxu0 %v1866
        %3153 = vmatprep.subr.mxu0 %v1875
        %3154 = vmatpush1.msra.mxu0 %v1874
        %3155 = vmatprep.subr.mxu0 %v1883
        %3156 = vmatpush1.msra.mxu0 %v1882
        %3157 = vmatprep.subr.mxu0 %v1891
        %3158 = vmatpush1.msra.mxu0 %v1890
        %3159 = vmatprep.subr.mxu0 %v1899
        %3160 = vmatpush1.msra.mxu0 %v1898
        %3161 = vmatprep.subr.mxu0 %v1907
        %3162 = vmatpush1.msra.mxu0 %v1906
        %3163 = vmatprep.subr.mxu0 %v1915
        %3164 = vmatpush1.msra.mxu0 %v1914
        %3165 = vmatprep.subr.mxu0 %v1923
        %3166 = vmatpush1.msra.mxu0 %v1922
        %3167 = vmatprep.subr.mxu0 %v1931
        %3168 = vmatpush1.msra.mxu0 %v1930
        %3169 = vmatprep.subr.mxu0 %v1939
        %3170 = vmatpush1.msra.mxu0 %v1938
        %3171 = vmatprep.subr.mxu0 %v1947
        %3172 = vmatpush1.msra.mxu0 %v1946
        %3173 = vmatprep.subr.mxu0 %v1955
        %3174 = vmatpush1.msra.mxu0 %v1954
        %3175 = vmatprep.subr.mxu0 %v1963
        %3176 = vmatpush1.msra.mxu0 %v1962
        %3177 = vmatprep.subr.mxu0 %v1971
        %3178 = vmatpush1.msra.mxu0 %v1970
        %3179 = vmatprep.subr.mxu0 %v1979
        %3180 = vmatpush1.msra.mxu0 %v1978
        %3181 = vmatprep.subr.mxu0 %v1987
        %3182 = vmatpush1.msra.mxu0 %v1986
        %3183 = vmatprep.subr.mxu0 %v1995
        %3184 = vmatpush1.msra.mxu0 %v1994
        %3185 = vmatprep.subr.mxu0 %v2003
        %3186 = vmatpush1.msra.mxu0 %v2002
        %3187 = vmatprep.subr.mxu0 %v2011
        %3188 = vmatpush1.msra.mxu0 %v2010
        %3189 = vmatprep.subr.mxu0 %v2019
        %3190 = vmatpush1.msra.mxu0 %v2018
        %3191 = vmatprep.subr.mxu0 %v2027
        %3192 = vmatpush1.msra.mxu0 %v2026
        %3193 = vmatprep.subr.mxu0 %v2035
        %3194 = vmatpush1.msra.mxu0 %v2034
        %3195 = vmatprep.subr.mxu0 %v2043
        %3196 = vmatpush1.msra.mxu0 %v2042
        %3197 = vmatprep.subr.mxu0 %v2051
        %3198 = vmatpush1.msra.mxu0 %v2050
        %3199 = vmatprep.subr.mxu0 %v2059
        %3200 = vmatpush1.msra.mxu0 %v2058
        %3201 = vmatprep.subr.mxu0 %v2067
        %3202 = vmatpush1.msra.mxu0 %v2066
        %3203 = vmatprep.subr.mxu0 %v2075
        %3204 = vmatpush1.msra.mxu0 %v2074
        %3205 = vmatprep.mubr.f32.mxu0 %v1051
        %3206 = vmatmul.mubr.f32.gmra.mrb[0].mxu0 %v1050
        %v3207 = vpop.f32.mrb[0].mxu0
        %v3208 = vadd.f32 %v3137, %v3207
        %v3209 = vpop.f32.mrb[0].mxu0
        %v3210 = vadd.f32 %v3139, %v3209
        %3211 = vdwg.mxu0
        %v3212 = vmax.f32 %v2356, %v2640
        %v3213 = vmax.f32 %v2358, %v2642
        %v3214 = vmax.f32 %v2924, %v3208
        %v3215 = vmax.f32 %v2926, %v3210
        %v3216 = vmax.f32 %v3212, %v3214
        %v3217 = vmax.f32 %v3213, %v3215
        %v3218 = vld [vmem:[#allocation10] sm:$0xff]
        %v3219 = vld [vmem:[#allocation10 + $0x8] sm:$0xff]
        %v3220 = vld [vmem:[#allocation10 + $0x10] sm:$0xff]
        %v3221 = vld [vmem:[#allocation10 + $0x18] sm:$0xff]
        %v3222 = vld [vmem:[#allocation10 + $0x20] sm:$0xff]
        %v3223 = vld [vmem:[#allocation10 + $0x28] sm:$0xff]
        %v3224 = vld [vmem:[#allocation10 + $0x30] sm:$0xff]
        %v3225 = vld [vmem:[#allocation10 + $0x38] sm:$0xff]
        %v3226 = vld [vmem:[#allocation10 + $0x40] sm:$0xff]
        %v3227 = vld [vmem:[#allocation10 + $0x48] sm:$0xff]
        %v3228 = vld [vmem:[#allocation10 + $0x50] sm:$0xff]
        %v3229 = vld [vmem:[#allocation10 + $0x58] sm:$0xff]
        %v3230 = vld [vmem:[#allocation10 + $0x60] sm:$0xff]
        %v3231 = vld [vmem:[#allocation10 + $0x68] sm:$0xff]
        %v3232 = vld [vmem:[#allocation10 + $0x70] sm:$0xff]
        %v3233 = vld [vmem:[#allocation10 + $0x78] sm:$0xff]
        %v3234 = vld [vmem:[#allocation10 + $0x80] sm:$0xff]
        %v3235 = vld [vmem:[#allocation10 + $0x88] sm:$0xff]
        %v3236 = vld [vmem:[#allocation10 + $0x90] sm:$0xff]
        %v3237 = vld [vmem:[#allocation10 + $0x98] sm:$0xff]
        %v3238 = vld [vmem:[#allocation10 + $0xa0] sm:$0xff]
        %v3239 = vld [vmem:[#allocation10 + $0xa8] sm:$0xff]
        %v3240 = vld [vmem:[#allocation10 + $0xb0] sm:$0xff]
        %v3241 = vld [vmem:[#allocation10 + $0xb8] sm:$0xff]
        %v3242 = vld [vmem:[#allocation10 + $0xc0] sm:$0xff]
        %v3243 = vld [vmem:[#allocation10 + $0xc8] sm:$0xff]
        %v3244 = vld [vmem:[#allocation10 + $0xd0] sm:$0xff]
        %v3245 = vld [vmem:[#allocation10 + $0xd8] sm:$0xff]
        %v3246 = vld [vmem:[#allocation10 + $0xe0] sm:$0xff]
        %v3247 = vld [vmem:[#allocation10 + $0xe8] sm:$0xff]
        %v3248 = vld [vmem:[#allocation10 + $0xf0] sm:$0xff]
        %v3249 = vld [vmem:[#allocation10 + $0xf8] sm:$0xff]
        %v3250 = vld [vmem:[#allocation11] sm:$0x1]
        %v3252 = vlaneseq
        %v3253 = vshrl.u32 %v3252, 7
        %v3254 = vsub.s32 0, %v3253
        %v3255 = vrot.slane %v3250, %v3254
        %3257 = vmatprep.subr.mxu0 0.0
        %3258 = vmatpush1.msra.mxu0 %v3218
        %3259 = vmatprep.subr.mxu0 0.0
        %3260 = vmatpush1.msra.mxu0 %v3219
        %3261 = vmatprep.subr.mxu0 0.0
        %3262 = vmatpush1.msra.mxu0 %v3220
        %3263 = vmatprep.subr.mxu0 0.0
        %3264 = vmatpush1.msra.mxu0 %v3221
        %3265 = vmatprep.subr.mxu0 0.0
        %3266 = vmatpush1.msra.mxu0 %v3222
        %3267 = vmatprep.subr.mxu0 0.0
        %3268 = vmatpush1.msra.mxu0 %v3223
        %3269 = vmatprep.subr.mxu0 0.0
        %3270 = vmatpush1.msra.mxu0 %v3224
        %3271 = vmatprep.subr.mxu0 0.0
        %3272 = vmatpush1.msra.mxu0 %v3225
        %3273 = vmatprep.subr.mxu0 0.0
        %3274 = vmatpush1.msra.mxu0 %v3226
        %3275 = vmatprep.subr.mxu0 0.0
        %3276 = vmatpush1.msra.mxu0 %v3227
        %3277 = vmatprep.subr.mxu0 0.0
        %3278 = vmatpush1.msra.mxu0 %v3228
        %3279 = vmatprep.subr.mxu0 0.0
        %3280 = vmatpush1.msra.mxu0 %v3229
        %3281 = vmatprep.subr.mxu0 0.0
        %3282 = vmatpush1.msra.mxu0 %v3230
        %3283 = vmatprep.subr.mxu0 0.0
        %3284 = vmatpush1.msra.mxu0 %v3231
        %3285 = vmatprep.subr.mxu0 0.0
        %3286 = vmatpush1.msra.mxu0 %v3232
        %3287 = vmatprep.subr.mxu0 0.0
        %3288 = vmatpush1.msra.mxu0 %v3233
        %3289 = vmatprep.subr.mxu0 0.0
        %3290 = vmatpush1.msra.mxu0 %v3234
        %3291 = vmatprep.subr.mxu0 0.0
        %3292 = vmatpush1.msra.mxu0 %v3235
        %3293 = vmatprep.subr.mxu0 0.0
        %3294 = vmatpush1.msra.mxu0 %v3236
        %3295 = vmatprep.subr.mxu0 0.0
        %3296 = vmatpush1.msra.mxu0 %v3237
        %3297 = vmatprep.subr.mxu0 0.0
        %3298 = vmatpush1.msra.mxu0 %v3238
        %3299 = vmatprep.subr.mxu0 0.0
        %3300 = vmatpush1.msra.mxu0 %v3239
        %3301 = vmatprep.subr.mxu0 0.0
        %3302 = vmatpush1.msra.mxu0 %v3240
        %3303 = vmatprep.subr.mxu0 0.0
        %3304 = vmatpush1.msra.mxu0 %v3241
        %3305 = vmatprep.subr.mxu0 0.0
        %3306 = vmatpush1.msra.mxu0 %v3242
        %3307 = vmatprep.subr.mxu0 0.0
        %3308 = vmatpush1.msra.mxu0 %v3243
        %3309 = vmatprep.subr.mxu0 0.0
        %3310 = vmatpush1.msra.mxu0 %v3244
        %3311 = vmatprep.subr.mxu0 0.0
        %3312 = vmatpush1.msra.mxu0 %v3245
        %3313 = vmatprep.subr.mxu0 0.0
        %3314 = vmatpush1.msra.mxu0 %v3246
        %3315 = vmatprep.subr.mxu0 0.0
        %3316 = vmatpush1.msra.mxu0 %v3247
        %3317 = vmatprep.subr.mxu0 0.0
        %3318 = vmatpush1.msra.mxu0 %v3248
        %3319 = vmatprep.subr.mxu0 0.0
        %3320 = vmatpush1.msra.mxu0 %v3249
        %3321 = vmatprep.mubr.f32.mxu0 %v3217
        %3322 = vmatmul.mubr.f32.gmra.mrb[0].mxu0 %v3216
        %v3323 = vpop.f32.mrb[0].mxu0
        %v3324 = vadd.f32 %v3255, %v3323
        %v3325 = vpop.f32.mrb[0].mxu0
        %3326 = vdwg.mxu0
        %v3327 = vmax.f32 %v3324, 0.0
        %v3328 = vld [vmem:[#allocation13] sm:$0xff]
        %v3329 = vld [vmem:[#allocation13 + $0x8] sm:$0xff]
        %v3330 = vld [vmem:[#allocation13 + $0x10] sm:$0xff]
        %v3331 = vld [vmem:[#allocation13 + $0x18] sm:$0xff]
        %v3332 = vld [vmem:[#allocation13 + $0x20] sm:$0xff]
        %v3333 = vld [vmem:[#allocation13 + $0x28] sm:$0xff]
        %v3334 = vld [vmem:[#allocation13 + $0x30] sm:$0xff]
        %v3335 = vld [vmem:[#allocation13 + $0x38] sm:$0xff]
        %v3336 = vld [vmem:[#allocation13 + $0x40] sm:$0xff]
        %v3337 = vld [vmem:[#allocation13 + $0x48] sm:$0xff]
        %v3338 = vld [vmem:[#allocation13 + $0x50] sm:$0xff]
        %v3339 = vld [vmem:[#allocation13 + $0x58] sm:$0xff]
        %v3340 = vld [vmem:[#allocation13 + $0x60] sm:$0xff]
        %v3341 = vld [vmem:[#allocation13 + $0x68] sm:$0xff]
        %v3342 = vld [vmem:[#allocation13 + $0x70] sm:$0xff]
        %v3343 = vld [vmem:[#allocation13 + $0x78] sm:$0xff]
        %v3344 = vld [vmem:[#allocation13 + $0x80] sm:$0xff]
        %v3345 = vld [vmem:[#allocation13 + $0x88] sm:$0xff]
        %v3346 = vld [vmem:[#allocation13 + $0x90] sm:$0xff]
        %v3347 = vld [vmem:[#allocation13 + $0x98] sm:$0xff]
        %v3348 = vld [vmem:[#allocation13 + $0xa0] sm:$0xff]
        %v3349 = vld [vmem:[#allocation13 + $0xa8] sm:$0xff]
        %v3350 = vld [vmem:[#allocation13 + $0xb0] sm:$0xff]
        %v3351 = vld [vmem:[#allocation13 + $0xb8] sm:$0xff]
        %v3352 = vld [vmem:[#allocation13 + $0xc0] sm:$0xff]
        %v3353 = vld [vmem:[#allocation13 + $0xc8] sm:$0xff]
        %v3354 = vld [vmem:[#allocation13 + $0xd0] sm:$0xff]
        %v3355 = vld [vmem:[#allocation13 + $0xd8] sm:$0xff]
        %v3356 = vld [vmem:[#allocation13 + $0xe0] sm:$0xff]
        %v3357 = vld [vmem:[#allocation13 + $0xe8] sm:$0xff]
        %v3358 = vld [vmem:[#allocation13 + $0xf0] sm:$0xff]
        %v3359 = vld [vmem:[#allocation13 + $0xf8] sm:$0xff]
        %v3360 = vld [vmem:[#allocation13 + $0x100] sm:$0xff]
        %v3361 = vld [vmem:[#allocation13 + $0x108] sm:$0xff]
        %v3362 = vld [vmem:[#allocation13 + $0x110] sm:$0xff]
        %v3363 = vld [vmem:[#allocation13 + $0x118] sm:$0xff]
        %v3364 = vld [vmem:[#allocation13 + $0x120] sm:$0xff]
        %v3365 = vld [vmem:[#allocation13 + $0x128] sm:$0xff]
        %v3366 = vld [vmem:[#allocation13 + $0x130] sm:$0xff]
        %v3367 = vld [vmem:[#allocation13 + $0x138] sm:$0xff]
        %v3368 = vld [vmem:[#allocation13 + $0x140] sm:$0xff]
        %v3369 = vld [vmem:[#allocation13 + $0x148] sm:$0xff]
        %v3370 = vld [vmem:[#allocation13 + $0x150] sm:$0xff]
        %v3371 = vld [vmem:[#allocation13 + $0x158] sm:$0xff]
        %v3372 = vld [vmem:[#allocation13 + $0x160] sm:$0xff]
        %v3373 = vld [vmem:[#allocation13 + $0x168] sm:$0xff]
        %v3374 = vld [vmem:[#allocation13 + $0x170] sm:$0xff]
        %v3375 = vld [vmem:[#allocation13 + $0x178] sm:$0xff]
        %v3376 = vld [vmem:[#allocation13 + $0x180] sm:$0xff]
        %v3377 = vld [vmem:[#allocation13 + $0x188] sm:$0xff]
        %v3378 = vld [vmem:[#allocation13 + $0x190] sm:$0xff]
        %v3379 = vld [vmem:[#allocation13 + $0x198] sm:$0xff]
        %v3380 = vld [vmem:[#allocation13 + $0x1a0] sm:$0xff]
        %v3381 = vld [vmem:[#allocation13 + $0x1a8] sm:$0xff]
        %v3382 = vld [vmem:[#allocation13 + $0x1b0] sm:$0xff]
        %v3383 = vld [vmem:[#allocation13 + $0x1b8] sm:$0xff]
        %v3384 = vld [vmem:[#allocation13 + $0x1c0] sm:$0xff]
        %v3385 = vld [vmem:[#allocation13 + $0x1c8] sm:$0xff]
        %v3386 = vld [vmem:[#allocation13 + $0x1d0] sm:$0xff]
        %v3387 = vld [vmem:[#allocation13 + $0x1d8] sm:$0xff]
        %v3388 = vld [vmem:[#allocation13 + $0x1e0] sm:$0xff]
        %v3389 = vld [vmem:[#allocation13 + $0x1e8] sm:$0xff]
        %v3390 = vld [vmem:[#allocation13 + $0x1f0] sm:$0xff]
        %v3391 = vld [vmem:[#allocation13 + $0x1f8] sm:$0xff]
        %3392 = vmatprep.subr.mxu0 %v3329
        %3393 = vmatpush1.msra.mxu0 %v3328
        %3394 = vmatprep.subr.mxu0 %v3333
        %3395 = vmatpush1.msra.mxu0 %v3332
        %3396 = vmatprep.subr.mxu0 %v3337
        %3397 = vmatpush1.msra.mxu0 %v3336
        %3398 = vmatprep.subr.mxu0 %v3341
        %3399 = vmatpush1.msra.mxu0 %v3340
        %3400 = vmatprep.subr.mxu0 %v3345
        %3401 = vmatpush1.msra.mxu0 %v3344
        %3402 = vmatprep.subr.mxu0 %v3349
        %3403 = vmatpush1.msra.mxu0 %v3348
        %3404 = vmatprep.subr.mxu0 %v3353
        %3405 = vmatpush1.msra.mxu0 %v3352
        %3406 = vmatprep.subr.mxu0 %v3357
        %3407 = vmatpush1.msra.mxu0 %v3356
        %3408 = vmatprep.subr.mxu0 %v3361
        %3409 = vmatpush1.msra.mxu0 %v3360
        %3410 = vmatprep.subr.mxu0 %v3365
        %3411 = vmatpush1.msra.mxu0 %v3364
        %3412 = vmatprep.subr.mxu0 %v3369
        %3413 = vmatpush1.msra.mxu0 %v3368
        %3414 = vmatprep.subr.mxu0 %v3373
        %3415 = vmatpush1.msra.mxu0 %v3372
        %3416 = vmatprep.subr.mxu0 %v3377
        %3417 = vmatpush1.msra.mxu0 %v3376
        %3418 = vmatprep.subr.mxu0 %v3381
        %3419 = vmatpush1.msra.mxu0 %v3380
        %3420 = vmatprep.subr.mxu0 %v3385
        %3421 = vmatpush1.msra.mxu0 %v3384
        %3422 = vmatprep.subr.mxu0 %v3389
        %3423 = vmatpush1.msra.mxu0 %v3388
        %3424 = vmatprep.subr.mxu0 0.0
        %3425 = vmatpush1.msra.mxu0 0.0
        %3426 = vmatprep.subr.mxu0 0.0
        %3427 = vmatpush1.msra.mxu0 0.0
        %3428 = vmatprep.subr.mxu0 0.0
        %3429 = vmatpush1.msra.mxu0 0.0
        %3430 = vmatprep.subr.mxu0 0.0
        %3431 = vmatpush1.msra.mxu0 0.0
        %3432 = vmatprep.subr.mxu0 0.0
        %3433 = vmatpush1.msra.mxu0 0.0
        %3434 = vmatprep.subr.mxu0 0.0
        %3435 = vmatpush1.msra.mxu0 0.0
        %3436 = vmatprep.subr.mxu0 0.0
        %3437 = vmatpush1.msra.mxu0 0.0
        %3438 = vmatprep.subr.mxu0 0.0
        %3439 = vmatpush1.msra.mxu0 0.0
        %3440 = vmatprep.subr.mxu0 0.0
        %3441 = vmatpush1.msra.mxu0 0.0
        %3442 = vmatprep.subr.mxu0 0.0
        %3443 = vmatpush1.msra.mxu0 0.0
        %3444 = vmatprep.subr.mxu0 0.0
        %3445 = vmatpush1.msra.mxu0 0.0
        %3446 = vmatprep.subr.mxu0 0.0
        %3447 = vmatpush1.msra.mxu0 0.0
        %3448 = vmatprep.subr.mxu0 0.0
        %3449 = vmatpush1.msra.mxu0 0.0
        %3450 = vmatprep.subr.mxu0 0.0
        %3451 = vmatpush1.msra.mxu0 0.0
        %3452 = vmatprep.subr.mxu0 0.0
        %3453 = vmatpush1.msra.mxu0 0.0
        %3454 = vmatprep.subr.mxu0 0.0
        %3455 = vmatpush1.msra.mxu0 0.0
        %3456 = vmatprep.mubr.f32.mxu0 0.0
        %3457 = vmatmul.mubr.f32.gmra.mrb[0].mxu0 %v3327
        %v3458 = vpop.f32.mrb[0].mxu0
        %v3459 = vadd.f32 0.0, %v3458
        %v3460 = vpop.f32.mrb[0].mxu0
        %v3461 = vadd.f32 0.0, %v3460
        %3462 = vdwg.mxu0
        %3463 = vmatprep.subr.mxu0 %v3331
        %3464 = vmatpush1.msra.mxu0 %v3330
        %3465 = vmatprep.subr.mxu0 %v3335
        %3466 = vmatpush1.msra.mxu0 %v3334
        %3467 = vmatprep.subr.mxu0 %v3339
        %3468 = vmatpush1.msra.mxu0 %v3338
        %3469 = vmatprep.subr.mxu0 %v3343
        %3470 = vmatpush1.msra.mxu0 %v3342
        %3471 = vmatprep.subr.mxu0 %v3347
        %3472 = vmatpush1.msra.mxu0 %v3346
        %3473 = vmatprep.subr.mxu0 %v3351
        %3474 = vmatpush1.msra.mxu0 %v3350
        %3475 = vmatprep.subr.mxu0 %v3355
        %3476 = vmatpush1.msra.mxu0 %v3354
        %3477 = vmatprep.subr.mxu0 %v3359
        %3478 = vmatpush1.msra.mxu0 %v3358
        %3479 = vmatprep.subr.mxu0 %v3363
        %3480 = vmatpush1.msra.mxu0 %v3362
        %3481 = vmatprep.subr.mxu0 %v3367
        %3482 = vmatpush1.msra.mxu0 %v3366
        %3483 = vmatprep.subr.mxu0 %v3371
        %3484 = vmatpush1.msra.mxu0 %v3370
        %3485 = vmatprep.subr.mxu0 %v3375
        %3486 = vmatpush1.msra.mxu0 %v3374
        %3487 = vmatprep.subr.mxu0 %v3379
        %3488 = vmatpush1.msra.mxu0 %v3378
        %3489 = vmatprep.subr.mxu0 %v3383
        %3490 = vmatpush1.msra.mxu0 %v3382
        %3491 = vmatprep.subr.mxu0 %v3387
        %3492 = vmatpush1.msra.mxu0 %v3386
        %3493 = vmatprep.subr.mxu0 %v3391
        %3494 = vmatpush1.msra.mxu0 %v3390
        %3495 = vmatprep.subr.mxu0 0.0
        %3496 = vmatpush1.msra.mxu0 0.0
        %3497 = vmatprep.subr.mxu0 0.0
        %3498 = vmatpush1.msra.mxu0 0.0
        %3499 = vmatprep.subr.mxu0 0.0
        %3500 = vmatpush1.msra.mxu0 0.0
        %3501 = vmatprep.subr.mxu0 0.0
        %3502 = vmatpush1.msra.mxu0 0.0
        %3503 = vmatprep.subr.mxu0 0.0
        %3504 = vmatpush1.msra.mxu0 0.0
        %3505 = vmatprep.subr.mxu0 0.0
        %3506 = vmatpush1.msra.mxu0 0.0
        %3507 = vmatprep.subr.mxu0 0.0
        %3508 = vmatpush1.msra.mxu0 0.0
        %3509 = vmatprep.subr.mxu0 0.0
        %3510 = vmatpush1.msra.mxu0 0.0
        %3511 = vmatprep.subr.mxu0 0.0
        %3512 = vmatpush1.msra.mxu0 0.0
        %3513 = vmatprep.subr.mxu0 0.0
        %3514 = vmatpush1.msra.mxu0 0.0
        %3515 = vmatprep.subr.mxu0 0.0
        %3516 = vmatpush1.msra.mxu0 0.0
        %3517 = vmatprep.subr.mxu0 0.0
        %3518 = vmatpush1.msra.mxu0 0.0
        %3519 = vmatprep.subr.mxu0 0.0
        %3520 = vmatpush1.msra.mxu0 0.0
        %3521 = vmatprep.subr.mxu0 0.0
        %3522 = vmatpush1.msra.mxu0 0.0
        %3523 = vmatprep.subr.mxu0 0.0
        %3524 = vmatpush1.msra.mxu0 0.0
        %3525 = vmatprep.subr.mxu0 0.0
        %3526 = vmatpush1.msra.mxu0 0.0
        %3527 = vmatprep.mubr.f32.mxu0 0.0
        %3528 = vmatmul.mubr.f32.gmra.mrb[0].mxu0 %v3327
        %v3529 = vpop.f32.mrb[0].mxu0
        %v3530 = vadd.f32 0.0, %v3529
        %v3531 = vpop.f32.mrb[0].mxu0
        %v3532 = vadd.f32 0.0, %v3531
        %3533 = vdwg.mxu0
        %v3534 = vmax.f32 %v3459, %v3461
        %v3535 = vmax.f32 %v3530, %v3532
        %v3536 = vmax.f32 %v3534, %v3535
        %v3537 = vld [vmem:[%s8] sm:$0xff]
        %v3538 = vld [vmem:[%s8 + $0x8] sm:$0xff]
        %v3539 = vld [vmem:[%s8 + $0x10] sm:$0xff]
        %v3540 = vld [vmem:[%s8 + $0x18] sm:$0xff]
        %v3541 = vld [vmem:[%s8 + $0x20] sm:$0xff]
        %v3542 = vld [vmem:[%s8 + $0x28] sm:$0xff]
        %v3543 = vld [vmem:[%s8 + $0x30] sm:$0xff]
        %v3544 = vld [vmem:[%s8 + $0x38] sm:$0xff]
        %v3545 = vld [vmem:[%s8 + $0x40] sm:$0xff]
        %v3546 = vld [vmem:[%s8 + $0x48] sm:$0xff]
        %v3547 = vld [vmem:[%s8 + $0x50] sm:$0xff]
        %v3548 = vld [vmem:[%s8 + $0x58] sm:$0xff]
        %v3549 = vld [vmem:[%s8 + $0x60] sm:$0xff]
        %v3550 = vld [vmem:[%s8 + $0x68] sm:$0xff]
        %v3551 = vld [vmem:[%s8 + $0x70] sm:$0xff]
        %v3552 = vld [vmem:[%s8 + $0x78] sm:$0xff]
        %v3553 = vld [vmem:[#allocation14] sm:$0x1]
        %v3555 = vlaneseq
        %v3556 = vshrl.u32 %v3555, 7
        %v3557 = vsub.s32 0, %v3556
        %v3558 = vrot.slane %v3553, %v3557
        %3560 = vmatprep.subr.mxu0 0.0
        %3561 = vmatpush1.msra.mxu0 %v3537
        %3562 = vmatprep.subr.mxu0 0.0
        %3563 = vmatpush1.msra.mxu0 %v3538
        %3564 = vmatprep.subr.mxu0 0.0
        %3565 = vmatpush1.msra.mxu0 %v3539
        %3566 = vmatprep.subr.mxu0 0.0
        %3567 = vmatpush1.msra.mxu0 %v3540
        %3568 = vmatprep.subr.mxu0 0.0
        %3569 = vmatpush1.msra.mxu0 %v3541
        %3570 = vmatprep.subr.mxu0 0.0
        %3571 = vmatpush1.msra.mxu0 %v3542
        %3572 = vmatprep.subr.mxu0 0.0
        %3573 = vmatpush1.msra.mxu0 %v3543
        %3574 = vmatprep.subr.mxu0 0.0
        %3575 = vmatpush1.msra.mxu0 %v3544
        %3576 = vmatprep.subr.mxu0 0.0
        %3577 = vmatpush1.msra.mxu0 %v3545
        %3578 = vmatprep.subr.mxu0 0.0
        %3579 = vmatpush1.msra.mxu0 %v3546
        %3580 = vmatprep.subr.mxu0 0.0
        %3581 = vmatpush1.msra.mxu0 %v3547
        %3582 = vmatprep.subr.mxu0 0.0
        %3583 = vmatpush1.msra.mxu0 %v3548
        %3584 = vmatprep.subr.mxu0 0.0
        %3585 = vmatpush1.msra.mxu0 %v3549
        %3586 = vmatprep.subr.mxu0 0.0
        %3587 = vmatpush1.msra.mxu0 %v3550
        %3588 = vmatprep.subr.mxu0 0.0
        %3589 = vmatpush1.msra.mxu0 %v3551
        %3590 = vmatprep.subr.mxu0 0.0
        %3591 = vmatpush1.msra.mxu0 %v3552
        %3592 = vmatprep.subr.mxu0 0.0
        %3593 = vmatpush1.msra.mxu0 0.0
        %3594 = vmatprep.subr.mxu0 0.0
        %3595 = vmatpush1.msra.mxu0 0.0
        %3596 = vmatprep.subr.mxu0 0.0
        %3597 = vmatpush1.msra.mxu0 0.0
        %3598 = vmatprep.subr.mxu0 0.0
        %3599 = vmatpush1.msra.mxu0 0.0
        %3600 = vmatprep.subr.mxu0 0.0
        %3601 = vmatpush1.msra.mxu0 0.0
        %3602 = vmatprep.subr.mxu0 0.0
        %3603 = vmatpush1.msra.mxu0 0.0
        %3604 = vmatprep.subr.mxu0 0.0
        %3605 = vmatpush1.msra.mxu0 0.0
        %3606 = vmatprep.subr.mxu0 0.0
        %3607 = vmatpush1.msra.mxu0 0.0
        %3608 = vmatprep.subr.mxu0 0.0
        %3609 = vmatpush1.msra.mxu0 0.0
        %3610 = vmatprep.subr.mxu0 0.0
        %3611 = vmatpush1.msra.mxu0 0.0
        %3612 = vmatprep.subr.mxu0 0.0
        %3613 = vmatpush1.msra.mxu0 0.0
        %3614 = vmatprep.subr.mxu0 0.0
        %3615 = vmatpush1.msra.mxu0 0.0
        %3616 = vmatprep.subr.mxu0 0.0
        %3617 = vmatpush1.msra.mxu0 0.0
        %3618 = vmatprep.subr.mxu0 0.0
        %3619 = vmatpush1.msra.mxu0 0.0
        %3620 = vmatprep.subr.mxu0 0.0
        %3621 = vmatpush1.msra.mxu0 0.0
        %3622 = vmatprep.subr.mxu0 0.0
        %3623 = vmatpush1.msra.mxu0 0.0
        %3624 = vmatprep.mubr.f32.mxu0 0.0
        %3625 = vmatmul.mubr.f32.gmra.mrb[0].mxu0 %v3536
        %v3626 = vpop.f32.mrb[0].mxu0
        %v3627 = vadd.f32 %v3558, %v3626
        %v3628 = vpop.f32.mrb[0].mxu0
        %3629 = vdwg.mxu0
        %vm3630 = vcmask 125952
        %3631 = vst.msk [vmem:[%s502] sm:$0xf] %vm3630, %v3627
        %s3632 = sand.u32 %s259, 1
        %s3633 = scalar_lea.sflag [#allocation4], %s3632
        %s3634 = sand.u32 %s259, 1
        %s3635 = smul.addr %s3634, 4
        %s3636 = scalar_lea.vmem [#allocation16], %s3635
        %s3637 = sand.u32 %s285, 1
        %s3638 = scalar_lea.sflag [#allocation18], %s3637
        %s3639 = sand.u32 %s285, 1
        %s3640 = smul.addr %s3639, 4
        %s3641 = scalar_lea.vmem [#allocation17], %s3640
        // Predicated region
        $region93: #{tpu_custom_call.1} parent=59 // pred_check
          %p3642 = pneg %p269
        $region94: #{tpu_custom_call.1} parent=59 // pred_check_branch
          %3644 = sbr.rel (%p3642) target = $region96
        $region95: #{tpu_custom_call.1} parent=59 // pred_region
          %s3646 = ssub.s32 64, 64
          %3647 = vsyncadd %s3633, %s3646
          %s3648 = smul.addr %s36, 64
          %s3649 = scalar_lea.hbm %s10, %s3648
          %s3651 = sshll.u32 %s3636, 4
          %s3652 = int_to_ptr.vmem [resolvable:$true] %s3651
          %3654 = dma.vmem_to_hbm [thread:$0]  %s3652, 64, %s3649, %s3633
        $region96: #{tpu_custom_call.1} parent=59 // pred_fallthru
          _
        // Predicated region
        $region97: #{tpu_custom_call.1} parent=59 // pred_check
          %p3655 = pneg %p295
        $region98: #{tpu_custom_call.1} parent=59 // pred_check_branch
          %3657 = sbr.rel (%p3655) target = $region100
        $region99: #{tpu_custom_call.1} parent=59 // pred_region
          %s3659 = ssub.s32 64, 64
          %3660 = vsyncadd %s3638, %s3659
          %s3661 = smul.addr %s36, 64
          %s3662 = scalar_lea.hbm %s11, %s3661
          %s3664 = sshll.u32 %s3641, 4
          %s3665 = int_to_ptr.vmem [resolvable:$true] %s3664
          %3667 = dma.vmem_to_hbm [thread:$0]  %s3665, 64, %s3662, %s3638
        $region100: #{tpu_custom_call.1} parent=59 // pred_fallthru
          _
      $region60: #{tpu_custom_call.1} parent=5 // pred_fallthru
        _
      %p3668 = scmp.le.s32.totalorder 2, %s31
      // Predicated region
      $region101: #{tpu_custom_call.1} parent=5 // pred_check
        %p3669 = pneg %p3668
      $region102: #{tpu_custom_call.1} parent=5 // pred_check_branch
        %3671 = sbr.rel (%p3669) target = $region104
      $region103: #{tpu_custom_call.1} parent=5 // pred_region
        %s3672 = ssub.s32 %s31, 2
        // Predicated region
        $region105: #{tpu_custom_call.1} parent=103 // pred_check
          %p3673 = pneg %p275
        $region106: #{tpu_custom_call.1} parent=103 // pred_check_branch
          %3675 = sbr.rel (%p3673) target = $region108
        $region107: #{tpu_custom_call.1} parent=103 // pred_region
          %s3676 = sand.u32 %s260, 1
          %s3677 = scalar_lea.sflag [#allocation4], %s3676
          %s3678 = sand.u32 %s260, 1
          %s3679 = smul.addr %s3678, 4
          %s3680 = scalar_lea.vmem [#allocation16], %s3679
          %3681 = dma.done %s3677, 64
        $region108: #{tpu_custom_call.1} parent=103 // pred_fallthru
          _
        // Predicated region
        $region109: #{tpu_custom_call.1} parent=103 // pred_check
          %p3682 = pneg %p301
        $region110: #{tpu_custom_call.1} parent=103 // pred_check_branch
          %3684 = sbr.rel (%p3682) target = $region112
        $region111: #{tpu_custom_call.1} parent=103 // pred_region
          %s3685 = sand.u32 %s286, 1
          %s3686 = scalar_lea.sflag [#allocation18], %s3685
          %s3687 = sand.u32 %s286, 1
          %s3688 = smul.addr %s3687, 4
          %s3689 = scalar_lea.vmem [#allocation17], %s3688
          %3690 = dma.done %s3686, 64
        $region112: #{tpu_custom_call.1} parent=103 // pred_fallthru
          _
      $region104: #{tpu_custom_call.1} parent=5 // pred_fallthru
        _
    $region6: #{tpu_custom_call.1} parent=1 // loop_footer
      %s35 = sadd.s32 1, %s31
    $region7: #{tpu_custom_call.1} parent=1 // loop_footer_branch
      %30 = sbr.rel target = $region3
    $region8: #{tpu_custom_call.1} parent=1 // loop_exit
      _
    %3691 = vsyncpa [#allocation3], 1
    %s3692 = scalar_lea.sflag [#allocation3], 1
    %3693 = vsyncpa %s3692, 1
    %3694 = vsyncpa [#allocation6], 1
    %3695 = vsyncpa [#allocation9], 1
    %3696 = vsyncpa [#allocation12], 1
    %3697 = vsyncpa [#allocation15], 1
    %3698 = vsyncpa [#allocation4], 1
    %s3699 = scalar_lea.sflag [#allocation4], 1
    %3700 = vsyncpa %s3699, 1
    %3701 = vsyncpa [#allocation18], 1
    %s3702 = scalar_lea.sflag [#allocation18], 1
    %3703 = vsyncpa %s3702, 1

</llo_original>
